<compile_context>
chip_gen: v7x
topology: tpu7x:2x2x1
jax: 0.10.0
libtpu: 0.0.40
codegen_flags: <defaults>
</compile_context>

<pallas_src>
import jax
import jax.numpy as jnp
from jax.experimental import pallas as pl
from jax.experimental.pallas import tpu as pltpu


DIM_STATES = 5
N_ACTIONS = 20
HIDDEN = [100, 100, 100, 100]

IN_PAD = 8          # layer-1 K padded to one sublane (true K = 5, zero-padded)
FEAT = 128          # hidden-layer lane width (true 100, zero-padded)
OUT_PAD = 32        # output lane width (true 20; 32 == full last dim -> legal BlockSpec)
NEG_INF = -1e30     # fills padded output-logit lanes so softmax ignores them (f32 only)

_PREC = jax.lax.Precision.HIGHEST   # full-f32 MXU matmul; MXU slack is huge here


def policy_kernel(x_ref,
                  w1_ref, b1_ref,
                  w2_ref, b2_ref,
                  w3_ref, b3_ref,
                  w4_ref, b4_ref,
                  w5_ref, b5_ref,
                  o_ref):
    # Tiles: x (block_b, 8) f32, hidden W (128,128) f32, W1 (8,128), W5 (128,32),
    # biases (1, lanes) f32, out (block_b, 32) f32.  Everything stays f32.
    def dense(h, w_ref, b_ref):
        return (jnp.dot(h, w_ref[...],
                        preferred_element_type=jnp.float32,
                        precision=_PREC)
                + b_ref[...])

    h = jnp.tanh(dense(x_ref[...], w1_ref, b1_ref))
    h = jnp.tanh(dense(h, w2_ref, b2_ref))
    h = jnp.tanh(dense(h, w3_ref, b3_ref))
    h = jnp.tanh(dense(h, w4_ref, b4_ref))

    # Output layer + numerically-stable softmax over 32 lanes.  Padded lanes carry a
    # -1e30 bias (f32), so exp() underflows them to exactly 0.
    z = dense(h, w5_ref, b5_ref)
    z = z - jnp.max(z, axis=-1, keepdims=True)
    e = jnp.exp(z)
    o_ref[...] = e / jnp.sum(e, axis=-1, keepdims=True)   # exact divide: rows sum to 1


def init_params(key):
    """Matches PolicyModel.__init__: weights ~ Normal(0, 1); biases keep PyTorch's
    default Uniform(-1/sqrt(fan_in), 1/sqrt(fan_in)). Weights stored (in, out)."""
    dims = [DIM_STATES] + HIDDEN + [N_ACTIONS]
    params = []
    for i in range(len(dims) - 1):
        fan_in, fan_out = dims[i], dims[i + 1]
        key, kw, kb = jax.random.split(key, 3)
        w = jax.random.normal(kw, (fan_in, fan_out), dtype=jnp.float32)
        bound = 1.0 / jnp.sqrt(jnp.float32(fan_in))
        b = jax.random.uniform(kb, (1, fan_out), dtype=jnp.float32,
                               minval=-bound, maxval=bound)
        params.append((w, b))
    return params


def pack_params(params):
    """Pad each layer to its lane-padded shape, keeping everything in f32.

    Layer widths: 8 -> 128 -> 128 -> 128 -> 128 -> 32.  Hidden biases pad with 0
    (tanh(0)=0 and padded weight rows are 0, so padded activation lanes stay exactly 0
    through the network); the output-layer bias pads with -1e30 so padded logits get
    zero probability under softmax.
    """
    in_dims = [IN_PAD, FEAT, FEAT, FEAT, FEAT]
    out_dims = [FEAT, FEAT, FEAT, FEAT, OUT_PAD]
    n_layers = len(params)
    packed = []
    for li, (w, b) in enumerate(params):
        fan_in, fan_out = w.shape
        pi, po = in_dims[li], out_dims[li]
        w_pad = jnp.zeros((pi, po), jnp.float32).at[:fan_in, :fan_out].set(w)
        fill = NEG_INF if li == n_layers - 1 else 0.0
        b_pad = jnp.full((1, po), fill, jnp.float32).at[:, :fan_out].set(b)
        packed.append((w_pad, b_pad))
    return packed


def _round_up(n, m):
    return ((n + m - 1) // m) * m


def policy_forward(x, packed_params, *, block_b=1024):
    """x: (B, DIM_STATES) f32; packed_params from pack_params(). Returns (B, N_ACTIONS) f32.

    block_b: batch tile.  Larger tiles amortize the ~0.35 us per-grid-step overhead and
    give longer contiguous x/out DMAs (sweep 512-2048).  Batch rows do NOT widen MXU
    occupancy, so don't tune block_b for the MXU.  VMEM use is tiny (<1 MiB) at any of
    these sizes, so no vmem_limit override is needed on v5e/v6e/v7x.
    """
    B = x.shape[0]
    assert x.shape[1] == DIM_STATES

    if B >= 2 * 128:
        # Keep >= 2 balanced grid blocks so v7x's 2 TensorCores both get work
        # (the batch axis is sharded across cores via dimension_semantics=("parallel",)).
        block_b = min(block_b, _round_up(pl.cdiv(B, 2), 128))
    else:
        block_b = _round_up(max(B, 1), 8)

    n_blocks = pl.cdiv(B, block_b)
    b_pad = n_blocks * block_b

    # Tiny pad: batch rows to a tile multiple, features 5 -> 8 (one sublane).  Padded
    # rows are sliced away below; padded feature lanes hit zero rows of W1.
    x_pad = jnp.pad(x.astype(jnp.float32),
                    ((0, b_pad - B), (0, IN_PAD - DIM_STATES)))

    flat_inputs = [x_pad]
    for (w, b) in packed_params:
        flat_inputs.append(w)
        flat_inputs.append(b)

    def resident(a):
        # Same block for every grid step -> DMA'd once, stays in VMEM.
        return pl.BlockSpec(a.shape, lambda i: (0, 0))

    in_specs = [pl.BlockSpec((block_b, IN_PAD), lambda i: (i, 0))]
    for (w, b) in packed_params:
        in_specs.append(resident(w))
        in_specs.append(resident(b))

    param_bytes = sum(int(w.size + b.size) * 4 for (w, b) in packed_params)
    flops = 2 * b_pad * (IN_PAD * FEAT + 3 * FEAT * FEAT + FEAT * OUT_PAD)
    transcendentals = b_pad * (4 * FEAT + OUT_PAD)
    bytes_accessed = int(x_pad.size) * 4 + b_pad * OUT_PAD * 4 + param_bytes

    out = pl.pallas_call(
        policy_kernel,
        out_shape=jax.ShapeDtypeStruct((b_pad, OUT_PAD), jnp.float32),
        grid=(n_blocks,),
        in_specs=in_specs,
        out_specs=pl.BlockSpec((block_b, OUT_PAD), lambda i: (i, 0)),
        compiler_params=pltpu.CompilerParams(
            dimension_semantics=("parallel",)),   # megacore sharding on v7x
        cost_estimate=pl.CostEstimate(flops=flops,
                                      transcendentals=transcendentals,
                                      bytes_accessed=bytes_accessed),
    )(*flat_inputs)

    return out[:B, :N_ACTIONS]


if __name__ == "__main__":
    key = jax.random.PRNGKey(0)
    key, kx = jax.random.split(key)

    batch = 8
    x = jax.random.normal(kx, (batch, DIM_STATES), dtype=jnp.float32)
    params = init_params(key)
    packed = pack_params(params)

    out = policy_forward(x, packed)
    out = jax.block_until_ready(out)
    assert out.shape == (batch, N_ACTIONS)

    # Rows are exact probability distributions (exact divide in the kernel).
    row_sums = jnp.sum(out, axis=-1)
    assert bool(jnp.allclose(row_sums, 1.0, atol=1e-4)), row_sums

    # Pure-f32 reference (PyTorch-equivalent forward) at full matmul precision.
    h = x
    for (w, b) in params[:-1]:
        h = jnp.tanh(jnp.dot(h, w, precision=_PREC) + b)
    z = jnp.dot(h, params[-1][0], precision=_PREC) + params[-1][1]
    ref_f32 = jax.nn.softmax(z, axis=-1)
    max_err = float(jnp.max(jnp.abs(out - ref_f32)))
    assert bool(jnp.allclose(out, ref_f32, atol=5e-3)), max_err

    print("KERNEL_OK")
</pallas_src>

<mosaic_0001>
module attributes {stable_mosaic.version = 11 : i64} {
  func.func @policy_kernel(%arg0: i32, %arg1: memref<8x8xf32, #tpu.memory_space<vmem>>, %arg2: memref<8x128xf32, #tpu.memory_space<vmem>>, %arg3: memref<1x128xf32, #tpu.memory_space<vmem>>, %arg4: memref<128x128xf32, #tpu.memory_space<vmem>>, %arg5: memref<1x128xf32, #tpu.memory_space<vmem>>, %arg6: memref<128x128xf32, #tpu.memory_space<vmem>>, %arg7: memref<1x128xf32, #tpu.memory_space<vmem>>, %arg8: memref<128x128xf32, #tpu.memory_space<vmem>>, %arg9: memref<1x128xf32, #tpu.memory_space<vmem>>, %arg10: memref<128x32xf32, #tpu.memory_space<vmem>>, %arg11: memref<1x32xf32, #tpu.memory_space<vmem>>, %arg12: memref<8x32xf32, #tpu.memory_space<vmem>>) attributes {dimension_semantics = [#tpu.dimension_semantics<parallel>], iteration_bounds = array<i64: 1>, scalar_prefetch = 0 : i64, scratch_operands = 0 : i64, tpu.core_type = #tpu.core_type<tc>, window_params = [{transform_indices = @transform_0, window_bounds = array<i64: 8, 8>}, {pipeline_mode = #tpu.pipeline_mode<synchronous>, transform_indices = @transform_1, window_bounds = array<i64: 8, 128>}, {pipeline_mode = #tpu.pipeline_mode<synchronous>, transform_indices = @transform_2, window_bounds = array<i64: 1, 128>}, {pipeline_mode = #tpu.pipeline_mode<synchronous>, transform_indices = @transform_3, window_bounds = array<i64: 128, 128>}, {pipeline_mode = #tpu.pipeline_mode<synchronous>, transform_indices = @transform_4, window_bounds = array<i64: 1, 128>}, {pipeline_mode = #tpu.pipeline_mode<synchronous>, transform_indices = @transform_5, window_bounds = array<i64: 128, 128>}, {pipeline_mode = #tpu.pipeline_mode<synchronous>, transform_indices = @transform_6, window_bounds = array<i64: 1, 128>}, {pipeline_mode = #tpu.pipeline_mode<synchronous>, transform_indices = @transform_7, window_bounds = array<i64: 128, 128>}, {pipeline_mode = #tpu.pipeline_mode<synchronous>, transform_indices = @transform_8, window_bounds = array<i64: 1, 128>}, {pipeline_mode = #tpu.pipeline_mode<synchronous>, transform_indices = @transform_9, window_bounds = array<i64: 128, 32>}, {pipeline_mode = #tpu.pipeline_mode<synchronous>, transform_indices = @transform_10, window_bounds = array<i64: 1, 32>}, {transform_indices = @transform_11, window_bounds = array<i64: 8, 32>}]} {
    %c0 = arith.constant 0 : index
    %c0_0 = arith.constant 0 : index
    %0 = vector.load %arg1[%c0, %c0_0] : memref<8x8xf32, #tpu.memory_space<vmem>>, vector<8x8xf32>
    %c0_1 = arith.constant 0 : index
    %c0_2 = arith.constant 0 : index
    %1 = vector.load %arg2[%c0_1, %c0_2] : memref<8x128xf32, #tpu.memory_space<vmem>>, vector<8x128xf32>
    %cst = arith.constant dense<0.000000e+00> : vector<8x128xf32>
    %2 = tpu.matmul %0, %1, %cst {dimension_numbers = #tpu.dot_dimension_numbers<[1], [0], [0], [1], [0, 0, 1, 1], [], []>, precision = #tpu.contract_precision<fp32>} : vector<8x8xf32>, vector<8x128xf32>, vector<8x128xf32> -> vector<8x128xf32>
    %c0_3 = arith.constant 0 : index
    %c0_4 = arith.constant 0 : index
    %3 = vector.load %arg3[%c0_3, %c0_4] : memref<1x128xf32, #tpu.memory_space<vmem>>, vector<1x128xf32>
    %4 = vector.broadcast %3 : vector<1x128xf32> to vector<8x128xf32>
    %5 = arith.addf %2, %4 : vector<8x128xf32>
    %6 = math.tanh %5 : vector<8x128xf32>
    %c0_5 = arith.constant 0 : index
    %c0_6 = arith.constant 0 : index
    %7 = vector.load %arg4[%c0_5, %c0_6] : memref<128x128xf32, #tpu.memory_space<vmem>>, vector<128x128xf32>
    %cst_7 = arith.constant dense<0.000000e+00> : vector<8x128xf32>
    %8 = tpu.matmul %6, %7, %cst_7 {dimension_numbers = #tpu.dot_dimension_numbers<[1], [0], [0], [1], [0, 0, 1, 1], [], []>, precision = #tpu.contract_precision<fp32>} : vector<8x128xf32>, vector<128x128xf32>, vector<8x128xf32> -> vector<8x128xf32>
    %c0_8 = arith.constant 0 : index
    %c0_9 = arith.constant 0 : index
    %9 = vector.load %arg5[%c0_8, %c0_9] : memref<1x128xf32, #tpu.memory_space<vmem>>, vector<1x128xf32>
    %10 = vector.broadcast %9 : vector<1x128xf32> to vector<8x128xf32>
    %11 = arith.addf %8, %10 : vector<8x128xf32>
    %12 = math.tanh %11 : vector<8x128xf32>
    %c0_10 = arith.constant 0 : index
    %c0_11 = arith.constant 0 : index
    %13 = vector.load %arg6[%c0_10, %c0_11] : memref<128x128xf32, #tpu.memory_space<vmem>>, vector<128x128xf32>
    %cst_12 = arith.constant dense<0.000000e+00> : vector<8x128xf32>
    %14 = tpu.matmul %12, %13, %cst_12 {dimension_numbers = #tpu.dot_dimension_numbers<[1], [0], [0], [1], [0, 0, 1, 1], [], []>, precision = #tpu.contract_precision<fp32>} : vector<8x128xf32>, vector<128x128xf32>, vector<8x128xf32> -> vector<8x128xf32>
    %c0_13 = arith.constant 0 : index
    %c0_14 = arith.constant 0 : index
    %15 = vector.load %arg7[%c0_13, %c0_14] : memref<1x128xf32, #tpu.memory_space<vmem>>, vector<1x128xf32>
    %16 = vector.broadcast %15 : vector<1x128xf32> to vector<8x128xf32>
    %17 = arith.addf %14, %16 : vector<8x128xf32>
    %18 = math.tanh %17 : vector<8x128xf32>
    %c0_15 = arith.constant 0 : index
    %c0_16 = arith.constant 0 : index
    %19 = vector.load %arg8[%c0_15, %c0_16] : memref<128x128xf32, #tpu.memory_space<vmem>>, vector<128x128xf32>
    %cst_17 = arith.constant dense<0.000000e+00> : vector<8x128xf32>
    %20 = tpu.matmul %18, %19, %cst_17 {dimension_numbers = #tpu.dot_dimension_numbers<[1], [0], [0], [1], [0, 0, 1, 1], [], []>, precision = #tpu.contract_precision<fp32>} : vector<8x128xf32>, vector<128x128xf32>, vector<8x128xf32> -> vector<8x128xf32>
    %c0_18 = arith.constant 0 : index
    %c0_19 = arith.constant 0 : index
    %21 = vector.load %arg9[%c0_18, %c0_19] : memref<1x128xf32, #tpu.memory_space<vmem>>, vector<1x128xf32>
    %22 = vector.broadcast %21 : vector<1x128xf32> to vector<8x128xf32>
    %23 = arith.addf %20, %22 : vector<8x128xf32>
    %24 = math.tanh %23 : vector<8x128xf32>
    %c0_20 = arith.constant 0 : index
    %c0_21 = arith.constant 0 : index
    %25 = vector.load %arg10[%c0_20, %c0_21] : memref<128x32xf32, #tpu.memory_space<vmem>>, vector<128x32xf32>
    %cst_22 = arith.constant dense<0.000000e+00> : vector<8x32xf32>
    %26 = tpu.matmul %24, %25, %cst_22 {dimension_numbers = #tpu.dot_dimension_numbers<[1], [0], [0], [1], [0, 0, 1, 1], [], []>, precision = #tpu.contract_precision<fp32>} : vector<8x128xf32>, vector<128x32xf32>, vector<8x32xf32> -> vector<8x32xf32>
    %c0_23 = arith.constant 0 : index
    %c0_24 = arith.constant 0 : index
    %27 = vector.load %arg11[%c0_23, %c0_24] : memref<1x32xf32, #tpu.memory_space<vmem>>, vector<1x32xf32>
    %28 = vector.broadcast %27 : vector<1x32xf32> to vector<8x32xf32>
    %29 = arith.addf %26, %28 : vector<8x32xf32>
    %cst_25 = arith.constant dense<0xFF800000> : vector<8xf32>
    %30 = vector.multi_reduction <maximumf>, %29, %cst_25 [1] : vector<8x32xf32> to vector<8xf32>
    %31 = vector.shape_cast %30 : vector<8xf32> to vector<8x1xf32>
    %32 = vector.broadcast %31 : vector<8x1xf32> to vector<8x32xf32>
    %33 = arith.subf %29, %32 : vector<8x32xf32>
    %34 = math.exp %33 : vector<8x32xf32>
    %cst_26 = arith.constant dense<0.000000e+00> : vector<8xf32>
    %35 = vector.multi_reduction <add>, %34, %cst_26 [1] : vector<8x32xf32> to vector<8xf32>
    %36 = vector.shape_cast %35 : vector<8xf32> to vector<8x1xf32>
    %37 = vector.broadcast %36 : vector<8x1xf32> to vector<8x32xf32>
    %38 = arith.divf %34, %37 : vector<8x32xf32>
    %c0_27 = arith.constant 0 : index
    %c0_28 = arith.constant 0 : index
    %39 = vector.load %arg12[%c0_27, %c0_28] : memref<8x32xf32, #tpu.memory_space<vmem>>, vector<8x32xf32>
    tpu.vector_store %arg12[%c0_27, %c0_28], %38 {strides = array<i32>} : memref<8x32xf32, #tpu.memory_space<vmem>>, vector<8x32xf32>,
    return
  }
  func.func @transform_0(%arg0: i32) -> (i32, i32) {
    %c0_i32 = arith.constant 0 : i32
    %c0_i32_0 = arith.constant 0 : i32
    return %arg0, %c0_i32 : i32, i32
  }
  func.func @transform_1(%arg0: i32) -> (i32, i32) {
    %c0_i32 = arith.constant 0 : i32
    %c0_i32_0 = arith.constant 0 : i32
    %c0_i32_1 = arith.constant 0 : i32
    return %c0_i32, %c0_i32_0 : i32, i32
  }
  func.func @transform_2(%arg0: i32) -> (i32, i32) {
    %c0_i32 = arith.constant 0 : i32
    %c0_i32_0 = arith.constant 0 : i32
    %c0_i32_1 = arith.constant 0 : i32
    return %c0_i32, %c0_i32_0 : i32, i32
  }
  func.func @transform_3(%arg0: i32) -> (i32, i32) {
    %c0_i32 = arith.constant 0 : i32
    %c0_i32_0 = arith.constant 0 : i32
    %c0_i32_1 = arith.constant 0 : i32
    return %c0_i32, %c0_i32_0 : i32, i32
  }
  func.func @transform_4(%arg0: i32) -> (i32, i32) {
    %c0_i32 = arith.constant 0 : i32
    %c0_i32_0 = arith.constant 0 : i32
    %c0_i32_1 = arith.constant 0 : i32
    return %c0_i32, %c0_i32_0 : i32, i32
  }
  func.func @transform_5(%arg0: i32) -> (i32, i32) {
    %c0_i32 = arith.constant 0 : i32
    %c0_i32_0 = arith.constant 0 : i32
    %c0_i32_1 = arith.constant 0 : i32
    return %c0_i32, %c0_i32_0 : i32, i32
  }
  func.func @transform_6(%arg0: i32) -> (i32, i32) {
    %c0_i32 = arith.constant 0 : i32
    %c0_i32_0 = arith.constant 0 : i32
    %c0_i32_1 = arith.constant 0 : i32
    return %c0_i32, %c0_i32_0 : i32, i32
  }
  func.func @transform_7(%arg0: i32) -> (i32, i32) {
    %c0_i32 = arith.constant 0 : i32
    %c0_i32_0 = arith.constant 0 : i32
    %c0_i32_1 = arith.constant 0 : i32
    return %c0_i32, %c0_i32_0 : i32, i32
  }
  func.func @transform_8(%arg0: i32) -> (i32, i32) {
    %c0_i32 = arith.constant 0 : i32
    %c0_i32_0 = arith.constant 0 : i32
    %c0_i32_1 = arith.constant 0 : i32
    return %c0_i32, %c0_i32_0 : i32, i32
  }
  func.func @transform_9(%arg0: i32) -> (i32, i32) {
    %c0_i32 = arith.constant 0 : i32
    %c0_i32_0 = arith.constant 0 : i32
    %c0_i32_1 = arith.constant 0 : i32
    return %c0_i32, %c0_i32_0 : i32, i32
  }
  func.func @transform_10(%arg0: i32) -> (i32, i32) {
    %c0_i32 = arith.constant 0 : i32
    %c0_i32_0 = arith.constant 0 : i32
    %c0_i32_1 = arith.constant 0 : i32
    return %c0_i32, %c0_i32_0 : i32, i32
  }
  func.func @transform_11(%arg0: i32) -> (i32, i32) {
    %c0_i32 = arith.constant 0 : i32
    %c0_i32_0 = arith.constant 0 : i32
    return %arg0, %c0_i32 : i32, i32
  }
}

</mosaic_0001>

<llo_original>
// kernel: tpu_custom_call.1
$region0: #{tpu_custom_call.1}
  #allocation0 [shape = 'u32[]', space=smem, size = 0x4, offset = 0x4, fixed_abs, tag = 'smem constant byte address 0x4 - core index']
  #allocation1 [shape = 'u32[144,128]{1,0:T(1,128)}', space=vmem, size = 0x12000, scoped, tag = 'internal scratch']
  %s0 = inlined_call_operand.vmem [shape: f32[8,8], index: 0, kind: input, shape index: {}]
  %s1 = inlined_call_operand.vmem [shape: f32[8,128], index: 1, kind: input, shape index: {}]
  %s2 = inlined_call_operand.vmem [shape: f32[1,128], index: 2, kind: input, shape index: {}]
  %s3 = inlined_call_operand.vmem [shape: f32[128,128], index: 3, kind: input, shape index: {}]
  %s4 = inlined_call_operand.vmem [shape: f32[1,128], index: 4, kind: input, shape index: {}]
  %s5 = inlined_call_operand.hbm [shape: f32[128,128], index: 5, kind: input, shape index: {}]
  %s6 = inlined_call_operand.vmem [shape: f32[1,128], index: 6, kind: input, shape index: {}]
  %s7 = inlined_call_operand.hbm [shape: f32[128,128], index: 7, kind: input, shape index: {}]
  %s8 = inlined_call_operand.vmem [shape: f32[1,128], index: 8, kind: input, shape index: {}]
  %s9 = inlined_call_operand.vmem [shape: f32[128,32], index: 9, kind: input, shape index: {}]
  %s10 = inlined_call_operand.vmem [shape: f32[1,32], index: 10, kind: input, shape index: {}]
  %s11 = inlined_call_operand.hbm [shape: f32[8,32], index: 11, kind: output, shape index: {}]
  %s12 = sld [smem:[#allocation0]]
  $region62: #{tpu_custom_call.1} parent=0
    _
  %s14 = ssub.s32 1, %s12
  %s15 = scalar_select 0, %s14, %s12
  $region1: #{tpu_custom_call.1} parent=0
    #allocation2 [shape = 'u8[65536]{0}', space=vmem, size = 0x10000, scoped, tag = 'input window, operand 5, single buffered']
    #allocation3 [shape = 's32[1]{0}', space=sflag, size = 0x4, scoped, tag = 'scoped memory for tpu_custom_call.1']
    #allocation4 [shape = 's32[1]{0}', space=sflag, size = 0x4, scoped, tag = 'scoped memory for tpu_custom_call.1']
    #allocation5 [shape = 'u8[65536]{0}', space=vmem, size = 0x10000, scoped, tag = 'input window, operand 7, single buffered']
    #allocation6 [shape = 's32[1]{0}', space=sflag, size = 0x4, scoped, tag = 'scoped memory for tpu_custom_call.1']
    #allocation7 [shape = 'u8[4096]{0}', space=vmem, size = 0x1000, scoped, tag = 'output window, operand 0, single buffered']
    %16 = vsyncpa [#allocation3], 0
    %17 = vsyncpa [#allocation6], 0
    %18 = vsyncpa [#allocation4], 0
    // Predicated region
    $region2: #{tpu_custom_call.1} parent=1 // pred_check
      _
    $region3: #{tpu_custom_call.1} parent=1 // pred_check_branch
      %20 = sbr.rel (0) target = $region5
    $region4: #{tpu_custom_call.1} parent=1 // pred_region
      _
    $region5: #{tpu_custom_call.1} parent=1 // pred_fallthru
      _
    // Predicated region
    $region6: #{tpu_custom_call.1} parent=1 // pred_check
      _
    $region7: #{tpu_custom_call.1} parent=1 // pred_check_branch
      %22 = sbr.rel (0) target = $region9
    $region8: #{tpu_custom_call.1} parent=1 // pred_region
      _
    $region9: #{tpu_custom_call.1} parent=1 // pred_fallthru
      _
    // Predicated region
    $region10: #{tpu_custom_call.1} parent=1 // pred_check
      _
    $region11: #{tpu_custom_call.1} parent=1 // pred_check_branch
      %24 = sbr.rel (0) target = $region13
    $region12: #{tpu_custom_call.1} parent=1 // pred_region
      _
    $region13: #{tpu_custom_call.1} parent=1 // pred_fallthru
      _
    // Predicated region
    $region14: #{tpu_custom_call.1} parent=1 // pred_check
      _
    $region15: #{tpu_custom_call.1} parent=1 // pred_check_branch
      %26 = sbr.rel (0) target = $region17
    $region16: #{tpu_custom_call.1} parent=1 // pred_region
      _
    $region17: #{tpu_custom_call.1} parent=1 // pred_fallthru
      _
    // Predicated region
    $region18: #{tpu_custom_call.1} parent=1 // pred_check
      _
    $region19: #{tpu_custom_call.1} parent=1 // pred_check_branch
      %28 = sbr.rel (0) target = $region21
    $region20: #{tpu_custom_call.1} parent=1 // pred_region
      _
    $region21: #{tpu_custom_call.1} parent=1 // pred_fallthru
      _
    // Predicated region
    $region22: #{tpu_custom_call.1} parent=1 // pred_check
      _
    $region23: #{tpu_custom_call.1} parent=1 // pred_check_branch
      %30 = sbr.rel (0) target = $region25
    $region24: #{tpu_custom_call.1} parent=1 // pred_region
      %s32 = ssub.s32 2048, 2048
      %33 = vsyncadd [#allocation3], %s32
      %s34 = sshll.u32 [#allocation2], 4
      %s35 = int_to_ptr.vmem [resolvable:$true] %s34
      %40 = dma.hbm_to_vmem [thread:$0]  %s5, 2048, %s35, [#allocation3], 128, 128, 8
    $region25: #{tpu_custom_call.1} parent=1 // pred_fallthru
      _
    // Predicated region
    $region26: #{tpu_custom_call.1} parent=1 // pred_check
      _
    $region27: #{tpu_custom_call.1} parent=1 // pred_check_branch
      %42 = sbr.rel (0) target = $region29
    $region28: #{tpu_custom_call.1} parent=1 // pred_region
      _
    $region29: #{tpu_custom_call.1} parent=1 // pred_fallthru
      _
    // Predicated region
    $region30: #{tpu_custom_call.1} parent=1 // pred_check
      _
    $region31: #{tpu_custom_call.1} parent=1 // pred_check_branch
      %44 = sbr.rel (0) target = $region33
    $region32: #{tpu_custom_call.1} parent=1 // pred_region
      %s46 = ssub.s32 2048, 2048
      %47 = vsyncadd [#allocation6], %s46
      %s48 = sshll.u32 [#allocation5], 4
      %s49 = int_to_ptr.vmem [resolvable:$true] %s48
      %54 = dma.hbm_to_vmem [thread:$0]  %s7, 2048, %s49, [#allocation6], 128, 128, 8
    $region33: #{tpu_custom_call.1} parent=1 // pred_fallthru
      _
    // Predicated region
    $region34: #{tpu_custom_call.1} parent=1 // pred_check
      _
    $region35: #{tpu_custom_call.1} parent=1 // pred_check_branch
      %56 = sbr.rel (0) target = $region37
    $region36: #{tpu_custom_call.1} parent=1 // pred_region
      _
    $region37: #{tpu_custom_call.1} parent=1 // pred_fallthru
      _
    // Predicated region
    $region38: #{tpu_custom_call.1} parent=1 // pred_check
      _
    $region39: #{tpu_custom_call.1} parent=1 // pred_check_branch
      %58 = sbr.rel (0) target = $region41
    $region40: #{tpu_custom_call.1} parent=1 // pred_region
      _
    $region41: #{tpu_custom_call.1} parent=1 // pred_fallthru
      _
    // Predicated region
    $region42: #{tpu_custom_call.1} parent=1 // pred_check
      _
    $region43: #{tpu_custom_call.1} parent=1 // pred_check_branch
      %60 = sbr.rel (0) target = $region45
    $region44: #{tpu_custom_call.1} parent=1 // pred_region
      _
    $region45: #{tpu_custom_call.1} parent=1 // pred_fallthru
      _
    // Predicated region
    $region46: #{tpu_custom_call.1} parent=1 // pred_check
      _
    $region47: #{tpu_custom_call.1} parent=1 // pred_check_branch
      %62 = sbr.rel (0) target = $region49
    $region48: #{tpu_custom_call.1} parent=1 // pred_region
      %63 = dma.done [#allocation3], 2048
    $region49: #{tpu_custom_call.1} parent=1 // pred_fallthru
      _
    // Predicated region
    $region50: #{tpu_custom_call.1} parent=1 // pred_check
      _
    $region51: #{tpu_custom_call.1} parent=1 // pred_check_branch
      %65 = sbr.rel (0) target = $region53
    $region52: #{tpu_custom_call.1} parent=1 // pred_region
      %66 = dma.done [#allocation6], 2048
    $region53: #{tpu_custom_call.1} parent=1 // pred_fallthru
      _
    %v67 = vld [vmem:[%s0] sm:$0xff]
    %v68 = vld [vmem:[%s1] sm:$0xff]
    %v69 = vld [vmem:[%s2] sm:$0x1]
    %v71 = vlaneseq
    %v72 = vshrl.u32 %v71, 7
    %v73 = vsub.s32 0, %v72
    %v74 = vrot.slane %v69, %v73
    %vm76 = vcmask 64512
    %v78 = vsel %vm76, %v67, 0
    %80 = vmatprep.subr.mxu0 0.0
    %v81 = vand.u32 %v68, 4294901760
    %82 = vmatpush1.msra.mxu0 %v81
    %83 = vmatprep.subr.mxu0 0.0
    %84 = vmatpush1.msra.mxu0 0.0
    %85 = vmatprep.subr.mxu0 0.0
    %86 = vmatpush1.msra.mxu0 0.0
    %87 = vmatprep.subr.mxu0 0.0
    %88 = vmatpush1.msra.mxu0 0.0
    %89 = vmatprep.subr.mxu0 0.0
    %90 = vmatpush1.msra.mxu0 0.0
    %91 = vmatprep.subr.mxu0 0.0
    %92 = vmatpush1.msra.mxu0 0.0
    %93 = vmatprep.subr.mxu0 0.0
    %94 = vmatpush1.msra.mxu0 0.0
    %95 = vmatprep.subr.mxu0 0.0
    %96 = vmatpush1.msra.mxu0 0.0
    %97 = vmatprep.subr.mxu0 0.0
    %98 = vmatpush1.msra.mxu0 0.0
    %99 = vmatprep.subr.mxu0 0.0
    %100 = vmatpush1.msra.mxu0 0.0
    %101 = vmatprep.subr.mxu0 0.0
    %102 = vmatpush1.msra.mxu0 0.0
    %103 = vmatprep.subr.mxu0 0.0
    %104 = vmatpush1.msra.mxu0 0.0
    %105 = vmatprep.subr.mxu0 0.0
    %106 = vmatpush1.msra.mxu0 0.0
    %107 = vmatprep.subr.mxu0 0.0
    %108 = vmatpush1.msra.mxu0 0.0
    %109 = vmatprep.subr.mxu0 0.0
    %110 = vmatpush1.msra.mxu0 0.0
    %111 = vmatprep.subr.mxu0 0.0
    %112 = vmatpush1.msra.mxu0 0.0
    %113 = vmatprep.subr.mxu0 0.0
    %114 = vmatpush1.msra.mxu0 0.0
    %115 = vmatprep.subr.mxu0 0.0
    %116 = vmatpush1.msra.mxu0 0.0
    %117 = vmatprep.subr.mxu0 0.0
    %118 = vmatpush1.msra.mxu0 0.0
    %119 = vmatprep.subr.mxu0 0.0
    %120 = vmatpush1.msra.mxu0 0.0
    %121 = vmatprep.subr.mxu0 0.0
    %122 = vmatpush1.msra.mxu0 0.0
    %123 = vmatprep.subr.mxu0 0.0
    %124 = vmatpush1.msra.mxu0 0.0
    %125 = vmatprep.subr.mxu0 0.0
    %126 = vmatpush1.msra.mxu0 0.0
    %127 = vmatprep.subr.mxu0 0.0
    %128 = vmatpush1.msra.mxu0 0.0
    %129 = vmatprep.subr.mxu0 0.0
    %130 = vmatpush1.msra.mxu0 0.0
    %131 = vmatprep.subr.mxu0 0.0
    %132 = vmatpush1.msra.mxu0 0.0
    %133 = vmatprep.subr.mxu0 0.0
    %134 = vmatpush1.msra.mxu0 0.0
    %135 = vmatprep.subr.mxu0 0.0
    %136 = vmatpush1.msra.mxu0 0.0
    %137 = vmatprep.subr.mxu0 0.0
    %138 = vmatpush1.msra.mxu0 0.0
    %139 = vmatprep.subr.mxu0 0.0
    %140 = vmatpush1.msra.mxu0 0.0
    %141 = vmatprep.subr.mxu0 0.0
    %142 = vmatpush1.msra.mxu0 0.0
    %143 = vmatprep.subr.mxu0 0.0
    %144 = vmatpush1.msra.mxu0 0.0
    %145 = vmatprep.mubr.f32.mxu0 0.0
    %v146 = vand.u32 %v78, 4294901760
    %v147 = vsub.f32 %v78, %v146
    %v148 = vand.u32 %v147, 4294901760
    %v149 = vsub.f32 %v147, %v148
    %v150 = vand.u32 %v149, 4294901760
    %151 = vmatmul.mubr.f32.gmra.mrb[0].mxu0 %v150
    %v152 = vpop.f32.mrb[0].mxu0
    %v153 = vadd.f32 %v74, %v152
    %v154 = vpop.f32.mrb[0].mxu0
    %155 = vdwg.mxu0
    %156 = vmatprep.subr.mxu0 0.0
    %v157 = vand.u32 %v68, 4294901760
    %v158 = vsub.f32 %v68, %v157
    %v159 = vand.u32 %v158, 4294901760
    %v160 = vsub.f32 %v158, %v159
    %v161 = vand.u32 %v160, 4294901760
    %162 = vmatpush1.msra.mxu0 %v161
    %163 = vmatprep.subr.mxu0 0.0
    %164 = vmatpush1.msra.mxu0 0.0
    %165 = vmatprep.subr.mxu0 0.0
    %166 = vmatpush1.msra.mxu0 0.0
    %167 = vmatprep.subr.mxu0 0.0
    %168 = vmatpush1.msra.mxu0 0.0
    %169 = vmatprep.subr.mxu0 0.0
    %170 = vmatpush1.msra.mxu0 0.0
    %171 = vmatprep.subr.mxu0 0.0
    %172 = vmatpush1.msra.mxu0 0.0
    %173 = vmatprep.subr.mxu0 0.0
    %174 = vmatpush1.msra.mxu0 0.0
    %175 = vmatprep.subr.mxu0 0.0
    %176 = vmatpush1.msra.mxu0 0.0
    %177 = vmatprep.subr.mxu0 0.0
    %178 = vmatpush1.msra.mxu0 0.0
    %179 = vmatprep.subr.mxu0 0.0
    %180 = vmatpush1.msra.mxu0 0.0
    %181 = vmatprep.subr.mxu0 0.0
    %182 = vmatpush1.msra.mxu0 0.0
    %183 = vmatprep.subr.mxu0 0.0
    %184 = vmatpush1.msra.mxu0 0.0
    %185 = vmatprep.subr.mxu0 0.0
    %186 = vmatpush1.msra.mxu0 0.0
    %187 = vmatprep.subr.mxu0 0.0
    %188 = vmatpush1.msra.mxu0 0.0
    %189 = vmatprep.subr.mxu0 0.0
    %190 = vmatpush1.msra.mxu0 0.0
    %191 = vmatprep.subr.mxu0 0.0
    %192 = vmatpush1.msra.mxu0 0.0
    %193 = vmatprep.subr.mxu0 0.0
    %194 = vmatpush1.msra.mxu0 0.0
    %195 = vmatprep.subr.mxu0 0.0
    %196 = vmatpush1.msra.mxu0 0.0
    %197 = vmatprep.subr.mxu0 0.0
    %198 = vmatpush1.msra.mxu0 0.0
    %199 = vmatprep.subr.mxu0 0.0
    %200 = vmatpush1.msra.mxu0 0.0
    %201 = vmatprep.subr.mxu0 0.0
    %202 = vmatpush1.msra.mxu0 0.0
    %203 = vmatprep.subr.mxu0 0.0
    %204 = vmatpush1.msra.mxu0 0.0
    %205 = vmatprep.subr.mxu0 0.0
    %206 = vmatpush1.msra.mxu0 0.0
    %207 = vmatprep.subr.mxu0 0.0
    %208 = vmatpush1.msra.mxu0 0.0
    %209 = vmatprep.subr.mxu0 0.0
    %210 = vmatpush1.msra.mxu0 0.0
    %211 = vmatprep.subr.mxu0 0.0
    %212 = vmatpush1.msra.mxu0 0.0
    %213 = vmatprep.subr.mxu0 0.0
    %214 = vmatpush1.msra.mxu0 0.0
    %215 = vmatprep.subr.mxu0 0.0
    %216 = vmatpush1.msra.mxu0 0.0
    %217 = vmatprep.subr.mxu0 0.0
    %218 = vmatpush1.msra.mxu0 0.0
    %219 = vmatprep.subr.mxu0 0.0
    %220 = vmatpush1.msra.mxu0 0.0
    %221 = vmatprep.subr.mxu0 0.0
    %222 = vmatpush1.msra.mxu0 0.0
    %223 = vmatprep.subr.mxu0 0.0
    %224 = vmatpush1.msra.mxu0 0.0
    %225 = vmatprep.mubr.f32.mxu0 0.0
    %v226 = vand.u32 %v78, 4294901760
    %227 = vmatmul.mubr.f32.gmra.mrb[0].mxu0 %v226
    %v228 = vpop.f32.mrb[0].mxu0
    %v229 = vadd.f32 %v153, %v228
    %v230 = vpop.f32.mrb[0].mxu0
    %231 = vdwg.mxu0
    %232 = vmatprep.subr.mxu0 0.0
    %v233 = vand.u32 %v68, 4294901760
    %v234 = vsub.f32 %v68, %v233
    %235 = vmatpush1.msra.mxu0 %v234
    %236 = vmatprep.subr.mxu0 0.0
    %237 = vmatpush1.msra.mxu0 0.0
    %238 = vmatprep.subr.mxu0 0.0
    %239 = vmatpush1.msra.mxu0 0.0
    %240 = vmatprep.subr.mxu0 0.0
    %241 = vmatpush1.msra.mxu0 0.0
    %242 = vmatprep.subr.mxu0 0.0
    %243 = vmatpush1.msra.mxu0 0.0
    %244 = vmatprep.subr.mxu0 0.0
    %245 = vmatpush1.msra.mxu0 0.0
    %246 = vmatprep.subr.mxu0 0.0
    %247 = vmatpush1.msra.mxu0 0.0
    %248 = vmatprep.subr.mxu0 0.0
    %249 = vmatpush1.msra.mxu0 0.0
    %250 = vmatprep.subr.mxu0 0.0
    %251 = vmatpush1.msra.mxu0 0.0
    %252 = vmatprep.subr.mxu0 0.0
    %253 = vmatpush1.msra.mxu0 0.0
    %254 = vmatprep.subr.mxu0 0.0
    %255 = vmatpush1.msra.mxu0 0.0
    %256 = vmatprep.subr.mxu0 0.0
    %257 = vmatpush1.msra.mxu0 0.0
    %258 = vmatprep.subr.mxu0 0.0
    %259 = vmatpush1.msra.mxu0 0.0
    %260 = vmatprep.subr.mxu0 0.0
    %261 = vmatpush1.msra.mxu0 0.0
    %262 = vmatprep.subr.mxu0 0.0
    %263 = vmatpush1.msra.mxu0 0.0
    %264 = vmatprep.subr.mxu0 0.0
    %265 = vmatpush1.msra.mxu0 0.0
    %266 = vmatprep.subr.mxu0 0.0
    %267 = vmatpush1.msra.mxu0 0.0
    %268 = vmatprep.subr.mxu0 0.0
    %269 = vmatpush1.msra.mxu0 0.0
    %270 = vmatprep.subr.mxu0 0.0
    %271 = vmatpush1.msra.mxu0 0.0
    %272 = vmatprep.subr.mxu0 0.0
    %273 = vmatpush1.msra.mxu0 0.0
    %274 = vmatprep.subr.mxu0 0.0
    %275 = vmatpush1.msra.mxu0 0.0
    %276 = vmatprep.subr.mxu0 0.0
    %277 = vmatpush1.msra.mxu0 0.0
    %278 = vmatprep.subr.mxu0 0.0
    %279 = vmatpush1.msra.mxu0 0.0
    %280 = vmatprep.subr.mxu0 0.0
    %281 = vmatpush1.msra.mxu0 0.0
    %282 = vmatprep.subr.mxu0 0.0
    %283 = vmatpush1.msra.mxu0 0.0
    %284 = vmatprep.subr.mxu0 0.0
    %285 = vmatpush1.msra.mxu0 0.0
    %286 = vmatprep.subr.mxu0 0.0
    %287 = vmatpush1.msra.mxu0 0.0
    %288 = vmatprep.subr.mxu0 0.0
    %289 = vmatpush1.msra.mxu0 0.0
    %290 = vmatprep.subr.mxu0 0.0
    %291 = vmatpush1.msra.mxu0 0.0
    %292 = vmatprep.subr.mxu0 0.0
    %293 = vmatpush1.msra.mxu0 0.0
    %294 = vmatprep.subr.mxu0 0.0
    %295 = vmatpush1.msra.mxu0 0.0
    %296 = vmatprep.subr.mxu0 0.0
    %297 = vmatpush1.msra.mxu0 0.0
    %298 = vmatprep.mubr.f32.mxu0 0.0
    %v299 = vand.u32 %v78, 4294901760
    %v300 = vsub.f32 %v78, %v299
    %301 = vmatmul.mubr.f32.gmra.mrb[0].mxu0 %v300
    %v302 = vpop.f32.mrb[0].mxu0
    %v303 = vadd.f32 %v229, %v302
    %v304 = vpop.f32.mrb[0].mxu0
    %305 = vdwg.mxu0
    %306 = vmatprep.subr.mxu0 0.0
    %v307 = vand.u32 %v68, 4294901760
    %308 = vmatpush1.msra.mxu0 %v307
    %309 = vmatprep.subr.mxu0 0.0
    %310 = vmatpush1.msra.mxu0 0.0
    %311 = vmatprep.subr.mxu0 0.0
    %312 = vmatpush1.msra.mxu0 0.0
    %313 = vmatprep.subr.mxu0 0.0
    %314 = vmatpush1.msra.mxu0 0.0
    %315 = vmatprep.subr.mxu0 0.0
    %316 = vmatpush1.msra.mxu0 0.0
    %317 = vmatprep.subr.mxu0 0.0
    %318 = vmatpush1.msra.mxu0 0.0
    %319 = vmatprep.subr.mxu0 0.0
    %320 = vmatpush1.msra.mxu0 0.0
    %321 = vmatprep.subr.mxu0 0.0
    %322 = vmatpush1.msra.mxu0 0.0
    %323 = vmatprep.subr.mxu0 0.0
    %324 = vmatpush1.msra.mxu0 0.0
    %325 = vmatprep.subr.mxu0 0.0
    %326 = vmatpush1.msra.mxu0 0.0
    %327 = vmatprep.subr.mxu0 0.0
    %328 = vmatpush1.msra.mxu0 0.0
    %329 = vmatprep.subr.mxu0 0.0
    %330 = vmatpush1.msra.mxu0 0.0
    %331 = vmatprep.subr.mxu0 0.0
    %332 = vmatpush1.msra.mxu0 0.0
    %333 = vmatprep.subr.mxu0 0.0
    %334 = vmatpush1.msra.mxu0 0.0
    %335 = vmatprep.subr.mxu0 0.0
    %336 = vmatpush1.msra.mxu0 0.0
    %337 = vmatprep.subr.mxu0 0.0
    %338 = vmatpush1.msra.mxu0 0.0
    %339 = vmatprep.subr.mxu0 0.0
    %340 = vmatpush1.msra.mxu0 0.0
    %341 = vmatprep.subr.mxu0 0.0
    %342 = vmatpush1.msra.mxu0 0.0
    %343 = vmatprep.subr.mxu0 0.0
    %344 = vmatpush1.msra.mxu0 0.0
    %345 = vmatprep.subr.mxu0 0.0
    %346 = vmatpush1.msra.mxu0 0.0
    %347 = vmatprep.subr.mxu0 0.0
    %348 = vmatpush1.msra.mxu0 0.0
    %349 = vmatprep.subr.mxu0 0.0
    %350 = vmatpush1.msra.mxu0 0.0
    %351 = vmatprep.subr.mxu0 0.0
    %352 = vmatpush1.msra.mxu0 0.0
    %353 = vmatprep.subr.mxu0 0.0
    %354 = vmatpush1.msra.mxu0 0.0
    %355 = vmatprep.subr.mxu0 0.0
    %356 = vmatpush1.msra.mxu0 0.0
    %357 = vmatprep.subr.mxu0 0.0
    %358 = vmatpush1.msra.mxu0 0.0
    %359 = vmatprep.subr.mxu0 0.0
    %360 = vmatpush1.msra.mxu0 0.0
    %361 = vmatprep.subr.mxu0 0.0
    %362 = vmatpush1.msra.mxu0 0.0
    %363 = vmatprep.subr.mxu0 0.0
    %364 = vmatpush1.msra.mxu0 0.0
    %365 = vmatprep.subr.mxu0 0.0
    %366 = vmatpush1.msra.mxu0 0.0
    %367 = vmatprep.subr.mxu0 0.0
    %368 = vmatpush1.msra.mxu0 0.0
    %369 = vmatprep.subr.mxu0 0.0
    %370 = vmatpush1.msra.mxu0 0.0
    %371 = vmatprep.mubr.f32.mxu0 0.0
    %v372 = vand.u32 %v78, 4294901760
    %v373 = vsub.f32 %v78, %v372
    %v374 = vand.u32 %v373, 4294901760
    %375 = vmatmul.mubr.f32.gmra.mrb[0].mxu0 %v374
    %v376 = vpop.f32.mrb[0].mxu0
    %v377 = vadd.f32 %v303, %v376
    %v378 = vpop.f32.mrb[0].mxu0
    %379 = vdwg.mxu0
    %380 = vmatprep.subr.mxu0 0.0
    %v381 = vand.u32 %v68, 4294901760
    %v382 = vsub.f32 %v68, %v381
    %v383 = vand.u32 %v382, 4294901760
    %384 = vmatpush1.msra.mxu0 %v383
    %385 = vmatprep.subr.mxu0 0.0
    %386 = vmatpush1.msra.mxu0 0.0
    %387 = vmatprep.subr.mxu0 0.0
    %388 = vmatpush1.msra.mxu0 0.0
    %389 = vmatprep.subr.mxu0 0.0
    %390 = vmatpush1.msra.mxu0 0.0
    %391 = vmatprep.subr.mxu0 0.0
    %392 = vmatpush1.msra.mxu0 0.0
    %393 = vmatprep.subr.mxu0 0.0
    %394 = vmatpush1.msra.mxu0 0.0
    %395 = vmatprep.subr.mxu0 0.0
    %396 = vmatpush1.msra.mxu0 0.0
    %397 = vmatprep.subr.mxu0 0.0
    %398 = vmatpush1.msra.mxu0 0.0
    %399 = vmatprep.subr.mxu0 0.0
    %400 = vmatpush1.msra.mxu0 0.0
    %401 = vmatprep.subr.mxu0 0.0
    %402 = vmatpush1.msra.mxu0 0.0
    %403 = vmatprep.subr.mxu0 0.0
    %404 = vmatpush1.msra.mxu0 0.0
    %405 = vmatprep.subr.mxu0 0.0
    %406 = vmatpush1.msra.mxu0 0.0
    %407 = vmatprep.subr.mxu0 0.0
    %408 = vmatpush1.msra.mxu0 0.0
    %409 = vmatprep.subr.mxu0 0.0
    %410 = vmatpush1.msra.mxu0 0.0
    %411 = vmatprep.subr.mxu0 0.0
    %412 = vmatpush1.msra.mxu0 0.0
    %413 = vmatprep.subr.mxu0 0.0
    %414 = vmatpush1.msra.mxu0 0.0
    %415 = vmatprep.subr.mxu0 0.0
    %416 = vmatpush1.msra.mxu0 0.0
    %417 = vmatprep.subr.mxu0 0.0
    %418 = vmatpush1.msra.mxu0 0.0
    %419 = vmatprep.subr.mxu0 0.0
    %420 = vmatpush1.msra.mxu0 0.0
    %421 = vmatprep.subr.mxu0 0.0
    %422 = vmatpush1.msra.mxu0 0.0
    %423 = vmatprep.subr.mxu0 0.0
    %424 = vmatpush1.msra.mxu0 0.0
    %425 = vmatprep.subr.mxu0 0.0
    %426 = vmatpush1.msra.mxu0 0.0
    %427 = vmatprep.subr.mxu0 0.0
    %428 = vmatpush1.msra.mxu0 0.0
    %429 = vmatprep.subr.mxu0 0.0
    %430 = vmatpush1.msra.mxu0 0.0
    %431 = vmatprep.subr.mxu0 0.0
    %432 = vmatpush1.msra.mxu0 0.0
    %433 = vmatprep.subr.mxu0 0.0
    %434 = vmatpush1.msra.mxu0 0.0
    %435 = vmatprep.subr.mxu0 0.0
    %436 = vmatpush1.msra.mxu0 0.0
    %437 = vmatprep.subr.mxu0 0.0
    %438 = vmatpush1.msra.mxu0 0.0
    %439 = vmatprep.subr.mxu0 0.0
    %440 = vmatpush1.msra.mxu0 0.0
    %441 = vmatprep.subr.mxu0 0.0
    %442 = vmatpush1.msra.mxu0 0.0
    %443 = vmatprep.subr.mxu0 0.0
    %444 = vmatpush1.msra.mxu0 0.0
    %445 = vmatprep.subr.mxu0 0.0
    %446 = vmatpush1.msra.mxu0 0.0
    %447 = vmatprep.mubr.f32.mxu0 0.0
    %v448 = vand.u32 %v78, 4294901760
    %449 = vmatmul.mubr.f32.gmra.mrb[0].mxu0 %v448
    %v450 = vpop.f32.mrb[0].mxu0
    %v451 = vadd.f32 %v377, %v450
    %v452 = vpop.f32.mrb[0].mxu0
    %453 = vdwg.mxu0
    %454 = vmatprep.subr.mxu0 0.0
    %v455 = vand.u32 %v68, 4294901760
    %456 = vmatpush1.msra.mxu0 %v455
    %457 = vmatprep.subr.mxu0 0.0
    %458 = vmatpush1.msra.mxu0 0.0
    %459 = vmatprep.subr.mxu0 0.0
    %460 = vmatpush1.msra.mxu0 0.0
    %461 = vmatprep.subr.mxu0 0.0
    %462 = vmatpush1.msra.mxu0 0.0
    %463 = vmatprep.subr.mxu0 0.0
    %464 = vmatpush1.msra.mxu0 0.0
    %465 = vmatprep.subr.mxu0 0.0
    %466 = vmatpush1.msra.mxu0 0.0
    %467 = vmatprep.subr.mxu0 0.0
    %468 = vmatpush1.msra.mxu0 0.0
    %469 = vmatprep.subr.mxu0 0.0
    %470 = vmatpush1.msra.mxu0 0.0
    %471 = vmatprep.subr.mxu0 0.0
    %472 = vmatpush1.msra.mxu0 0.0
    %473 = vmatprep.subr.mxu0 0.0
    %474 = vmatpush1.msra.mxu0 0.0
    %475 = vmatprep.subr.mxu0 0.0
    %476 = vmatpush1.msra.mxu0 0.0
    %477 = vmatprep.subr.mxu0 0.0
    %478 = vmatpush1.msra.mxu0 0.0
    %479 = vmatprep.subr.mxu0 0.0
    %480 = vmatpush1.msra.mxu0 0.0
    %481 = vmatprep.subr.mxu0 0.0
    %482 = vmatpush1.msra.mxu0 0.0
    %483 = vmatprep.subr.mxu0 0.0
    %484 = vmatpush1.msra.mxu0 0.0
    %485 = vmatprep.subr.mxu0 0.0
    %486 = vmatpush1.msra.mxu0 0.0
    %487 = vmatprep.subr.mxu0 0.0
    %488 = vmatpush1.msra.mxu0 0.0
    %489 = vmatprep.subr.mxu0 0.0
    %490 = vmatpush1.msra.mxu0 0.0
    %491 = vmatprep.subr.mxu0 0.0
    %492 = vmatpush1.msra.mxu0 0.0
    %493 = vmatprep.subr.mxu0 0.0
    %494 = vmatpush1.msra.mxu0 0.0
    %495 = vmatprep.subr.mxu0 0.0
    %496 = vmatpush1.msra.mxu0 0.0
    %497 = vmatprep.subr.mxu0 0.0
    %498 = vmatpush1.msra.mxu0 0.0
    %499 = vmatprep.subr.mxu0 0.0
    %500 = vmatpush1.msra.mxu0 0.0
    %501 = vmatprep.subr.mxu0 0.0
    %502 = vmatpush1.msra.mxu0 0.0
    %503 = vmatprep.subr.mxu0 0.0
    %504 = vmatpush1.msra.mxu0 0.0
    %505 = vmatprep.subr.mxu0 0.0
    %506 = vmatpush1.msra.mxu0 0.0
    %507 = vmatprep.subr.mxu0 0.0
    %508 = vmatpush1.msra.mxu0 0.0
    %509 = vmatprep.subr.mxu0 0.0
    %510 = vmatpush1.msra.mxu0 0.0
    %511 = vmatprep.subr.mxu0 0.0
    %512 = vmatpush1.msra.mxu0 0.0
    %513 = vmatprep.subr.mxu0 0.0
    %514 = vmatpush1.msra.mxu0 0.0
    %515 = vmatprep.subr.mxu0 0.0
    %516 = vmatpush1.msra.mxu0 0.0
    %517 = vmatprep.subr.mxu0 0.0
    %518 = vmatpush1.msra.mxu0 0.0
    %519 = vmatprep.mubr.f32.mxu0 0.0
    %v520 = vand.u32 %v78, 4294901760
    %521 = vmatmul.mubr.f32.gmra.mrb[0].mxu0 %v520
    %v522 = vpop.f32.mrb[0].mxu0
    %v523 = vadd.f32 %v451, %v522
    %v524 = vpop.f32.mrb[0].mxu0
    %525 = vdwg.mxu0
    %v526 = vtanh.pop %v523
    %v527 = vld [vmem:[%s3] sm:$0xff]
    %v528 = vld [vmem:[%s3 + $0x8] sm:$0xff]
    %v529 = vld [vmem:[%s3 + $0x10] sm:$0xff]
    %v530 = vld [vmem:[%s3 + $0x18] sm:$0xff]
    %v531 = vld [vmem:[%s3 + $0x20] sm:$0xff]
    %v532 = vld [vmem:[%s3 + $0x28] sm:$0xff]
    %v533 = vld [vmem:[%s3 + $0x30] sm:$0xff]
    %v534 = vld [vmem:[%s3 + $0x38] sm:$0xff]
    %v535 = vld [vmem:[%s3 + $0x40] sm:$0xff]
    %v536 = vld [vmem:[%s3 + $0x48] sm:$0xff]
    %v537 = vld [vmem:[%s3 + $0x50] sm:$0xff]
    %v538 = vld [vmem:[%s3 + $0x58] sm:$0xff]
    %v539 = vld [vmem:[%s3 + $0x60] sm:$0xff]
    %v540 = vld [vmem:[%s3 + $0x68] sm:$0xff]
    %v541 = vld [vmem:[%s3 + $0x70] sm:$0xff]
    %v542 = vld [vmem:[%s3 + $0x78] sm:$0xff]
    %v543 = vld [vmem:[%s4] sm:$0x1]
    %v545 = vlaneseq
    %v546 = vshrl.u32 %v545, 7
    %v547 = vsub.s32 0, %v546
    %v548 = vrot.slane %v543, %v547
    %550 = vmatprep.subr.mxu0 0.0
    %v551 = vand.u32 %v527, 4294901760
    %552 = vmatpush1.msra.mxu0 %v551
    %553 = vmatprep.subr.mxu0 0.0
    %v554 = vand.u32 %v528, 4294901760
    %555 = vmatpush1.msra.mxu0 %v554
    %556 = vmatprep.subr.mxu0 0.0
    %v557 = vand.u32 %v529, 4294901760
    %558 = vmatpush1.msra.mxu0 %v557
    %559 = vmatprep.subr.mxu0 0.0
    %v560 = vand.u32 %v530, 4294901760
    %561 = vmatpush1.msra.mxu0 %v560
    %562 = vmatprep.subr.mxu0 0.0
    %v563 = vand.u32 %v531, 4294901760
    %564 = vmatpush1.msra.mxu0 %v563
    %565 = vmatprep.subr.mxu0 0.0
    %v566 = vand.u32 %v532, 4294901760
    %567 = vmatpush1.msra.mxu0 %v566
    %568 = vmatprep.subr.mxu0 0.0
    %v569 = vand.u32 %v533, 4294901760
    %570 = vmatpush1.msra.mxu0 %v569
    %571 = vmatprep.subr.mxu0 0.0
    %v572 = vand.u32 %v534, 4294901760
    %573 = vmatpush1.msra.mxu0 %v572
    %574 = vmatprep.subr.mxu0 0.0
    %v575 = vand.u32 %v535, 4294901760
    %576 = vmatpush1.msra.mxu0 %v575
    %577 = vmatprep.subr.mxu0 0.0
    %v578 = vand.u32 %v536, 4294901760
    %579 = vmatpush1.msra.mxu0 %v578
    %580 = vmatprep.subr.mxu0 0.0
    %v581 = vand.u32 %v537, 4294901760
    %582 = vmatpush1.msra.mxu0 %v581
    %583 = vmatprep.subr.mxu0 0.0
    %v584 = vand.u32 %v538, 4294901760
    %585 = vmatpush1.msra.mxu0 %v584
    %586 = vmatprep.subr.mxu0 0.0
    %v587 = vand.u32 %v539, 4294901760
    %588 = vmatpush1.msra.mxu0 %v587
    %589 = vmatprep.subr.mxu0 0.0
    %v590 = vand.u32 %v540, 4294901760
    %591 = vmatpush1.msra.mxu0 %v590
    %592 = vmatprep.subr.mxu0 0.0
    %v593 = vand.u32 %v541, 4294901760
    %594 = vmatpush1.msra.mxu0 %v593
    %595 = vmatprep.subr.mxu0 0.0
    %v596 = vand.u32 %v542, 4294901760
    %597 = vmatpush1.msra.mxu0 %v596
    %598 = vmatprep.subr.mxu0 0.0
    %599 = vmatpush1.msra.mxu0 0.0
    %600 = vmatprep.subr.mxu0 0.0
    %601 = vmatpush1.msra.mxu0 0.0
    %602 = vmatprep.subr.mxu0 0.0
    %603 = vmatpush1.msra.mxu0 0.0
    %604 = vmatprep.subr.mxu0 0.0
    %605 = vmatpush1.msra.mxu0 0.0
    %606 = vmatprep.subr.mxu0 0.0
    %607 = vmatpush1.msra.mxu0 0.0
    %608 = vmatprep.subr.mxu0 0.0
    %609 = vmatpush1.msra.mxu0 0.0
    %610 = vmatprep.subr.mxu0 0.0
    %611 = vmatpush1.msra.mxu0 0.0
    %612 = vmatprep.subr.mxu0 0.0
    %613 = vmatpush1.msra.mxu0 0.0
    %614 = vmatprep.subr.mxu0 0.0
    %615 = vmatpush1.msra.mxu0 0.0
    %616 = vmatprep.subr.mxu0 0.0
    %617 = vmatpush1.msra.mxu0 0.0
    %618 = vmatprep.subr.mxu0 0.0
    %619 = vmatpush1.msra.mxu0 0.0
    %620 = vmatprep.subr.mxu0 0.0
    %621 = vmatpush1.msra.mxu0 0.0
    %622 = vmatprep.subr.mxu0 0.0
    %623 = vmatpush1.msra.mxu0 0.0
    %624 = vmatprep.subr.mxu0 0.0
    %625 = vmatpush1.msra.mxu0 0.0
    %626 = vmatprep.subr.mxu0 0.0
    %627 = vmatpush1.msra.mxu0 0.0
    %628 = vmatprep.subr.mxu0 0.0
    %629 = vmatpush1.msra.mxu0 0.0
    %630 = vmatprep.mubr.f32.mxu0 0.0
    %v631 = vand.u32 %v526, 4294901760
    %v632 = vsub.f32 %v526, %v631
    %v633 = vand.u32 %v632, 4294901760
    %v634 = vsub.f32 %v632, %v633
    %v635 = vand.u32 %v634, 4294901760
    %636 = vmatmul.mubr.f32.gmra.mrb[0].mxu0 %v635
    %v637 = vpop.f32.mrb[0].mxu0
    %v638 = vadd.f32 %v548, %v637
    %v639 = vpop.f32.mrb[0].mxu0
    %640 = vdwg.mxu0
    %641 = vmatprep.subr.mxu0 0.0
    %v642 = vand.u32 %v527, 4294901760
    %v643 = vsub.f32 %v527, %v642
    %v644 = vand.u32 %v643, 4294901760
    %v645 = vsub.f32 %v643, %v644
    %v646 = vand.u32 %v645, 4294901760
    %647 = vmatpush1.msra.mxu0 %v646
    %648 = vmatprep.subr.mxu0 0.0
    %v649 = vand.u32 %v528, 4294901760
    %v650 = vsub.f32 %v528, %v649
    %v651 = vand.u32 %v650, 4294901760
    %v652 = vsub.f32 %v650, %v651
    %v653 = vand.u32 %v652, 4294901760
    %654 = vmatpush1.msra.mxu0 %v653
    %655 = vmatprep.subr.mxu0 0.0
    %v656 = vand.u32 %v529, 4294901760
    %v657 = vsub.f32 %v529, %v656
    %v658 = vand.u32 %v657, 4294901760
    %v659 = vsub.f32 %v657, %v658
    %v660 = vand.u32 %v659, 4294901760
    %661 = vmatpush1.msra.mxu0 %v660
    %662 = vmatprep.subr.mxu0 0.0
    %v663 = vand.u32 %v530, 4294901760
    %v664 = vsub.f32 %v530, %v663
    %v665 = vand.u32 %v664, 4294901760
    %v666 = vsub.f32 %v664, %v665
    %v667 = vand.u32 %v666, 4294901760
    %668 = vmatpush1.msra.mxu0 %v667
    %669 = vmatprep.subr.mxu0 0.0
    %v670 = vand.u32 %v531, 4294901760
    %v671 = vsub.f32 %v531, %v670
    %v672 = vand.u32 %v671, 4294901760
    %v673 = vsub.f32 %v671, %v672
    %v674 = vand.u32 %v673, 4294901760
    %675 = vmatpush1.msra.mxu0 %v674
    %676 = vmatprep.subr.mxu0 0.0
    %v677 = vand.u32 %v532, 4294901760
    %v678 = vsub.f32 %v532, %v677
    %v679 = vand.u32 %v678, 4294901760
    %v680 = vsub.f32 %v678, %v679
    %v681 = vand.u32 %v680, 4294901760
    %682 = vmatpush1.msra.mxu0 %v681
    %683 = vmatprep.subr.mxu0 0.0
    %v684 = vand.u32 %v533, 4294901760
    %v685 = vsub.f32 %v533, %v684
    %v686 = vand.u32 %v685, 4294901760
    %v687 = vsub.f32 %v685, %v686
    %v688 = vand.u32 %v687, 4294901760
    %689 = vmatpush1.msra.mxu0 %v688
    %690 = vmatprep.subr.mxu0 0.0
    %v691 = vand.u32 %v534, 4294901760
    %v692 = vsub.f32 %v534, %v691
    %v693 = vand.u32 %v692, 4294901760
    %v694 = vsub.f32 %v692, %v693
    %v695 = vand.u32 %v694, 4294901760
    %696 = vmatpush1.msra.mxu0 %v695
    %697 = vmatprep.subr.mxu0 0.0
    %v698 = vand.u32 %v535, 4294901760
    %v699 = vsub.f32 %v535, %v698
    %v700 = vand.u32 %v699, 4294901760
    %v701 = vsub.f32 %v699, %v700
    %v702 = vand.u32 %v701, 4294901760
    %703 = vmatpush1.msra.mxu0 %v702
    %704 = vmatprep.subr.mxu0 0.0
    %v705 = vand.u32 %v536, 4294901760
    %v706 = vsub.f32 %v536, %v705
    %v707 = vand.u32 %v706, 4294901760
    %v708 = vsub.f32 %v706, %v707
    %v709 = vand.u32 %v708, 4294901760
    %710 = vmatpush1.msra.mxu0 %v709
    %711 = vmatprep.subr.mxu0 0.0
    %v712 = vand.u32 %v537, 4294901760
    %v713 = vsub.f32 %v537, %v712
    %v714 = vand.u32 %v713, 4294901760
    %v715 = vsub.f32 %v713, %v714
    %v716 = vand.u32 %v715, 4294901760
    %717 = vmatpush1.msra.mxu0 %v716
    %718 = vmatprep.subr.mxu0 0.0
    %v719 = vand.u32 %v538, 4294901760
    %v720 = vsub.f32 %v538, %v719
    %v721 = vand.u32 %v720, 4294901760
    %v722 = vsub.f32 %v720, %v721
    %v723 = vand.u32 %v722, 4294901760
    %724 = vmatpush1.msra.mxu0 %v723
    %725 = vmatprep.subr.mxu0 0.0
    %v726 = vand.u32 %v539, 4294901760
    %v727 = vsub.f32 %v539, %v726
    %v728 = vand.u32 %v727, 4294901760
    %v729 = vsub.f32 %v727, %v728
    %v730 = vand.u32 %v729, 4294901760
    %731 = vmatpush1.msra.mxu0 %v730
    %732 = vmatprep.subr.mxu0 0.0
    %v733 = vand.u32 %v540, 4294901760
    %v734 = vsub.f32 %v540, %v733
    %v735 = vand.u32 %v734, 4294901760
    %v736 = vsub.f32 %v734, %v735
    %v737 = vand.u32 %v736, 4294901760
    %738 = vmatpush1.msra.mxu0 %v737
    %739 = vmatprep.subr.mxu0 0.0
    %v740 = vand.u32 %v541, 4294901760
    %v741 = vsub.f32 %v541, %v740
    %v742 = vand.u32 %v741, 4294901760
    %v743 = vsub.f32 %v741, %v742
    %v744 = vand.u32 %v743, 4294901760
    %745 = vmatpush1.msra.mxu0 %v744
    %746 = vmatprep.subr.mxu0 0.0
    %v747 = vand.u32 %v542, 4294901760
    %v748 = vsub.f32 %v542, %v747
    %v749 = vand.u32 %v748, 4294901760
    %v750 = vsub.f32 %v748, %v749
    %v751 = vand.u32 %v750, 4294901760
    %752 = vmatpush1.msra.mxu0 %v751
    %753 = vmatprep.subr.mxu0 0.0
    %754 = vmatpush1.msra.mxu0 0.0
    %755 = vmatprep.subr.mxu0 0.0
    %756 = vmatpush1.msra.mxu0 0.0
    %757 = vmatprep.subr.mxu0 0.0
    %758 = vmatpush1.msra.mxu0 0.0
    %759 = vmatprep.subr.mxu0 0.0
    %760 = vmatpush1.msra.mxu0 0.0
    %761 = vmatprep.subr.mxu0 0.0
    %762 = vmatpush1.msra.mxu0 0.0
    %763 = vmatprep.subr.mxu0 0.0
    %764 = vmatpush1.msra.mxu0 0.0
    %765 = vmatprep.subr.mxu0 0.0
    %766 = vmatpush1.msra.mxu0 0.0
    %767 = vmatprep.subr.mxu0 0.0
    %768 = vmatpush1.msra.mxu0 0.0
    %769 = vmatprep.subr.mxu0 0.0
    %770 = vmatpush1.msra.mxu0 0.0
    %771 = vmatprep.subr.mxu0 0.0
    %772 = vmatpush1.msra.mxu0 0.0
    %773 = vmatprep.subr.mxu0 0.0
    %774 = vmatpush1.msra.mxu0 0.0
    %775 = vmatprep.subr.mxu0 0.0
    %776 = vmatpush1.msra.mxu0 0.0
    %777 = vmatprep.subr.mxu0 0.0
    %778 = vmatpush1.msra.mxu0 0.0
    %779 = vmatprep.subr.mxu0 0.0
    %780 = vmatpush1.msra.mxu0 0.0
    %781 = vmatprep.subr.mxu0 0.0
    %782 = vmatpush1.msra.mxu0 0.0
    %783 = vmatprep.subr.mxu0 0.0
    %784 = vmatpush1.msra.mxu0 0.0
    %785 = vmatprep.mubr.f32.mxu0 0.0
    %v786 = vand.u32 %v526, 4294901760
    %787 = vmatmul.mubr.f32.gmra.mrb[0].mxu0 %v786
    %v788 = vpop.f32.mrb[0].mxu0
    %v789 = vadd.f32 %v638, %v788
    %v790 = vpop.f32.mrb[0].mxu0
    %791 = vdwg.mxu0
    %792 = vmatprep.subr.mxu0 0.0
    %v793 = vand.u32 %v527, 4294901760
    %v794 = vsub.f32 %v527, %v793
    %795 = vmatpush1.msra.mxu0 %v794
    %796 = vmatprep.subr.mxu0 0.0
    %v797 = vand.u32 %v528, 4294901760
    %v798 = vsub.f32 %v528, %v797
    %799 = vmatpush1.msra.mxu0 %v798
    %800 = vmatprep.subr.mxu0 0.0
    %v801 = vand.u32 %v529, 4294901760
    %v802 = vsub.f32 %v529, %v801
    %803 = vmatpush1.msra.mxu0 %v802
    %804 = vmatprep.subr.mxu0 0.0
    %v805 = vand.u32 %v530, 4294901760
    %v806 = vsub.f32 %v530, %v805
    %807 = vmatpush1.msra.mxu0 %v806
    %808 = vmatprep.subr.mxu0 0.0
    %v809 = vand.u32 %v531, 4294901760
    %v810 = vsub.f32 %v531, %v809
    %811 = vmatpush1.msra.mxu0 %v810
    %812 = vmatprep.subr.mxu0 0.0
    %v813 = vand.u32 %v532, 4294901760
    %v814 = vsub.f32 %v532, %v813
    %815 = vmatpush1.msra.mxu0 %v814
    %816 = vmatprep.subr.mxu0 0.0
    %v817 = vand.u32 %v533, 4294901760
    %v818 = vsub.f32 %v533, %v817
    %819 = vmatpush1.msra.mxu0 %v818
    %820 = vmatprep.subr.mxu0 0.0
    %v821 = vand.u32 %v534, 4294901760
    %v822 = vsub.f32 %v534, %v821
    %823 = vmatpush1.msra.mxu0 %v822
    %824 = vmatprep.subr.mxu0 0.0
    %v825 = vand.u32 %v535, 4294901760
    %v826 = vsub.f32 %v535, %v825
    %827 = vmatpush1.msra.mxu0 %v826
    %828 = vmatprep.subr.mxu0 0.0
    %v829 = vand.u32 %v536, 4294901760
    %v830 = vsub.f32 %v536, %v829
    %831 = vmatpush1.msra.mxu0 %v830
    %832 = vmatprep.subr.mxu0 0.0
    %v833 = vand.u32 %v537, 4294901760
    %v834 = vsub.f32 %v537, %v833
    %835 = vmatpush1.msra.mxu0 %v834
    %836 = vmatprep.subr.mxu0 0.0
    %v837 = vand.u32 %v538, 4294901760
    %v838 = vsub.f32 %v538, %v837
    %839 = vmatpush1.msra.mxu0 %v838
    %840 = vmatprep.subr.mxu0 0.0
    %v841 = vand.u32 %v539, 4294901760
    %v842 = vsub.f32 %v539, %v841
    %843 = vmatpush1.msra.mxu0 %v842
    %844 = vmatprep.subr.mxu0 0.0
    %v845 = vand.u32 %v540, 4294901760
    %v846 = vsub.f32 %v540, %v845
    %847 = vmatpush1.msra.mxu0 %v846
    %848 = vmatprep.subr.mxu0 0.0
    %v849 = vand.u32 %v541, 4294901760
    %v850 = vsub.f32 %v541, %v849
    %851 = vmatpush1.msra.mxu0 %v850
    %852 = vmatprep.subr.mxu0 0.0
    %v853 = vand.u32 %v542, 4294901760
    %v854 = vsub.f32 %v542, %v853
    %855 = vmatpush1.msra.mxu0 %v854
    %856 = vmatprep.subr.mxu0 0.0
    %857 = vmatpush1.msra.mxu0 0.0
    %858 = vmatprep.subr.mxu0 0.0
    %859 = vmatpush1.msra.mxu0 0.0
    %860 = vmatprep.subr.mxu0 0.0
    %861 = vmatpush1.msra.mxu0 0.0
    %862 = vmatprep.subr.mxu0 0.0
    %863 = vmatpush1.msra.mxu0 0.0
    %864 = vmatprep.subr.mxu0 0.0
    %865 = vmatpush1.msra.mxu0 0.0
    %866 = vmatprep.subr.mxu0 0.0
    %867 = vmatpush1.msra.mxu0 0.0
    %868 = vmatprep.subr.mxu0 0.0
    %869 = vmatpush1.msra.mxu0 0.0
    %870 = vmatprep.subr.mxu0 0.0
    %871 = vmatpush1.msra.mxu0 0.0
    %872 = vmatprep.subr.mxu0 0.0
    %873 = vmatpush1.msra.mxu0 0.0
    %874 = vmatprep.subr.mxu0 0.0
    %875 = vmatpush1.msra.mxu0 0.0
    %876 = vmatprep.subr.mxu0 0.0
    %877 = vmatpush1.msra.mxu0 0.0
    %878 = vmatprep.subr.mxu0 0.0
    %879 = vmatpush1.msra.mxu0 0.0
    %880 = vmatprep.subr.mxu0 0.0
    %881 = vmatpush1.msra.mxu0 0.0
    %882 = vmatprep.subr.mxu0 0.0
    %883 = vmatpush1.msra.mxu0 0.0
    %884 = vmatprep.subr.mxu0 0.0
    %885 = vmatpush1.msra.mxu0 0.0
    %886 = vmatprep.subr.mxu0 0.0
    %887 = vmatpush1.msra.mxu0 0.0
    %888 = vmatprep.mubr.f32.mxu0 0.0
    %v889 = vand.u32 %v526, 4294901760
    %v890 = vsub.f32 %v526, %v889
    %891 = vmatmul.mubr.f32.gmra.mrb[0].mxu0 %v890
    %v892 = vpop.f32.mrb[0].mxu0
    %v893 = vadd.f32 %v789, %v892
    %v894 = vpop.f32.mrb[0].mxu0
    %895 = vdwg.mxu0
    %896 = vmatprep.subr.mxu0 0.0
    %v897 = vand.u32 %v527, 4294901760
    %898 = vmatpush1.msra.mxu0 %v897
    %899 = vmatprep.subr.mxu0 0.0
    %v900 = vand.u32 %v528, 4294901760
    %901 = vmatpush1.msra.mxu0 %v900
    %902 = vmatprep.subr.mxu0 0.0
    %v903 = vand.u32 %v529, 4294901760
    %904 = vmatpush1.msra.mxu0 %v903
    %905 = vmatprep.subr.mxu0 0.0
    %v906 = vand.u32 %v530, 4294901760
    %907 = vmatpush1.msra.mxu0 %v906
    %908 = vmatprep.subr.mxu0 0.0
    %v909 = vand.u32 %v531, 4294901760
    %910 = vmatpush1.msra.mxu0 %v909
    %911 = vmatprep.subr.mxu0 0.0
    %v912 = vand.u32 %v532, 4294901760
    %913 = vmatpush1.msra.mxu0 %v912
    %914 = vmatprep.subr.mxu0 0.0
    %v915 = vand.u32 %v533, 4294901760
    %916 = vmatpush1.msra.mxu0 %v915
    %917 = vmatprep.subr.mxu0 0.0
    %v918 = vand.u32 %v534, 4294901760
    %919 = vmatpush1.msra.mxu0 %v918
    %920 = vmatprep.subr.mxu0 0.0
    %v921 = vand.u32 %v535, 4294901760
    %922 = vmatpush1.msra.mxu0 %v921
    %923 = vmatprep.subr.mxu0 0.0
    %v924 = vand.u32 %v536, 4294901760
    %925 = vmatpush1.msra.mxu0 %v924
    %926 = vmatprep.subr.mxu0 0.0
    %v927 = vand.u32 %v537, 4294901760
    %928 = vmatpush1.msra.mxu0 %v927
    %929 = vmatprep.subr.mxu0 0.0
    %v930 = vand.u32 %v538, 4294901760
    %931 = vmatpush1.msra.mxu0 %v930
    %932 = vmatprep.subr.mxu0 0.0
    %v933 = vand.u32 %v539, 4294901760
    %934 = vmatpush1.msra.mxu0 %v933
    %935 = vmatprep.subr.mxu0 0.0
    %v936 = vand.u32 %v540, 4294901760
    %937 = vmatpush1.msra.mxu0 %v936
    %938 = vmatprep.subr.mxu0 0.0
    %v939 = vand.u32 %v541, 4294901760
    %940 = vmatpush1.msra.mxu0 %v939
    %941 = vmatprep.subr.mxu0 0.0
    %v942 = vand.u32 %v542, 4294901760
    %943 = vmatpush1.msra.mxu0 %v942
    %944 = vmatprep.subr.mxu0 0.0
    %945 = vmatpush1.msra.mxu0 0.0
    %946 = vmatprep.subr.mxu0 0.0
    %947 = vmatpush1.msra.mxu0 0.0
    %948 = vmatprep.subr.mxu0 0.0
    %949 = vmatpush1.msra.mxu0 0.0
    %950 = vmatprep.subr.mxu0 0.0
    %951 = vmatpush1.msra.mxu0 0.0
    %952 = vmatprep.subr.mxu0 0.0
    %953 = vmatpush1.msra.mxu0 0.0
    %954 = vmatprep.subr.mxu0 0.0
    %955 = vmatpush1.msra.mxu0 0.0
    %956 = vmatprep.subr.mxu0 0.0
    %957 = vmatpush1.msra.mxu0 0.0
    %958 = vmatprep.subr.mxu0 0.0
    %959 = vmatpush1.msra.mxu0 0.0
    %960 = vmatprep.subr.mxu0 0.0
    %961 = vmatpush1.msra.mxu0 0.0
    %962 = vmatprep.subr.mxu0 0.0
    %963 = vmatpush1.msra.mxu0 0.0
    %964 = vmatprep.subr.mxu0 0.0
    %965 = vmatpush1.msra.mxu0 0.0
    %966 = vmatprep.subr.mxu0 0.0
    %967 = vmatpush1.msra.mxu0 0.0
    %968 = vmatprep.subr.mxu0 0.0
    %969 = vmatpush1.msra.mxu0 0.0
    %970 = vmatprep.subr.mxu0 0.0
    %971 = vmatpush1.msra.mxu0 0.0
    %972 = vmatprep.subr.mxu0 0.0
    %973 = vmatpush1.msra.mxu0 0.0
    %974 = vmatprep.subr.mxu0 0.0
    %975 = vmatpush1.msra.mxu0 0.0
    %976 = vmatprep.mubr.f32.mxu0 0.0
    %v977 = vand.u32 %v526, 4294901760
    %v978 = vsub.f32 %v526, %v977
    %v979 = vand.u32 %v978, 4294901760
    %980 = vmatmul.mubr.f32.gmra.mrb[0].mxu0 %v979
    %v981 = vpop.f32.mrb[0].mxu0
    %v982 = vadd.f32 %v893, %v981
    %v983 = vpop.f32.mrb[0].mxu0
    %984 = vdwg.mxu0
    %985 = vmatprep.subr.mxu0 0.0
    %v986 = vand.u32 %v527, 4294901760
    %v987 = vsub.f32 %v527, %v986
    %v988 = vand.u32 %v987, 4294901760
    %989 = vmatpush1.msra.mxu0 %v988
    %990 = vmatprep.subr.mxu0 0.0
    %v991 = vand.u32 %v528, 4294901760
    %v992 = vsub.f32 %v528, %v991
    %v993 = vand.u32 %v992, 4294901760
    %994 = vmatpush1.msra.mxu0 %v993
    %995 = vmatprep.subr.mxu0 0.0
    %v996 = vand.u32 %v529, 4294901760
    %v997 = vsub.f32 %v529, %v996
    %v998 = vand.u32 %v997, 4294901760
    %999 = vmatpush1.msra.mxu0 %v998
    %1000 = vmatprep.subr.mxu0 0.0
    %v1001 = vand.u32 %v530, 4294901760
    %v1002 = vsub.f32 %v530, %v1001
    %v1003 = vand.u32 %v1002, 4294901760
    %1004 = vmatpush1.msra.mxu0 %v1003
    %1005 = vmatprep.subr.mxu0 0.0
    %v1006 = vand.u32 %v531, 4294901760
    %v1007 = vsub.f32 %v531, %v1006
    %v1008 = vand.u32 %v1007, 4294901760
    %1009 = vmatpush1.msra.mxu0 %v1008
    %1010 = vmatprep.subr.mxu0 0.0
    %v1011 = vand.u32 %v532, 4294901760
    %v1012 = vsub.f32 %v532, %v1011
    %v1013 = vand.u32 %v1012, 4294901760
    %1014 = vmatpush1.msra.mxu0 %v1013
    %1015 = vmatprep.subr.mxu0 0.0
    %v1016 = vand.u32 %v533, 4294901760
    %v1017 = vsub.f32 %v533, %v1016
    %v1018 = vand.u32 %v1017, 4294901760
    %1019 = vmatpush1.msra.mxu0 %v1018
    %1020 = vmatprep.subr.mxu0 0.0
    %v1021 = vand.u32 %v534, 4294901760
    %v1022 = vsub.f32 %v534, %v1021
    %v1023 = vand.u32 %v1022, 4294901760
    %1024 = vmatpush1.msra.mxu0 %v1023
    %1025 = vmatprep.subr.mxu0 0.0
    %v1026 = vand.u32 %v535, 4294901760
    %v1027 = vsub.f32 %v535, %v1026
    %v1028 = vand.u32 %v1027, 4294901760
    %1029 = vmatpush1.msra.mxu0 %v1028
    %1030 = vmatprep.subr.mxu0 0.0
    %v1031 = vand.u32 %v536, 4294901760
    %v1032 = vsub.f32 %v536, %v1031
    %v1033 = vand.u32 %v1032, 4294901760
    %1034 = vmatpush1.msra.mxu0 %v1033
    %1035 = vmatprep.subr.mxu0 0.0
    %v1036 = vand.u32 %v537, 4294901760
    %v1037 = vsub.f32 %v537, %v1036
    %v1038 = vand.u32 %v1037, 4294901760
    %1039 = vmatpush1.msra.mxu0 %v1038
    %1040 = vmatprep.subr.mxu0 0.0
    %v1041 = vand.u32 %v538, 4294901760
    %v1042 = vsub.f32 %v538, %v1041
    %v1043 = vand.u32 %v1042, 4294901760
    %1044 = vmatpush1.msra.mxu0 %v1043
    %1045 = vmatprep.subr.mxu0 0.0
    %v1046 = vand.u32 %v539, 4294901760
    %v1047 = vsub.f32 %v539, %v1046
    %v1048 = vand.u32 %v1047, 4294901760
    %1049 = vmatpush1.msra.mxu0 %v1048
    %1050 = vmatprep.subr.mxu0 0.0
    %v1051 = vand.u32 %v540, 4294901760
    %v1052 = vsub.f32 %v540, %v1051
    %v1053 = vand.u32 %v1052, 4294901760
    %1054 = vmatpush1.msra.mxu0 %v1053
    %1055 = vmatprep.subr.mxu0 0.0
    %v1056 = vand.u32 %v541, 4294901760
    %v1057 = vsub.f32 %v541, %v1056
    %v1058 = vand.u32 %v1057, 4294901760
    %1059 = vmatpush1.msra.mxu0 %v1058
    %1060 = vmatprep.subr.mxu0 0.0
    %v1061 = vand.u32 %v542, 4294901760
    %v1062 = vsub.f32 %v542, %v1061
    %v1063 = vand.u32 %v1062, 4294901760
    %1064 = vmatpush1.msra.mxu0 %v1063
    %1065 = vmatprep.subr.mxu0 0.0
    %1066 = vmatpush1.msra.mxu0 0.0
    %1067 = vmatprep.subr.mxu0 0.0
    %1068 = vmatpush1.msra.mxu0 0.0
    %1069 = vmatprep.subr.mxu0 0.0
    %1070 = vmatpush1.msra.mxu0 0.0
    %1071 = vmatprep.subr.mxu0 0.0
    %1072 = vmatpush1.msra.mxu0 0.0
    %1073 = vmatprep.subr.mxu0 0.0
    %1074 = vmatpush1.msra.mxu0 0.0
    %1075 = vmatprep.subr.mxu0 0.0
    %1076 = vmatpush1.msra.mxu0 0.0
    %1077 = vmatprep.subr.mxu0 0.0
    %1078 = vmatpush1.msra.mxu0 0.0
    %1079 = vmatprep.subr.mxu0 0.0
    %1080 = vmatpush1.msra.mxu0 0.0
    %1081 = vmatprep.subr.mxu0 0.0
    %1082 = vmatpush1.msra.mxu0 0.0
    %1083 = vmatprep.subr.mxu0 0.0
    %1084 = vmatpush1.msra.mxu0 0.0
    %1085 = vmatprep.subr.mxu0 0.0
    %1086 = vmatpush1.msra.mxu0 0.0
    %1087 = vmatprep.subr.mxu0 0.0
    %1088 = vmatpush1.msra.mxu0 0.0
    %1089 = vmatprep.subr.mxu0 0.0
    %1090 = vmatpush1.msra.mxu0 0.0
    %1091 = vmatprep.subr.mxu0 0.0
    %1092 = vmatpush1.msra.mxu0 0.0
    %1093 = vmatprep.subr.mxu0 0.0
    %1094 = vmatpush1.msra.mxu0 0.0
    %1095 = vmatprep.subr.mxu0 0.0
    %1096 = vmatpush1.msra.mxu0 0.0
    %1097 = vmatprep.mubr.f32.mxu0 0.0
    %v1098 = vand.u32 %v526, 4294901760
    %1099 = vmatmul.mubr.f32.gmra.mrb[0].mxu0 %v1098
    %v1100 = vpop.f32.mrb[0].mxu0
    %v1101 = vadd.f32 %v982, %v1100
    %v1102 = vpop.f32.mrb[0].mxu0
    %1103 = vdwg.mxu0
    %1104 = vmatprep.subr.mxu0 0.0
    %v1105 = vand.u32 %v527, 4294901760
    %1106 = vmatpush1.msra.mxu0 %v1105
    %1107 = vmatprep.subr.mxu0 0.0
    %v1108 = vand.u32 %v528, 4294901760
    %1109 = vmatpush1.msra.mxu0 %v1108
    %1110 = vmatprep.subr.mxu0 0.0
    %v1111 = vand.u32 %v529, 4294901760
    %1112 = vmatpush1.msra.mxu0 %v1111
    %1113 = vmatprep.subr.mxu0 0.0
    %v1114 = vand.u32 %v530, 4294901760
    %1115 = vmatpush1.msra.mxu0 %v1114
    %1116 = vmatprep.subr.mxu0 0.0
    %v1117 = vand.u32 %v531, 4294901760
    %1118 = vmatpush1.msra.mxu0 %v1117
    %1119 = vmatprep.subr.mxu0 0.0
    %v1120 = vand.u32 %v532, 4294901760
    %1121 = vmatpush1.msra.mxu0 %v1120
    %1122 = vmatprep.subr.mxu0 0.0
    %v1123 = vand.u32 %v533, 4294901760
    %1124 = vmatpush1.msra.mxu0 %v1123
    %1125 = vmatprep.subr.mxu0 0.0
    %v1126 = vand.u32 %v534, 4294901760
    %1127 = vmatpush1.msra.mxu0 %v1126
    %1128 = vmatprep.subr.mxu0 0.0
    %v1129 = vand.u32 %v535, 4294901760
    %1130 = vmatpush1.msra.mxu0 %v1129
    %1131 = vmatprep.subr.mxu0 0.0
    %v1132 = vand.u32 %v536, 4294901760
    %1133 = vmatpush1.msra.mxu0 %v1132
    %1134 = vmatprep.subr.mxu0 0.0
    %v1135 = vand.u32 %v537, 4294901760
    %1136 = vmatpush1.msra.mxu0 %v1135
    %1137 = vmatprep.subr.mxu0 0.0
    %v1138 = vand.u32 %v538, 4294901760
    %1139 = vmatpush1.msra.mxu0 %v1138
    %1140 = vmatprep.subr.mxu0 0.0
    %v1141 = vand.u32 %v539, 4294901760
    %1142 = vmatpush1.msra.mxu0 %v1141
    %1143 = vmatprep.subr.mxu0 0.0
    %v1144 = vand.u32 %v540, 4294901760
    %1145 = vmatpush1.msra.mxu0 %v1144
    %1146 = vmatprep.subr.mxu0 0.0
    %v1147 = vand.u32 %v541, 4294901760
    %1148 = vmatpush1.msra.mxu0 %v1147
    %1149 = vmatprep.subr.mxu0 0.0
    %v1150 = vand.u32 %v542, 4294901760
    %1151 = vmatpush1.msra.mxu0 %v1150
    %1152 = vmatprep.subr.mxu0 0.0
    %1153 = vmatpush1.msra.mxu0 0.0
    %1154 = vmatprep.subr.mxu0 0.0
    %1155 = vmatpush1.msra.mxu0 0.0
    %1156 = vmatprep.subr.mxu0 0.0
    %1157 = vmatpush1.msra.mxu0 0.0
    %1158 = vmatprep.subr.mxu0 0.0
    %1159 = vmatpush1.msra.mxu0 0.0
    %1160 = vmatprep.subr.mxu0 0.0
    %1161 = vmatpush1.msra.mxu0 0.0
    %1162 = vmatprep.subr.mxu0 0.0
    %1163 = vmatpush1.msra.mxu0 0.0
    %1164 = vmatprep.subr.mxu0 0.0
    %1165 = vmatpush1.msra.mxu0 0.0
    %1166 = vmatprep.subr.mxu0 0.0
    %1167 = vmatpush1.msra.mxu0 0.0
    %1168 = vmatprep.subr.mxu0 0.0
    %1169 = vmatpush1.msra.mxu0 0.0
    %1170 = vmatprep.subr.mxu0 0.0
    %1171 = vmatpush1.msra.mxu0 0.0
    %1172 = vmatprep.subr.mxu0 0.0
    %1173 = vmatpush1.msra.mxu0 0.0
    %1174 = vmatprep.subr.mxu0 0.0
    %1175 = vmatpush1.msra.mxu0 0.0
    %1176 = vmatprep.subr.mxu0 0.0
    %1177 = vmatpush1.msra.mxu0 0.0
    %1178 = vmatprep.subr.mxu0 0.0
    %1179 = vmatpush1.msra.mxu0 0.0
    %1180 = vmatprep.subr.mxu0 0.0
    %1181 = vmatpush1.msra.mxu0 0.0
    %1182 = vmatprep.subr.mxu0 0.0
    %1183 = vmatpush1.msra.mxu0 0.0
    %1184 = vmatprep.mubr.f32.mxu0 0.0
    %v1185 = vand.u32 %v526, 4294901760
    %1186 = vmatmul.mubr.f32.gmra.mrb[0].mxu0 %v1185
    %v1187 = vpop.f32.mrb[0].mxu0
    %v1188 = vadd.f32 %v1101, %v1187
    %v1189 = vpop.f32.mrb[0].mxu0
    %1190 = vdwg.mxu0
    %v1191 = vtanh.pop %v1188
    %v1192 = vld [vmem:[#allocation2] sm:$0xff]
    %v1193 = vld [vmem:[#allocation2 + $0x8] sm:$0xff]
    %v1194 = vld [vmem:[#allocation2 + $0x10] sm:$0xff]
    %v1195 = vld [vmem:[#allocation2 + $0x18] sm:$0xff]
    %v1196 = vld [vmem:[#allocation2 + $0x20] sm:$0xff]
    %v1197 = vld [vmem:[#allocation2 + $0x28] sm:$0xff]
    %v1198 = vld [vmem:[#allocation2 + $0x30] sm:$0xff]
    %v1199 = vld [vmem:[#allocation2 + $0x38] sm:$0xff]
    %v1200 = vld [vmem:[#allocation2 + $0x40] sm:$0xff]
    %v1201 = vld [vmem:[#allocation2 + $0x48] sm:$0xff]
    %v1202 = vld [vmem:[#allocation2 + $0x50] sm:$0xff]
    %v1203 = vld [vmem:[#allocation2 + $0x58] sm:$0xff]
    %v1204 = vld [vmem:[#allocation2 + $0x60] sm:$0xff]
    %v1205 = vld [vmem:[#allocation2 + $0x68] sm:$0xff]
    %v1206 = vld [vmem:[#allocation2 + $0x70] sm:$0xff]
    %v1207 = vld [vmem:[#allocation2 + $0x78] sm:$0xff]
    %v1208 = vld [vmem:[%s6] sm:$0x1]
    %v1210 = vlaneseq
    %v1211 = vshrl.u32 %v1210, 7
    %v1212 = vsub.s32 0, %v1211
    %v1213 = vrot.slane %v1208, %v1212
    %1215 = vmatprep.subr.mxu0 0.0
    %v1216 = vand.u32 %v1192, 4294901760
    %1217 = vmatpush1.msra.mxu0 %v1216
    %1218 = vmatprep.subr.mxu0 0.0
    %v1219 = vand.u32 %v1193, 4294901760
    %1220 = vmatpush1.msra.mxu0 %v1219
    %1221 = vmatprep.subr.mxu0 0.0
    %v1222 = vand.u32 %v1194, 4294901760
    %1223 = vmatpush1.msra.mxu0 %v1222
    %1224 = vmatprep.subr.mxu0 0.0
    %v1225 = vand.u32 %v1195, 4294901760
    %1226 = vmatpush1.msra.mxu0 %v1225
    %1227 = vmatprep.subr.mxu0 0.0
    %v1228 = vand.u32 %v1196, 4294901760
    %1229 = vmatpush1.msra.mxu0 %v1228
    %1230 = vmatprep.subr.mxu0 0.0
    %v1231 = vand.u32 %v1197, 4294901760
    %1232 = vmatpush1.msra.mxu0 %v1231
    %1233 = vmatprep.subr.mxu0 0.0
    %v1234 = vand.u32 %v1198, 4294901760
    %1235 = vmatpush1.msra.mxu0 %v1234
    %1236 = vmatprep.subr.mxu0 0.0
    %v1237 = vand.u32 %v1199, 4294901760
    %1238 = vmatpush1.msra.mxu0 %v1237
    %1239 = vmatprep.subr.mxu0 0.0
    %v1240 = vand.u32 %v1200, 4294901760
    %1241 = vmatpush1.msra.mxu0 %v1240
    %1242 = vmatprep.subr.mxu0 0.0
    %v1243 = vand.u32 %v1201, 4294901760
    %1244 = vmatpush1.msra.mxu0 %v1243
    %1245 = vmatprep.subr.mxu0 0.0
    %v1246 = vand.u32 %v1202, 4294901760
    %1247 = vmatpush1.msra.mxu0 %v1246
    %1248 = vmatprep.subr.mxu0 0.0
    %v1249 = vand.u32 %v1203, 4294901760
    %1250 = vmatpush1.msra.mxu0 %v1249
    %1251 = vmatprep.subr.mxu0 0.0
    %v1252 = vand.u32 %v1204, 4294901760
    %1253 = vmatpush1.msra.mxu0 %v1252
    %1254 = vmatprep.subr.mxu0 0.0
    %v1255 = vand.u32 %v1205, 4294901760
    %1256 = vmatpush1.msra.mxu0 %v1255
    %1257 = vmatprep.subr.mxu0 0.0
    %v1258 = vand.u32 %v1206, 4294901760
    %1259 = vmatpush1.msra.mxu0 %v1258
    %1260 = vmatprep.subr.mxu0 0.0
    %v1261 = vand.u32 %v1207, 4294901760
    %1262 = vmatpush1.msra.mxu0 %v1261
    %1263 = vmatprep.subr.mxu0 0.0
    %1264 = vmatpush1.msra.mxu0 0.0
    %1265 = vmatprep.subr.mxu0 0.0
    %1266 = vmatpush1.msra.mxu0 0.0
    %1267 = vmatprep.subr.mxu0 0.0
    %1268 = vmatpush1.msra.mxu0 0.0
    %1269 = vmatprep.subr.mxu0 0.0
    %1270 = vmatpush1.msra.mxu0 0.0
    %1271 = vmatprep.subr.mxu0 0.0
    %1272 = vmatpush1.msra.mxu0 0.0
    %1273 = vmatprep.subr.mxu0 0.0
    %1274 = vmatpush1.msra.mxu0 0.0
    %1275 = vmatprep.subr.mxu0 0.0
    %1276 = vmatpush1.msra.mxu0 0.0
    %1277 = vmatprep.subr.mxu0 0.0
    %1278 = vmatpush1.msra.mxu0 0.0
    %1279 = vmatprep.subr.mxu0 0.0
    %1280 = vmatpush1.msra.mxu0 0.0
    %1281 = vmatprep.subr.mxu0 0.0
    %1282 = vmatpush1.msra.mxu0 0.0
    %1283 = vmatprep.subr.mxu0 0.0
    %1284 = vmatpush1.msra.mxu0 0.0
    %1285 = vmatprep.subr.mxu0 0.0
    %1286 = vmatpush1.msra.mxu0 0.0
    %1287 = vmatprep.subr.mxu0 0.0
    %1288 = vmatpush1.msra.mxu0 0.0
    %1289 = vmatprep.subr.mxu0 0.0
    %1290 = vmatpush1.msra.mxu0 0.0
    %1291 = vmatprep.subr.mxu0 0.0
    %1292 = vmatpush1.msra.mxu0 0.0
    %1293 = vmatprep.subr.mxu0 0.0
    %1294 = vmatpush1.msra.mxu0 0.0
    %1295 = vmatprep.mubr.f32.mxu0 0.0
    %v1296 = vand.u32 %v1191, 4294901760
    %v1297 = vsub.f32 %v1191, %v1296
    %v1298 = vand.u32 %v1297, 4294901760
    %v1299 = vsub.f32 %v1297, %v1298
    %v1300 = vand.u32 %v1299, 4294901760
    %1301 = vmatmul.mubr.f32.gmra.mrb[0].mxu0 %v1300
    %v1302 = vpop.f32.mrb[0].mxu0
    %v1303 = vadd.f32 %v1213, %v1302
    %v1304 = vpop.f32.mrb[0].mxu0
    %1305 = vdwg.mxu0
    %1306 = vmatprep.subr.mxu0 0.0
    %v1307 = vand.u32 %v1192, 4294901760
    %v1308 = vsub.f32 %v1192, %v1307
    %v1309 = vand.u32 %v1308, 4294901760
    %v1310 = vsub.f32 %v1308, %v1309
    %v1311 = vand.u32 %v1310, 4294901760
    %1312 = vmatpush1.msra.mxu0 %v1311
    %1313 = vmatprep.subr.mxu0 0.0
    %v1314 = vand.u32 %v1193, 4294901760
    %v1315 = vsub.f32 %v1193, %v1314
    %v1316 = vand.u32 %v1315, 4294901760
    %v1317 = vsub.f32 %v1315, %v1316
    %v1318 = vand.u32 %v1317, 4294901760
    %1319 = vmatpush1.msra.mxu0 %v1318
    %1320 = vmatprep.subr.mxu0 0.0
    %v1321 = vand.u32 %v1194, 4294901760
    %v1322 = vsub.f32 %v1194, %v1321
    %v1323 = vand.u32 %v1322, 4294901760
    %v1324 = vsub.f32 %v1322, %v1323
    %v1325 = vand.u32 %v1324, 4294901760
    %1326 = vmatpush1.msra.mxu0 %v1325
    %1327 = vmatprep.subr.mxu0 0.0
    %v1328 = vand.u32 %v1195, 4294901760
    %v1329 = vsub.f32 %v1195, %v1328
    %v1330 = vand.u32 %v1329, 4294901760
    %v1331 = vsub.f32 %v1329, %v1330
    %v1332 = vand.u32 %v1331, 4294901760
    %1333 = vmatpush1.msra.mxu0 %v1332
    %1334 = vmatprep.subr.mxu0 0.0
    %v1335 = vand.u32 %v1196, 4294901760
    %v1336 = vsub.f32 %v1196, %v1335
    %v1337 = vand.u32 %v1336, 4294901760
    %v1338 = vsub.f32 %v1336, %v1337
    %v1339 = vand.u32 %v1338, 4294901760
    %1340 = vmatpush1.msra.mxu0 %v1339
    %1341 = vmatprep.subr.mxu0 0.0
    %v1342 = vand.u32 %v1197, 4294901760
    %v1343 = vsub.f32 %v1197, %v1342
    %v1344 = vand.u32 %v1343, 4294901760
    %v1345 = vsub.f32 %v1343, %v1344
    %v1346 = vand.u32 %v1345, 4294901760
    %1347 = vmatpush1.msra.mxu0 %v1346
    %1348 = vmatprep.subr.mxu0 0.0
    %v1349 = vand.u32 %v1198, 4294901760
    %v1350 = vsub.f32 %v1198, %v1349
    %v1351 = vand.u32 %v1350, 4294901760
    %v1352 = vsub.f32 %v1350, %v1351
    %v1353 = vand.u32 %v1352, 4294901760
    %1354 = vmatpush1.msra.mxu0 %v1353
    %1355 = vmatprep.subr.mxu0 0.0
    %v1356 = vand.u32 %v1199, 4294901760
    %v1357 = vsub.f32 %v1199, %v1356
    %v1358 = vand.u32 %v1357, 4294901760
    %v1359 = vsub.f32 %v1357, %v1358
    %v1360 = vand.u32 %v1359, 4294901760
    %1361 = vmatpush1.msra.mxu0 %v1360
    %1362 = vmatprep.subr.mxu0 0.0
    %v1363 = vand.u32 %v1200, 4294901760
    %v1364 = vsub.f32 %v1200, %v1363
    %v1365 = vand.u32 %v1364, 4294901760
    %v1366 = vsub.f32 %v1364, %v1365
    %v1367 = vand.u32 %v1366, 4294901760
    %1368 = vmatpush1.msra.mxu0 %v1367
    %1369 = vmatprep.subr.mxu0 0.0
    %v1370 = vand.u32 %v1201, 4294901760
    %v1371 = vsub.f32 %v1201, %v1370
    %v1372 = vand.u32 %v1371, 4294901760
    %v1373 = vsub.f32 %v1371, %v1372
    %v1374 = vand.u32 %v1373, 4294901760
    %1375 = vmatpush1.msra.mxu0 %v1374
    %1376 = vmatprep.subr.mxu0 0.0
    %v1377 = vand.u32 %v1202, 4294901760
    %v1378 = vsub.f32 %v1202, %v1377
    %v1379 = vand.u32 %v1378, 4294901760
    %v1380 = vsub.f32 %v1378, %v1379
    %v1381 = vand.u32 %v1380, 4294901760
    %1382 = vmatpush1.msra.mxu0 %v1381
    %1383 = vmatprep.subr.mxu0 0.0
    %v1384 = vand.u32 %v1203, 4294901760
    %v1385 = vsub.f32 %v1203, %v1384
    %v1386 = vand.u32 %v1385, 4294901760
    %v1387 = vsub.f32 %v1385, %v1386
    %v1388 = vand.u32 %v1387, 4294901760
    %1389 = vmatpush1.msra.mxu0 %v1388
    %1390 = vmatprep.subr.mxu0 0.0
    %v1391 = vand.u32 %v1204, 4294901760
    %v1392 = vsub.f32 %v1204, %v1391
    %v1393 = vand.u32 %v1392, 4294901760
    %v1394 = vsub.f32 %v1392, %v1393
    %v1395 = vand.u32 %v1394, 4294901760
    %1396 = vmatpush1.msra.mxu0 %v1395
    %1397 = vmatprep.subr.mxu0 0.0
    %v1398 = vand.u32 %v1205, 4294901760
    %v1399 = vsub.f32 %v1205, %v1398
    %v1400 = vand.u32 %v1399, 4294901760
    %v1401 = vsub.f32 %v1399, %v1400
    %v1402 = vand.u32 %v1401, 4294901760
    %1403 = vmatpush1.msra.mxu0 %v1402
    %1404 = vmatprep.subr.mxu0 0.0
    %v1405 = vand.u32 %v1206, 4294901760
    %v1406 = vsub.f32 %v1206, %v1405
    %v1407 = vand.u32 %v1406, 4294901760
    %v1408 = vsub.f32 %v1406, %v1407
    %v1409 = vand.u32 %v1408, 4294901760
    %1410 = vmatpush1.msra.mxu0 %v1409
    %1411 = vmatprep.subr.mxu0 0.0
    %v1412 = vand.u32 %v1207, 4294901760
    %v1413 = vsub.f32 %v1207, %v1412
    %v1414 = vand.u32 %v1413, 4294901760
    %v1415 = vsub.f32 %v1413, %v1414
    %v1416 = vand.u32 %v1415, 4294901760
    %1417 = vmatpush1.msra.mxu0 %v1416
    %1418 = vmatprep.subr.mxu0 0.0
    %1419 = vmatpush1.msra.mxu0 0.0
    %1420 = vmatprep.subr.mxu0 0.0
    %1421 = vmatpush1.msra.mxu0 0.0
    %1422 = vmatprep.subr.mxu0 0.0
    %1423 = vmatpush1.msra.mxu0 0.0
    %1424 = vmatprep.subr.mxu0 0.0
    %1425 = vmatpush1.msra.mxu0 0.0
    %1426 = vmatprep.subr.mxu0 0.0
    %1427 = vmatpush1.msra.mxu0 0.0
    %1428 = vmatprep.subr.mxu0 0.0
    %1429 = vmatpush1.msra.mxu0 0.0
    %1430 = vmatprep.subr.mxu0 0.0
    %1431 = vmatpush1.msra.mxu0 0.0
    %1432 = vmatprep.subr.mxu0 0.0
    %1433 = vmatpush1.msra.mxu0 0.0
    %1434 = vmatprep.subr.mxu0 0.0
    %1435 = vmatpush1.msra.mxu0 0.0
    %1436 = vmatprep.subr.mxu0 0.0
    %1437 = vmatpush1.msra.mxu0 0.0
    %1438 = vmatprep.subr.mxu0 0.0
    %1439 = vmatpush1.msra.mxu0 0.0
    %1440 = vmatprep.subr.mxu0 0.0
    %1441 = vmatpush1.msra.mxu0 0.0
    %1442 = vmatprep.subr.mxu0 0.0
    %1443 = vmatpush1.msra.mxu0 0.0
    %1444 = vmatprep.subr.mxu0 0.0
    %1445 = vmatpush1.msra.mxu0 0.0
    %1446 = vmatprep.subr.mxu0 0.0
    %1447 = vmatpush1.msra.mxu0 0.0
    %1448 = vmatprep.subr.mxu0 0.0
    %1449 = vmatpush1.msra.mxu0 0.0
    %1450 = vmatprep.mubr.f32.mxu0 0.0
    %v1451 = vand.u32 %v1191, 4294901760
    %1452 = vmatmul.mubr.f32.gmra.mrb[0].mxu0 %v1451
    %v1453 = vpop.f32.mrb[0].mxu0
    %v1454 = vadd.f32 %v1303, %v1453
    %v1455 = vpop.f32.mrb[0].mxu0
    %1456 = vdwg.mxu0
    %1457 = vmatprep.subr.mxu0 0.0
    %v1458 = vand.u32 %v1192, 4294901760
    %v1459 = vsub.f32 %v1192, %v1458
    %1460 = vmatpush1.msra.mxu0 %v1459
    %1461 = vmatprep.subr.mxu0 0.0
    %v1462 = vand.u32 %v1193, 4294901760
    %v1463 = vsub.f32 %v1193, %v1462
    %1464 = vmatpush1.msra.mxu0 %v1463
    %1465 = vmatprep.subr.mxu0 0.0
    %v1466 = vand.u32 %v1194, 4294901760
    %v1467 = vsub.f32 %v1194, %v1466
    %1468 = vmatpush1.msra.mxu0 %v1467
    %1469 = vmatprep.subr.mxu0 0.0
    %v1470 = vand.u32 %v1195, 4294901760
    %v1471 = vsub.f32 %v1195, %v1470
    %1472 = vmatpush1.msra.mxu0 %v1471
    %1473 = vmatprep.subr.mxu0 0.0
    %v1474 = vand.u32 %v1196, 4294901760
    %v1475 = vsub.f32 %v1196, %v1474
    %1476 = vmatpush1.msra.mxu0 %v1475
    %1477 = vmatprep.subr.mxu0 0.0
    %v1478 = vand.u32 %v1197, 4294901760
    %v1479 = vsub.f32 %v1197, %v1478
    %1480 = vmatpush1.msra.mxu0 %v1479
    %1481 = vmatprep.subr.mxu0 0.0
    %v1482 = vand.u32 %v1198, 4294901760
    %v1483 = vsub.f32 %v1198, %v1482
    %1484 = vmatpush1.msra.mxu0 %v1483
    %1485 = vmatprep.subr.mxu0 0.0
    %v1486 = vand.u32 %v1199, 4294901760
    %v1487 = vsub.f32 %v1199, %v1486
    %1488 = vmatpush1.msra.mxu0 %v1487
    %1489 = vmatprep.subr.mxu0 0.0
    %v1490 = vand.u32 %v1200, 4294901760
    %v1491 = vsub.f32 %v1200, %v1490
    %1492 = vmatpush1.msra.mxu0 %v1491
    %1493 = vmatprep.subr.mxu0 0.0
    %v1494 = vand.u32 %v1201, 4294901760
    %v1495 = vsub.f32 %v1201, %v1494
    %1496 = vmatpush1.msra.mxu0 %v1495
    %1497 = vmatprep.subr.mxu0 0.0
    %v1498 = vand.u32 %v1202, 4294901760
    %v1499 = vsub.f32 %v1202, %v1498
    %1500 = vmatpush1.msra.mxu0 %v1499
    %1501 = vmatprep.subr.mxu0 0.0
    %v1502 = vand.u32 %v1203, 4294901760
    %v1503 = vsub.f32 %v1203, %v1502
    %1504 = vmatpush1.msra.mxu0 %v1503
    %1505 = vmatprep.subr.mxu0 0.0
    %v1506 = vand.u32 %v1204, 4294901760
    %v1507 = vsub.f32 %v1204, %v1506
    %1508 = vmatpush1.msra.mxu0 %v1507
    %1509 = vmatprep.subr.mxu0 0.0
    %v1510 = vand.u32 %v1205, 4294901760
    %v1511 = vsub.f32 %v1205, %v1510
    %1512 = vmatpush1.msra.mxu0 %v1511
    %1513 = vmatprep.subr.mxu0 0.0
    %v1514 = vand.u32 %v1206, 4294901760
    %v1515 = vsub.f32 %v1206, %v1514
    %1516 = vmatpush1.msra.mxu0 %v1515
    %1517 = vmatprep.subr.mxu0 0.0
    %v1518 = vand.u32 %v1207, 4294901760
    %v1519 = vsub.f32 %v1207, %v1518
    %1520 = vmatpush1.msra.mxu0 %v1519
    %1521 = vmatprep.subr.mxu0 0.0
    %1522 = vmatpush1.msra.mxu0 0.0
    %1523 = vmatprep.subr.mxu0 0.0
    %1524 = vmatpush1.msra.mxu0 0.0
    %1525 = vmatprep.subr.mxu0 0.0
    %1526 = vmatpush1.msra.mxu0 0.0
    %1527 = vmatprep.subr.mxu0 0.0
    %1528 = vmatpush1.msra.mxu0 0.0
    %1529 = vmatprep.subr.mxu0 0.0
    %1530 = vmatpush1.msra.mxu0 0.0
    %1531 = vmatprep.subr.mxu0 0.0
    %1532 = vmatpush1.msra.mxu0 0.0
    %1533 = vmatprep.subr.mxu0 0.0
    %1534 = vmatpush1.msra.mxu0 0.0
    %1535 = vmatprep.subr.mxu0 0.0
    %1536 = vmatpush1.msra.mxu0 0.0
    %1537 = vmatprep.subr.mxu0 0.0
    %1538 = vmatpush1.msra.mxu0 0.0
    %1539 = vmatprep.subr.mxu0 0.0
    %1540 = vmatpush1.msra.mxu0 0.0
    %1541 = vmatprep.subr.mxu0 0.0
    %1542 = vmatpush1.msra.mxu0 0.0
    %1543 = vmatprep.subr.mxu0 0.0
    %1544 = vmatpush1.msra.mxu0 0.0
    %1545 = vmatprep.subr.mxu0 0.0
    %1546 = vmatpush1.msra.mxu0 0.0
    %1547 = vmatprep.subr.mxu0 0.0
    %1548 = vmatpush1.msra.mxu0 0.0
    %1549 = vmatprep.subr.mxu0 0.0
    %1550 = vmatpush1.msra.mxu0 0.0
    %1551 = vmatprep.subr.mxu0 0.0
    %1552 = vmatpush1.msra.mxu0 0.0
    %1553 = vmatprep.mubr.f32.mxu0 0.0
    %v1554 = vand.u32 %v1191, 4294901760
    %v1555 = vsub.f32 %v1191, %v1554
    %1556 = vmatmul.mubr.f32.gmra.mrb[0].mxu0 %v1555
    %v1557 = vpop.f32.mrb[0].mxu0
    %v1558 = vadd.f32 %v1454, %v1557
    %v1559 = vpop.f32.mrb[0].mxu0
    %1560 = vdwg.mxu0
    %1561 = vmatprep.subr.mxu0 0.0
    %v1562 = vand.u32 %v1192, 4294901760
    %1563 = vmatpush1.msra.mxu0 %v1562
    %1564 = vmatprep.subr.mxu0 0.0
    %v1565 = vand.u32 %v1193, 4294901760
    %1566 = vmatpush1.msra.mxu0 %v1565
    %1567 = vmatprep.subr.mxu0 0.0
    %v1568 = vand.u32 %v1194, 4294901760
    %1569 = vmatpush1.msra.mxu0 %v1568
    %1570 = vmatprep.subr.mxu0 0.0
    %v1571 = vand.u32 %v1195, 4294901760
    %1572 = vmatpush1.msra.mxu0 %v1571
    %1573 = vmatprep.subr.mxu0 0.0
    %v1574 = vand.u32 %v1196, 4294901760
    %1575 = vmatpush1.msra.mxu0 %v1574
    %1576 = vmatprep.subr.mxu0 0.0
    %v1577 = vand.u32 %v1197, 4294901760
    %1578 = vmatpush1.msra.mxu0 %v1577
    %1579 = vmatprep.subr.mxu0 0.0
    %v1580 = vand.u32 %v1198, 4294901760
    %1581 = vmatpush1.msra.mxu0 %v1580
    %1582 = vmatprep.subr.mxu0 0.0
    %v1583 = vand.u32 %v1199, 4294901760
    %1584 = vmatpush1.msra.mxu0 %v1583
    %1585 = vmatprep.subr.mxu0 0.0
    %v1586 = vand.u32 %v1200, 4294901760
    %1587 = vmatpush1.msra.mxu0 %v1586
    %1588 = vmatprep.subr.mxu0 0.0
    %v1589 = vand.u32 %v1201, 4294901760
    %1590 = vmatpush1.msra.mxu0 %v1589
    %1591 = vmatprep.subr.mxu0 0.0
    %v1592 = vand.u32 %v1202, 4294901760
    %1593 = vmatpush1.msra.mxu0 %v1592
    %1594 = vmatprep.subr.mxu0 0.0
    %v1595 = vand.u32 %v1203, 4294901760
    %1596 = vmatpush1.msra.mxu0 %v1595
    %1597 = vmatprep.subr.mxu0 0.0
    %v1598 = vand.u32 %v1204, 4294901760
    %1599 = vmatpush1.msra.mxu0 %v1598
    %1600 = vmatprep.subr.mxu0 0.0
    %v1601 = vand.u32 %v1205, 4294901760
    %1602 = vmatpush1.msra.mxu0 %v1601
    %1603 = vmatprep.subr.mxu0 0.0
    %v1604 = vand.u32 %v1206, 4294901760
    %1605 = vmatpush1.msra.mxu0 %v1604
    %1606 = vmatprep.subr.mxu0 0.0
    %v1607 = vand.u32 %v1207, 4294901760
    %1608 = vmatpush1.msra.mxu0 %v1607
    %1609 = vmatprep.subr.mxu0 0.0
    %1610 = vmatpush1.msra.mxu0 0.0
    %1611 = vmatprep.subr.mxu0 0.0
    %1612 = vmatpush1.msra.mxu0 0.0
    %1613 = vmatprep.subr.mxu0 0.0
    %1614 = vmatpush1.msra.mxu0 0.0
    %1615 = vmatprep.subr.mxu0 0.0
    %1616 = vmatpush1.msra.mxu0 0.0
    %1617 = vmatprep.subr.mxu0 0.0
    %1618 = vmatpush1.msra.mxu0 0.0
    %1619 = vmatprep.subr.mxu0 0.0
    %1620 = vmatpush1.msra.mxu0 0.0
    %1621 = vmatprep.subr.mxu0 0.0
    %1622 = vmatpush1.msra.mxu0 0.0
    %1623 = vmatprep.subr.mxu0 0.0
    %1624 = vmatpush1.msra.mxu0 0.0
    %1625 = vmatprep.subr.mxu0 0.0
    %1626 = vmatpush1.msra.mxu0 0.0
    %1627 = vmatprep.subr.mxu0 0.0
    %1628 = vmatpush1.msra.mxu0 0.0
    %1629 = vmatprep.subr.mxu0 0.0
    %1630 = vmatpush1.msra.mxu0 0.0
    %1631 = vmatprep.subr.mxu0 0.0
    %1632 = vmatpush1.msra.mxu0 0.0
    %1633 = vmatprep.subr.mxu0 0.0
    %1634 = vmatpush1.msra.mxu0 0.0
    %1635 = vmatprep.subr.mxu0 0.0
    %1636 = vmatpush1.msra.mxu0 0.0
    %1637 = vmatprep.subr.mxu0 0.0
    %1638 = vmatpush1.msra.mxu0 0.0
    %1639 = vmatprep.subr.mxu0 0.0
    %1640 = vmatpush1.msra.mxu0 0.0
    %1641 = vmatprep.mubr.f32.mxu0 0.0
    %v1642 = vand.u32 %v1191, 4294901760
    %v1643 = vsub.f32 %v1191, %v1642
    %v1644 = vand.u32 %v1643, 4294901760
    %1645 = vmatmul.mubr.f32.gmra.mrb[0].mxu0 %v1644
    %v1646 = vpop.f32.mrb[0].mxu0
    %v1647 = vadd.f32 %v1558, %v1646
    %v1648 = vpop.f32.mrb[0].mxu0
    %1649 = vdwg.mxu0
    %1650 = vmatprep.subr.mxu0 0.0
    %v1651 = vand.u32 %v1192, 4294901760
    %v1652 = vsub.f32 %v1192, %v1651
    %v1653 = vand.u32 %v1652, 4294901760
    %1654 = vmatpush1.msra.mxu0 %v1653
    %1655 = vmatprep.subr.mxu0 0.0
    %v1656 = vand.u32 %v1193, 4294901760
    %v1657 = vsub.f32 %v1193, %v1656
    %v1658 = vand.u32 %v1657, 4294901760
    %1659 = vmatpush1.msra.mxu0 %v1658
    %1660 = vmatprep.subr.mxu0 0.0
    %v1661 = vand.u32 %v1194, 4294901760
    %v1662 = vsub.f32 %v1194, %v1661
    %v1663 = vand.u32 %v1662, 4294901760
    %1664 = vmatpush1.msra.mxu0 %v1663
    %1665 = vmatprep.subr.mxu0 0.0
    %v1666 = vand.u32 %v1195, 4294901760
    %v1667 = vsub.f32 %v1195, %v1666
    %v1668 = vand.u32 %v1667, 4294901760
    %1669 = vmatpush1.msra.mxu0 %v1668
    %1670 = vmatprep.subr.mxu0 0.0
    %v1671 = vand.u32 %v1196, 4294901760
    %v1672 = vsub.f32 %v1196, %v1671
    %v1673 = vand.u32 %v1672, 4294901760
    %1674 = vmatpush1.msra.mxu0 %v1673
    %1675 = vmatprep.subr.mxu0 0.0
    %v1676 = vand.u32 %v1197, 4294901760
    %v1677 = vsub.f32 %v1197, %v1676
    %v1678 = vand.u32 %v1677, 4294901760
    %1679 = vmatpush1.msra.mxu0 %v1678
    %1680 = vmatprep.subr.mxu0 0.0
    %v1681 = vand.u32 %v1198, 4294901760
    %v1682 = vsub.f32 %v1198, %v1681
    %v1683 = vand.u32 %v1682, 4294901760
    %1684 = vmatpush1.msra.mxu0 %v1683
    %1685 = vmatprep.subr.mxu0 0.0
    %v1686 = vand.u32 %v1199, 4294901760
    %v1687 = vsub.f32 %v1199, %v1686
    %v1688 = vand.u32 %v1687, 4294901760
    %1689 = vmatpush1.msra.mxu0 %v1688
    %1690 = vmatprep.subr.mxu0 0.0
    %v1691 = vand.u32 %v1200, 4294901760
    %v1692 = vsub.f32 %v1200, %v1691
    %v1693 = vand.u32 %v1692, 4294901760
    %1694 = vmatpush1.msra.mxu0 %v1693
    %1695 = vmatprep.subr.mxu0 0.0
    %v1696 = vand.u32 %v1201, 4294901760
    %v1697 = vsub.f32 %v1201, %v1696
    %v1698 = vand.u32 %v1697, 4294901760
    %1699 = vmatpush1.msra.mxu0 %v1698
    %1700 = vmatprep.subr.mxu0 0.0
    %v1701 = vand.u32 %v1202, 4294901760
    %v1702 = vsub.f32 %v1202, %v1701
    %v1703 = vand.u32 %v1702, 4294901760
    %1704 = vmatpush1.msra.mxu0 %v1703
    %1705 = vmatprep.subr.mxu0 0.0
    %v1706 = vand.u32 %v1203, 4294901760
    %v1707 = vsub.f32 %v1203, %v1706
    %v1708 = vand.u32 %v1707, 4294901760
    %1709 = vmatpush1.msra.mxu0 %v1708
    %1710 = vmatprep.subr.mxu0 0.0
    %v1711 = vand.u32 %v1204, 4294901760
    %v1712 = vsub.f32 %v1204, %v1711
    %v1713 = vand.u32 %v1712, 4294901760
    %1714 = vmatpush1.msra.mxu0 %v1713
    %1715 = vmatprep.subr.mxu0 0.0
    %v1716 = vand.u32 %v1205, 4294901760
    %v1717 = vsub.f32 %v1205, %v1716
    %v1718 = vand.u32 %v1717, 4294901760
    %1719 = vmatpush1.msra.mxu0 %v1718
    %1720 = vmatprep.subr.mxu0 0.0
    %v1721 = vand.u32 %v1206, 4294901760
    %v1722 = vsub.f32 %v1206, %v1721
    %v1723 = vand.u32 %v1722, 4294901760
    %1724 = vmatpush1.msra.mxu0 %v1723
    %1725 = vmatprep.subr.mxu0 0.0
    %v1726 = vand.u32 %v1207, 4294901760
    %v1727 = vsub.f32 %v1207, %v1726
    %v1728 = vand.u32 %v1727, 4294901760
    %1729 = vmatpush1.msra.mxu0 %v1728
    %1730 = vmatprep.subr.mxu0 0.0
    %1731 = vmatpush1.msra.mxu0 0.0
    %1732 = vmatprep.subr.mxu0 0.0
    %1733 = vmatpush1.msra.mxu0 0.0
    %1734 = vmatprep.subr.mxu0 0.0
    %1735 = vmatpush1.msra.mxu0 0.0
    %1736 = vmatprep.subr.mxu0 0.0
    %1737 = vmatpush1.msra.mxu0 0.0
    %1738 = vmatprep.subr.mxu0 0.0
    %1739 = vmatpush1.msra.mxu0 0.0
    %1740 = vmatprep.subr.mxu0 0.0
    %1741 = vmatpush1.msra.mxu0 0.0
    %1742 = vmatprep.subr.mxu0 0.0
    %1743 = vmatpush1.msra.mxu0 0.0
    %1744 = vmatprep.subr.mxu0 0.0
    %1745 = vmatpush1.msra.mxu0 0.0
    %1746 = vmatprep.subr.mxu0 0.0
    %1747 = vmatpush1.msra.mxu0 0.0
    %1748 = vmatprep.subr.mxu0 0.0
    %1749 = vmatpush1.msra.mxu0 0.0
    %1750 = vmatprep.subr.mxu0 0.0
    %1751 = vmatpush1.msra.mxu0 0.0
    %1752 = vmatprep.subr.mxu0 0.0
    %1753 = vmatpush1.msra.mxu0 0.0
    %1754 = vmatprep.subr.mxu0 0.0
    %1755 = vmatpush1.msra.mxu0 0.0
    %1756 = vmatprep.subr.mxu0 0.0
    %1757 = vmatpush1.msra.mxu0 0.0
    %1758 = vmatprep.subr.mxu0 0.0
    %1759 = vmatpush1.msra.mxu0 0.0
    %1760 = vmatprep.subr.mxu0 0.0
    %1761 = vmatpush1.msra.mxu0 0.0
    %1762 = vmatprep.mubr.f32.mxu0 0.0
    %v1763 = vand.u32 %v1191, 4294901760
    %1764 = vmatmul.mubr.f32.gmra.mrb[0].mxu0 %v1763
    %v1765 = vpop.f32.mrb[0].mxu0
    %v1766 = vadd.f32 %v1647, %v1765
    %v1767 = vpop.f32.mrb[0].mxu0
    %1768 = vdwg.mxu0
    %1769 = vmatprep.subr.mxu0 0.0
    %v1770 = vand.u32 %v1192, 4294901760
    %1771 = vmatpush1.msra.mxu0 %v1770
    %1772 = vmatprep.subr.mxu0 0.0
    %v1773 = vand.u32 %v1193, 4294901760
    %1774 = vmatpush1.msra.mxu0 %v1773
    %1775 = vmatprep.subr.mxu0 0.0
    %v1776 = vand.u32 %v1194, 4294901760
    %1777 = vmatpush1.msra.mxu0 %v1776
    %1778 = vmatprep.subr.mxu0 0.0
    %v1779 = vand.u32 %v1195, 4294901760
    %1780 = vmatpush1.msra.mxu0 %v1779
    %1781 = vmatprep.subr.mxu0 0.0
    %v1782 = vand.u32 %v1196, 4294901760
    %1783 = vmatpush1.msra.mxu0 %v1782
    %1784 = vmatprep.subr.mxu0 0.0
    %v1785 = vand.u32 %v1197, 4294901760
    %1786 = vmatpush1.msra.mxu0 %v1785
    %1787 = vmatprep.subr.mxu0 0.0
    %v1788 = vand.u32 %v1198, 4294901760
    %1789 = vmatpush1.msra.mxu0 %v1788
    %1790 = vmatprep.subr.mxu0 0.0
    %v1791 = vand.u32 %v1199, 4294901760
    %1792 = vmatpush1.msra.mxu0 %v1791
    %1793 = vmatprep.subr.mxu0 0.0
    %v1794 = vand.u32 %v1200, 4294901760
    %1795 = vmatpush1.msra.mxu0 %v1794
    %1796 = vmatprep.subr.mxu0 0.0
    %v1797 = vand.u32 %v1201, 4294901760
    %1798 = vmatpush1.msra.mxu0 %v1797
    %1799 = vmatprep.subr.mxu0 0.0
    %v1800 = vand.u32 %v1202, 4294901760
    %1801 = vmatpush1.msra.mxu0 %v1800
    %1802 = vmatprep.subr.mxu0 0.0
    %v1803 = vand.u32 %v1203, 4294901760
    %1804 = vmatpush1.msra.mxu0 %v1803
    %1805 = vmatprep.subr.mxu0 0.0
    %v1806 = vand.u32 %v1204, 4294901760
    %1807 = vmatpush1.msra.mxu0 %v1806
    %1808 = vmatprep.subr.mxu0 0.0
    %v1809 = vand.u32 %v1205, 4294901760
    %1810 = vmatpush1.msra.mxu0 %v1809
    %1811 = vmatprep.subr.mxu0 0.0
    %v1812 = vand.u32 %v1206, 4294901760
    %1813 = vmatpush1.msra.mxu0 %v1812
    %1814 = vmatprep.subr.mxu0 0.0
    %v1815 = vand.u32 %v1207, 4294901760
    %1816 = vmatpush1.msra.mxu0 %v1815
    %1817 = vmatprep.subr.mxu0 0.0
    %1818 = vmatpush1.msra.mxu0 0.0
    %1819 = vmatprep.subr.mxu0 0.0
    %1820 = vmatpush1.msra.mxu0 0.0
    %1821 = vmatprep.subr.mxu0 0.0
    %1822 = vmatpush1.msra.mxu0 0.0
    %1823 = vmatprep.subr.mxu0 0.0
    %1824 = vmatpush1.msra.mxu0 0.0
    %1825 = vmatprep.subr.mxu0 0.0
    %1826 = vmatpush1.msra.mxu0 0.0
    %1827 = vmatprep.subr.mxu0 0.0
    %1828 = vmatpush1.msra.mxu0 0.0
    %1829 = vmatprep.subr.mxu0 0.0
    %1830 = vmatpush1.msra.mxu0 0.0
    %1831 = vmatprep.subr.mxu0 0.0
    %1832 = vmatpush1.msra.mxu0 0.0
    %1833 = vmatprep.subr.mxu0 0.0
    %1834 = vmatpush1.msra.mxu0 0.0
    %1835 = vmatprep.subr.mxu0 0.0
    %1836 = vmatpush1.msra.mxu0 0.0
    %1837 = vmatprep.subr.mxu0 0.0
    %1838 = vmatpush1.msra.mxu0 0.0
    %1839 = vmatprep.subr.mxu0 0.0
    %1840 = vmatpush1.msra.mxu0 0.0
    %1841 = vmatprep.subr.mxu0 0.0
    %1842 = vmatpush1.msra.mxu0 0.0
    %1843 = vmatprep.subr.mxu0 0.0
    %1844 = vmatpush1.msra.mxu0 0.0
    %1845 = vmatprep.subr.mxu0 0.0
    %1846 = vmatpush1.msra.mxu0 0.0
    %1847 = vmatprep.subr.mxu0 0.0
    %1848 = vmatpush1.msra.mxu0 0.0
    %1849 = vmatprep.mubr.f32.mxu0 0.0
    %v1850 = vand.u32 %v1191, 4294901760
    %1851 = vmatmul.mubr.f32.gmra.mrb[0].mxu0 %v1850
    %v1852 = vpop.f32.mrb[0].mxu0
    %v1853 = vadd.f32 %v1766, %v1852
    %v1854 = vpop.f32.mrb[0].mxu0
    %1855 = vdwg.mxu0
    %v1856 = vtanh.pop %v1853
    %v1857 = vld [vmem:[#allocation5] sm:$0xff]
    %v1858 = vld [vmem:[#allocation5 + $0x8] sm:$0xff]
    %v1859 = vld [vmem:[#allocation5 + $0x10] sm:$0xff]
    %v1860 = vld [vmem:[#allocation5 + $0x18] sm:$0xff]
    %v1861 = vld [vmem:[#allocation5 + $0x20] sm:$0xff]
    %v1862 = vld [vmem:[#allocation5 + $0x28] sm:$0xff]
    %v1863 = vld [vmem:[#allocation5 + $0x30] sm:$0xff]
    %v1864 = vld [vmem:[#allocation5 + $0x38] sm:$0xff]
    %v1865 = vld [vmem:[#allocation5 + $0x40] sm:$0xff]
    %v1866 = vld [vmem:[#allocation5 + $0x48] sm:$0xff]
    %v1867 = vld [vmem:[#allocation5 + $0x50] sm:$0xff]
    %v1868 = vld [vmem:[#allocation5 + $0x58] sm:$0xff]
    %v1869 = vld [vmem:[#allocation5 + $0x60] sm:$0xff]
    %v1870 = vld [vmem:[#allocation5 + $0x68] sm:$0xff]
    %v1871 = vld [vmem:[#allocation5 + $0x70] sm:$0xff]
    %v1872 = vld [vmem:[#allocation5 + $0x78] sm:$0xff]
    %v1873 = vld [vmem:[%s8] sm:$0x1]
    %v1875 = vlaneseq
    %v1876 = vshrl.u32 %v1875, 7
    %v1877 = vsub.s32 0, %v1876
    %v1878 = vrot.slane %v1873, %v1877
    %1880 = vmatprep.subr.mxu0 0.0
    %v1881 = vand.u32 %v1857, 4294901760
    %1882 = vmatpush1.msra.mxu0 %v1881
    %1883 = vmatprep.subr.mxu0 0.0
    %v1884 = vand.u32 %v1858, 4294901760
    %1885 = vmatpush1.msra.mxu0 %v1884
    %1886 = vmatprep.subr.mxu0 0.0
    %v1887 = vand.u32 %v1859, 4294901760
    %1888 = vmatpush1.msra.mxu0 %v1887
    %1889 = vmatprep.subr.mxu0 0.0
    %v1890 = vand.u32 %v1860, 4294901760
    %1891 = vmatpush1.msra.mxu0 %v1890
    %1892 = vmatprep.subr.mxu0 0.0
    %v1893 = vand.u32 %v1861, 4294901760
    %1894 = vmatpush1.msra.mxu0 %v1893
    %1895 = vmatprep.subr.mxu0 0.0
    %v1896 = vand.u32 %v1862, 4294901760
    %1897 = vmatpush1.msra.mxu0 %v1896
    %1898 = vmatprep.subr.mxu0 0.0
    %v1899 = vand.u32 %v1863, 4294901760
    %1900 = vmatpush1.msra.mxu0 %v1899
    %1901 = vmatprep.subr.mxu0 0.0
    %v1902 = vand.u32 %v1864, 4294901760
    %1903 = vmatpush1.msra.mxu0 %v1902
    %1904 = vmatprep.subr.mxu0 0.0
    %v1905 = vand.u32 %v1865, 4294901760
    %1906 = vmatpush1.msra.mxu0 %v1905
    %1907 = vmatprep.subr.mxu0 0.0
    %v1908 = vand.u32 %v1866, 4294901760
    %1909 = vmatpush1.msra.mxu0 %v1908
    %1910 = vmatprep.subr.mxu0 0.0
    %v1911 = vand.u32 %v1867, 4294901760
    %1912 = vmatpush1.msra.mxu0 %v1911
    %1913 = vmatprep.subr.mxu0 0.0
    %v1914 = vand.u32 %v1868, 4294901760
    %1915 = vmatpush1.msra.mxu0 %v1914
    %1916 = vmatprep.subr.mxu0 0.0
    %v1917 = vand.u32 %v1869, 4294901760
    %1918 = vmatpush1.msra.mxu0 %v1917
    %1919 = vmatprep.subr.mxu0 0.0
    %v1920 = vand.u32 %v1870, 4294901760
    %1921 = vmatpush1.msra.mxu0 %v1920
    %1922 = vmatprep.subr.mxu0 0.0
    %v1923 = vand.u32 %v1871, 4294901760
    %1924 = vmatpush1.msra.mxu0 %v1923
    %1925 = vmatprep.subr.mxu0 0.0
    %v1926 = vand.u32 %v1872, 4294901760
    %1927 = vmatpush1.msra.mxu0 %v1926
    %1928 = vmatprep.subr.mxu0 0.0
    %1929 = vmatpush1.msra.mxu0 0.0
    %1930 = vmatprep.subr.mxu0 0.0
    %1931 = vmatpush1.msra.mxu0 0.0
    %1932 = vmatprep.subr.mxu0 0.0
    %1933 = vmatpush1.msra.mxu0 0.0
    %1934 = vmatprep.subr.mxu0 0.0
    %1935 = vmatpush1.msra.mxu0 0.0
    %1936 = vmatprep.subr.mxu0 0.0
    %1937 = vmatpush1.msra.mxu0 0.0
    %1938 = vmatprep.subr.mxu0 0.0
    %1939 = vmatpush1.msra.mxu0 0.0
    %1940 = vmatprep.subr.mxu0 0.0
    %1941 = vmatpush1.msra.mxu0 0.0
    %1942 = vmatprep.subr.mxu0 0.0
    %1943 = vmatpush1.msra.mxu0 0.0
    %1944 = vmatprep.subr.mxu0 0.0
    %1945 = vmatpush1.msra.mxu0 0.0
    %1946 = vmatprep.subr.mxu0 0.0
    %1947 = vmatpush1.msra.mxu0 0.0
    %1948 = vmatprep.subr.mxu0 0.0
    %1949 = vmatpush1.msra.mxu0 0.0
    %1950 = vmatprep.subr.mxu0 0.0
    %1951 = vmatpush1.msra.mxu0 0.0
    %1952 = vmatprep.subr.mxu0 0.0
    %1953 = vmatpush1.msra.mxu0 0.0
    %1954 = vmatprep.subr.mxu0 0.0
    %1955 = vmatpush1.msra.mxu0 0.0
    %1956 = vmatprep.subr.mxu0 0.0
    %1957 = vmatpush1.msra.mxu0 0.0
    %1958 = vmatprep.subr.mxu0 0.0
    %1959 = vmatpush1.msra.mxu0 0.0
    %1960 = vmatprep.mubr.f32.mxu0 0.0
    %v1961 = vand.u32 %v1856, 4294901760
    %v1962 = vsub.f32 %v1856, %v1961
    %v1963 = vand.u32 %v1962, 4294901760
    %v1964 = vsub.f32 %v1962, %v1963
    %v1965 = vand.u32 %v1964, 4294901760
    %1966 = vmatmul.mubr.f32.gmra.mrb[0].mxu0 %v1965
    %v1967 = vpop.f32.mrb[0].mxu0
    %v1968 = vadd.f32 %v1878, %v1967
    %v1969 = vpop.f32.mrb[0].mxu0
    %1970 = vdwg.mxu0
    %1971 = vmatprep.subr.mxu0 0.0
    %v1972 = vand.u32 %v1857, 4294901760
    %v1973 = vsub.f32 %v1857, %v1972
    %v1974 = vand.u32 %v1973, 4294901760
    %v1975 = vsub.f32 %v1973, %v1974
    %v1976 = vand.u32 %v1975, 4294901760
    %1977 = vmatpush1.msra.mxu0 %v1976
    %1978 = vmatprep.subr.mxu0 0.0
    %v1979 = vand.u32 %v1858, 4294901760
    %v1980 = vsub.f32 %v1858, %v1979
    %v1981 = vand.u32 %v1980, 4294901760
    %v1982 = vsub.f32 %v1980, %v1981
    %v1983 = vand.u32 %v1982, 4294901760
    %1984 = vmatpush1.msra.mxu0 %v1983
    %1985 = vmatprep.subr.mxu0 0.0
    %v1986 = vand.u32 %v1859, 4294901760
    %v1987 = vsub.f32 %v1859, %v1986
    %v1988 = vand.u32 %v1987, 4294901760
    %v1989 = vsub.f32 %v1987, %v1988
    %v1990 = vand.u32 %v1989, 4294901760
    %1991 = vmatpush1.msra.mxu0 %v1990
    %1992 = vmatprep.subr.mxu0 0.0
    %v1993 = vand.u32 %v1860, 4294901760
    %v1994 = vsub.f32 %v1860, %v1993
    %v1995 = vand.u32 %v1994, 4294901760
    %v1996 = vsub.f32 %v1994, %v1995
    %v1997 = vand.u32 %v1996, 4294901760
    %1998 = vmatpush1.msra.mxu0 %v1997
    %1999 = vmatprep.subr.mxu0 0.0
    %v2000 = vand.u32 %v1861, 4294901760
    %v2001 = vsub.f32 %v1861, %v2000
    %v2002 = vand.u32 %v2001, 4294901760
    %v2003 = vsub.f32 %v2001, %v2002
    %v2004 = vand.u32 %v2003, 4294901760
    %2005 = vmatpush1.msra.mxu0 %v2004
    %2006 = vmatprep.subr.mxu0 0.0
    %v2007 = vand.u32 %v1862, 4294901760
    %v2008 = vsub.f32 %v1862, %v2007
    %v2009 = vand.u32 %v2008, 4294901760
    %v2010 = vsub.f32 %v2008, %v2009
    %v2011 = vand.u32 %v2010, 4294901760
    %2012 = vmatpush1.msra.mxu0 %v2011
    %2013 = vmatprep.subr.mxu0 0.0
    %v2014 = vand.u32 %v1863, 4294901760
    %v2015 = vsub.f32 %v1863, %v2014
    %v2016 = vand.u32 %v2015, 4294901760
    %v2017 = vsub.f32 %v2015, %v2016
    %v2018 = vand.u32 %v2017, 4294901760
    %2019 = vmatpush1.msra.mxu0 %v2018
    %2020 = vmatprep.subr.mxu0 0.0
    %v2021 = vand.u32 %v1864, 4294901760
    %v2022 = vsub.f32 %v1864, %v2021
    %v2023 = vand.u32 %v2022, 4294901760
    %v2024 = vsub.f32 %v2022, %v2023
    %v2025 = vand.u32 %v2024, 4294901760
    %2026 = vmatpush1.msra.mxu0 %v2025
    %2027 = vmatprep.subr.mxu0 0.0
    %v2028 = vand.u32 %v1865, 4294901760
    %v2029 = vsub.f32 %v1865, %v2028
    %v2030 = vand.u32 %v2029, 4294901760
    %v2031 = vsub.f32 %v2029, %v2030
    %v2032 = vand.u32 %v2031, 4294901760
    %2033 = vmatpush1.msra.mxu0 %v2032
    %2034 = vmatprep.subr.mxu0 0.0
    %v2035 = vand.u32 %v1866, 4294901760
    %v2036 = vsub.f32 %v1866, %v2035
    %v2037 = vand.u32 %v2036, 4294901760
    %v2038 = vsub.f32 %v2036, %v2037
    %v2039 = vand.u32 %v2038, 4294901760
    %2040 = vmatpush1.msra.mxu0 %v2039
    %2041 = vmatprep.subr.mxu0 0.0
    %v2042 = vand.u32 %v1867, 4294901760
    %v2043 = vsub.f32 %v1867, %v2042
    %v2044 = vand.u32 %v2043, 4294901760
    %v2045 = vsub.f32 %v2043, %v2044
    %v2046 = vand.u32 %v2045, 4294901760
    %2047 = vmatpush1.msra.mxu0 %v2046
    %2048 = vmatprep.subr.mxu0 0.0
    %v2049 = vand.u32 %v1868, 4294901760
    %v2050 = vsub.f32 %v1868, %v2049
    %v2051 = vand.u32 %v2050, 4294901760
    %v2052 = vsub.f32 %v2050, %v2051
    %v2053 = vand.u32 %v2052, 4294901760
    %2054 = vmatpush1.msra.mxu0 %v2053
    %2055 = vmatprep.subr.mxu0 0.0
    %v2056 = vand.u32 %v1869, 4294901760
    %v2057 = vsub.f32 %v1869, %v2056
    %v2058 = vand.u32 %v2057, 4294901760
    %v2059 = vsub.f32 %v2057, %v2058
    %v2060 = vand.u32 %v2059, 4294901760
    %2061 = vmatpush1.msra.mxu0 %v2060
    %2062 = vmatprep.subr.mxu0 0.0
    %v2063 = vand.u32 %v1870, 4294901760
    %v2064 = vsub.f32 %v1870, %v2063
    %v2065 = vand.u32 %v2064, 4294901760
    %v2066 = vsub.f32 %v2064, %v2065
    %v2067 = vand.u32 %v2066, 4294901760
    %2068 = vmatpush1.msra.mxu0 %v2067
    %2069 = vmatprep.subr.mxu0 0.0
    %v2070 = vand.u32 %v1871, 4294901760
    %v2071 = vsub.f32 %v1871, %v2070
    %v2072 = vand.u32 %v2071, 4294901760
    %v2073 = vsub.f32 %v2071, %v2072
    %v2074 = vand.u32 %v2073, 4294901760
    %2075 = vmatpush1.msra.mxu0 %v2074
    %2076 = vmatprep.subr.mxu0 0.0
    %v2077 = vand.u32 %v1872, 4294901760
    %v2078 = vsub.f32 %v1872, %v2077
    %v2079 = vand.u32 %v2078, 4294901760
    %v2080 = vsub.f32 %v2078, %v2079
    %v2081 = vand.u32 %v2080, 4294901760
    %2082 = vmatpush1.msra.mxu0 %v2081
    %2083 = vmatprep.subr.mxu0 0.0
    %2084 = vmatpush1.msra.mxu0 0.0
    %2085 = vmatprep.subr.mxu0 0.0
    %2086 = vmatpush1.msra.mxu0 0.0
    %2087 = vmatprep.subr.mxu0 0.0
    %2088 = vmatpush1.msra.mxu0 0.0
    %2089 = vmatprep.subr.mxu0 0.0
    %2090 = vmatpush1.msra.mxu0 0.0
    %2091 = vmatprep.subr.mxu0 0.0
    %2092 = vmatpush1.msra.mxu0 0.0
    %2093 = vmatprep.subr.mxu0 0.0
    %2094 = vmatpush1.msra.mxu0 0.0
    %2095 = vmatprep.subr.mxu0 0.0
    %2096 = vmatpush1.msra.mxu0 0.0
    %2097 = vmatprep.subr.mxu0 0.0
    %2098 = vmatpush1.msra.mxu0 0.0
    %2099 = vmatprep.subr.mxu0 0.0
    %2100 = vmatpush1.msra.mxu0 0.0
    %2101 = vmatprep.subr.mxu0 0.0
    %2102 = vmatpush1.msra.mxu0 0.0
    %2103 = vmatprep.subr.mxu0 0.0
    %2104 = vmatpush1.msra.mxu0 0.0
    %2105 = vmatprep.subr.mxu0 0.0
    %2106 = vmatpush1.msra.mxu0 0.0
    %2107 = vmatprep.subr.mxu0 0.0
    %2108 = vmatpush1.msra.mxu0 0.0
    %2109 = vmatprep.subr.mxu0 0.0
    %2110 = vmatpush1.msra.mxu0 0.0
    %2111 = vmatprep.subr.mxu0 0.0
    %2112 = vmatpush1.msra.mxu0 0.0
    %2113 = vmatprep.subr.mxu0 0.0
    %2114 = vmatpush1.msra.mxu0 0.0
    %2115 = vmatprep.mubr.f32.mxu0 0.0
    %v2116 = vand.u32 %v1856, 4294901760
    %2117 = vmatmul.mubr.f32.gmra.mrb[0].mxu0 %v2116
    %v2118 = vpop.f32.mrb[0].mxu0
    %v2119 = vadd.f32 %v1968, %v2118
    %v2120 = vpop.f32.mrb[0].mxu0
    %2121 = vdwg.mxu0
    %2122 = vmatprep.subr.mxu0 0.0
    %v2123 = vand.u32 %v1857, 4294901760
    %v2124 = vsub.f32 %v1857, %v2123
    %2125 = vmatpush1.msra.mxu0 %v2124
    %2126 = vmatprep.subr.mxu0 0.0
    %v2127 = vand.u32 %v1858, 4294901760
    %v2128 = vsub.f32 %v1858, %v2127
    %2129 = vmatpush1.msra.mxu0 %v2128
    %2130 = vmatprep.subr.mxu0 0.0
    %v2131 = vand.u32 %v1859, 4294901760
    %v2132 = vsub.f32 %v1859, %v2131
    %2133 = vmatpush1.msra.mxu0 %v2132
    %2134 = vmatprep.subr.mxu0 0.0
    %v2135 = vand.u32 %v1860, 4294901760
    %v2136 = vsub.f32 %v1860, %v2135
    %2137 = vmatpush1.msra.mxu0 %v2136
    %2138 = vmatprep.subr.mxu0 0.0
    %v2139 = vand.u32 %v1861, 4294901760
    %v2140 = vsub.f32 %v1861, %v2139
    %2141 = vmatpush1.msra.mxu0 %v2140
    %2142 = vmatprep.subr.mxu0 0.0
    %v2143 = vand.u32 %v1862, 4294901760
    %v2144 = vsub.f32 %v1862, %v2143
    %2145 = vmatpush1.msra.mxu0 %v2144
    %2146 = vmatprep.subr.mxu0 0.0
    %v2147 = vand.u32 %v1863, 4294901760
    %v2148 = vsub.f32 %v1863, %v2147
    %2149 = vmatpush1.msra.mxu0 %v2148
    %2150 = vmatprep.subr.mxu0 0.0
    %v2151 = vand.u32 %v1864, 4294901760
    %v2152 = vsub.f32 %v1864, %v2151
    %2153 = vmatpush1.msra.mxu0 %v2152
    %2154 = vmatprep.subr.mxu0 0.0
    %v2155 = vand.u32 %v1865, 4294901760
    %v2156 = vsub.f32 %v1865, %v2155
    %2157 = vmatpush1.msra.mxu0 %v2156
    %2158 = vmatprep.subr.mxu0 0.0
    %v2159 = vand.u32 %v1866, 4294901760
    %v2160 = vsub.f32 %v1866, %v2159
    %2161 = vmatpush1.msra.mxu0 %v2160
    %2162 = vmatprep.subr.mxu0 0.0
    %v2163 = vand.u32 %v1867, 4294901760
    %v2164 = vsub.f32 %v1867, %v2163
    %2165 = vmatpush1.msra.mxu0 %v2164
    %2166 = vmatprep.subr.mxu0 0.0
    %v2167 = vand.u32 %v1868, 4294901760
    %v2168 = vsub.f32 %v1868, %v2167
    %2169 = vmatpush1.msra.mxu0 %v2168
    %2170 = vmatprep.subr.mxu0 0.0
    %v2171 = vand.u32 %v1869, 4294901760
    %v2172 = vsub.f32 %v1869, %v2171
    %2173 = vmatpush1.msra.mxu0 %v2172
    %2174 = vmatprep.subr.mxu0 0.0
    %v2175 = vand.u32 %v1870, 4294901760
    %v2176 = vsub.f32 %v1870, %v2175
    %2177 = vmatpush1.msra.mxu0 %v2176
    %2178 = vmatprep.subr.mxu0 0.0
    %v2179 = vand.u32 %v1871, 4294901760
    %v2180 = vsub.f32 %v1871, %v2179
    %2181 = vmatpush1.msra.mxu0 %v2180
    %2182 = vmatprep.subr.mxu0 0.0
    %v2183 = vand.u32 %v1872, 4294901760
    %v2184 = vsub.f32 %v1872, %v2183
    %2185 = vmatpush1.msra.mxu0 %v2184
    %2186 = vmatprep.subr.mxu0 0.0
    %2187 = vmatpush1.msra.mxu0 0.0
    %2188 = vmatprep.subr.mxu0 0.0
    %2189 = vmatpush1.msra.mxu0 0.0
    %2190 = vmatprep.subr.mxu0 0.0
    %2191 = vmatpush1.msra.mxu0 0.0
    %2192 = vmatprep.subr.mxu0 0.0
    %2193 = vmatpush1.msra.mxu0 0.0
    %2194 = vmatprep.subr.mxu0 0.0
    %2195 = vmatpush1.msra.mxu0 0.0
    %2196 = vmatprep.subr.mxu0 0.0
    %2197 = vmatpush1.msra.mxu0 0.0
    %2198 = vmatprep.subr.mxu0 0.0
    %2199 = vmatpush1.msra.mxu0 0.0
    %2200 = vmatprep.subr.mxu0 0.0
    %2201 = vmatpush1.msra.mxu0 0.0
    %2202 = vmatprep.subr.mxu0 0.0
    %2203 = vmatpush1.msra.mxu0 0.0
    %2204 = vmatprep.subr.mxu0 0.0
    %2205 = vmatpush1.msra.mxu0 0.0
    %2206 = vmatprep.subr.mxu0 0.0
    %2207 = vmatpush1.msra.mxu0 0.0
    %2208 = vmatprep.subr.mxu0 0.0
    %2209 = vmatpush1.msra.mxu0 0.0
    %2210 = vmatprep.subr.mxu0 0.0
    %2211 = vmatpush1.msra.mxu0 0.0
    %2212 = vmatprep.subr.mxu0 0.0
    %2213 = vmatpush1.msra.mxu0 0.0
    %2214 = vmatprep.subr.mxu0 0.0
    %2215 = vmatpush1.msra.mxu0 0.0
    %2216 = vmatprep.subr.mxu0 0.0
    %2217 = vmatpush1.msra.mxu0 0.0
    %2218 = vmatprep.mubr.f32.mxu0 0.0
    %v2219 = vand.u32 %v1856, 4294901760
    %v2220 = vsub.f32 %v1856, %v2219
    %2221 = vmatmul.mubr.f32.gmra.mrb[0].mxu0 %v2220
    %v2222 = vpop.f32.mrb[0].mxu0
    %v2223 = vadd.f32 %v2119, %v2222
    %v2224 = vpop.f32.mrb[0].mxu0
    %2225 = vdwg.mxu0
    %2226 = vmatprep.subr.mxu0 0.0
    %v2227 = vand.u32 %v1857, 4294901760
    %2228 = vmatpush1.msra.mxu0 %v2227
    %2229 = vmatprep.subr.mxu0 0.0
    %v2230 = vand.u32 %v1858, 4294901760
    %2231 = vmatpush1.msra.mxu0 %v2230
    %2232 = vmatprep.subr.mxu0 0.0
    %v2233 = vand.u32 %v1859, 4294901760
    %2234 = vmatpush1.msra.mxu0 %v2233
    %2235 = vmatprep.subr.mxu0 0.0
    %v2236 = vand.u32 %v1860, 4294901760
    %2237 = vmatpush1.msra.mxu0 %v2236
    %2238 = vmatprep.subr.mxu0 0.0
    %v2239 = vand.u32 %v1861, 4294901760
    %2240 = vmatpush1.msra.mxu0 %v2239
    %2241 = vmatprep.subr.mxu0 0.0
    %v2242 = vand.u32 %v1862, 4294901760
    %2243 = vmatpush1.msra.mxu0 %v2242
    %2244 = vmatprep.subr.mxu0 0.0
    %v2245 = vand.u32 %v1863, 4294901760
    %2246 = vmatpush1.msra.mxu0 %v2245
    %2247 = vmatprep.subr.mxu0 0.0
    %v2248 = vand.u32 %v1864, 4294901760
    %2249 = vmatpush1.msra.mxu0 %v2248
    %2250 = vmatprep.subr.mxu0 0.0
    %v2251 = vand.u32 %v1865, 4294901760
    %2252 = vmatpush1.msra.mxu0 %v2251
    %2253 = vmatprep.subr.mxu0 0.0
    %v2254 = vand.u32 %v1866, 4294901760
    %2255 = vmatpush1.msra.mxu0 %v2254
    %2256 = vmatprep.subr.mxu0 0.0
    %v2257 = vand.u32 %v1867, 4294901760
    %2258 = vmatpush1.msra.mxu0 %v2257
    %2259 = vmatprep.subr.mxu0 0.0
    %v2260 = vand.u32 %v1868, 4294901760
    %2261 = vmatpush1.msra.mxu0 %v2260
    %2262 = vmatprep.subr.mxu0 0.0
    %v2263 = vand.u32 %v1869, 4294901760
    %2264 = vmatpush1.msra.mxu0 %v2263
    %2265 = vmatprep.subr.mxu0 0.0
    %v2266 = vand.u32 %v1870, 4294901760
    %2267 = vmatpush1.msra.mxu0 %v2266
    %2268 = vmatprep.subr.mxu0 0.0
    %v2269 = vand.u32 %v1871, 4294901760
    %2270 = vmatpush1.msra.mxu0 %v2269
    %2271 = vmatprep.subr.mxu0 0.0
    %v2272 = vand.u32 %v1872, 4294901760
    %2273 = vmatpush1.msra.mxu0 %v2272
    %2274 = vmatprep.subr.mxu0 0.0
    %2275 = vmatpush1.msra.mxu0 0.0
    %2276 = vmatprep.subr.mxu0 0.0
    %2277 = vmatpush1.msra.mxu0 0.0
    %2278 = vmatprep.subr.mxu0 0.0
    %2279 = vmatpush1.msra.mxu0 0.0
    %2280 = vmatprep.subr.mxu0 0.0
    %2281 = vmatpush1.msra.mxu0 0.0
    %2282 = vmatprep.subr.mxu0 0.0
    %2283 = vmatpush1.msra.mxu0 0.0
    %2284 = vmatprep.subr.mxu0 0.0
    %2285 = vmatpush1.msra.mxu0 0.0
    %2286 = vmatprep.subr.mxu0 0.0
    %2287 = vmatpush1.msra.mxu0 0.0
    %2288 = vmatprep.subr.mxu0 0.0
    %2289 = vmatpush1.msra.mxu0 0.0
    %2290 = vmatprep.subr.mxu0 0.0
    %2291 = vmatpush1.msra.mxu0 0.0
    %2292 = vmatprep.subr.mxu0 0.0
    %2293 = vmatpush1.msra.mxu0 0.0
    %2294 = vmatprep.subr.mxu0 0.0
    %2295 = vmatpush1.msra.mxu0 0.0
    %2296 = vmatprep.subr.mxu0 0.0
    %2297 = vmatpush1.msra.mxu0 0.0
    %2298 = vmatprep.subr.mxu0 0.0
    %2299 = vmatpush1.msra.mxu0 0.0
    %2300 = vmatprep.subr.mxu0 0.0
    %2301 = vmatpush1.msra.mxu0 0.0
    %2302 = vmatprep.subr.mxu0 0.0
    %2303 = vmatpush1.msra.mxu0 0.0
    %2304 = vmatprep.subr.mxu0 0.0
    %2305 = vmatpush1.msra.mxu0 0.0
    %2306 = vmatprep.mubr.f32.mxu0 0.0
    %v2307 = vand.u32 %v1856, 4294901760
    %v2308 = vsub.f32 %v1856, %v2307
    %v2309 = vand.u32 %v2308, 4294901760
    %2310 = vmatmul.mubr.f32.gmra.mrb[0].mxu0 %v2309
    %v2311 = vpop.f32.mrb[0].mxu0
    %v2312 = vadd.f32 %v2223, %v2311
    %v2313 = vpop.f32.mrb[0].mxu0
    %2314 = vdwg.mxu0
    %2315 = vmatprep.subr.mxu0 0.0
    %v2316 = vand.u32 %v1857, 4294901760
    %v2317 = vsub.f32 %v1857, %v2316
    %v2318 = vand.u32 %v2317, 4294901760
    %2319 = vmatpush1.msra.mxu0 %v2318
    %2320 = vmatprep.subr.mxu0 0.0
    %v2321 = vand.u32 %v1858, 4294901760
    %v2322 = vsub.f32 %v1858, %v2321
    %v2323 = vand.u32 %v2322, 4294901760
    %2324 = vmatpush1.msra.mxu0 %v2323
    %2325 = vmatprep.subr.mxu0 0.0
    %v2326 = vand.u32 %v1859, 4294901760
    %v2327 = vsub.f32 %v1859, %v2326
    %v2328 = vand.u32 %v2327, 4294901760
    %2329 = vmatpush1.msra.mxu0 %v2328
    %2330 = vmatprep.subr.mxu0 0.0
    %v2331 = vand.u32 %v1860, 4294901760
    %v2332 = vsub.f32 %v1860, %v2331
    %v2333 = vand.u32 %v2332, 4294901760
    %2334 = vmatpush1.msra.mxu0 %v2333
    %2335 = vmatprep.subr.mxu0 0.0
    %v2336 = vand.u32 %v1861, 4294901760
    %v2337 = vsub.f32 %v1861, %v2336
    %v2338 = vand.u32 %v2337, 4294901760
    %2339 = vmatpush1.msra.mxu0 %v2338
    %2340 = vmatprep.subr.mxu0 0.0
    %v2341 = vand.u32 %v1862, 4294901760
    %v2342 = vsub.f32 %v1862, %v2341
    %v2343 = vand.u32 %v2342, 4294901760
    %2344 = vmatpush1.msra.mxu0 %v2343
    %2345 = vmatprep.subr.mxu0 0.0
    %v2346 = vand.u32 %v1863, 4294901760
    %v2347 = vsub.f32 %v1863, %v2346
    %v2348 = vand.u32 %v2347, 4294901760
    %2349 = vmatpush1.msra.mxu0 %v2348
    %2350 = vmatprep.subr.mxu0 0.0
    %v2351 = vand.u32 %v1864, 4294901760
    %v2352 = vsub.f32 %v1864, %v2351
    %v2353 = vand.u32 %v2352, 4294901760
    %2354 = vmatpush1.msra.mxu0 %v2353
    %2355 = vmatprep.subr.mxu0 0.0
    %v2356 = vand.u32 %v1865, 4294901760
    %v2357 = vsub.f32 %v1865, %v2356
    %v2358 = vand.u32 %v2357, 4294901760
    %2359 = vmatpush1.msra.mxu0 %v2358
    %2360 = vmatprep.subr.mxu0 0.0
    %v2361 = vand.u32 %v1866, 4294901760
    %v2362 = vsub.f32 %v1866, %v2361
    %v2363 = vand.u32 %v2362, 4294901760
    %2364 = vmatpush1.msra.mxu0 %v2363
    %2365 = vmatprep.subr.mxu0 0.0
    %v2366 = vand.u32 %v1867, 4294901760
    %v2367 = vsub.f32 %v1867, %v2366
    %v2368 = vand.u32 %v2367, 4294901760
    %2369 = vmatpush1.msra.mxu0 %v2368
    %2370 = vmatprep.subr.mxu0 0.0
    %v2371 = vand.u32 %v1868, 4294901760
    %v2372 = vsub.f32 %v1868, %v2371
    %v2373 = vand.u32 %v2372, 4294901760
    %2374 = vmatpush1.msra.mxu0 %v2373
    %2375 = vmatprep.subr.mxu0 0.0
    %v2376 = vand.u32 %v1869, 4294901760
    %v2377 = vsub.f32 %v1869, %v2376
    %v2378 = vand.u32 %v2377, 4294901760
    %2379 = vmatpush1.msra.mxu0 %v2378
    %2380 = vmatprep.subr.mxu0 0.0
    %v2381 = vand.u32 %v1870, 4294901760
    %v2382 = vsub.f32 %v1870, %v2381
    %v2383 = vand.u32 %v2382, 4294901760
    %2384 = vmatpush1.msra.mxu0 %v2383
    %2385 = vmatprep.subr.mxu0 0.0
    %v2386 = vand.u32 %v1871, 4294901760
    %v2387 = vsub.f32 %v1871, %v2386
    %v2388 = vand.u32 %v2387, 4294901760
    %2389 = vmatpush1.msra.mxu0 %v2388
    %2390 = vmatprep.subr.mxu0 0.0
    %v2391 = vand.u32 %v1872, 4294901760
    %v2392 = vsub.f32 %v1872, %v2391
    %v2393 = vand.u32 %v2392, 4294901760
    %2394 = vmatpush1.msra.mxu0 %v2393
    %2395 = vmatprep.subr.mxu0 0.0
    %2396 = vmatpush1.msra.mxu0 0.0
    %2397 = vmatprep.subr.mxu0 0.0
    %2398 = vmatpush1.msra.mxu0 0.0
    %2399 = vmatprep.subr.mxu0 0.0
    %2400 = vmatpush1.msra.mxu0 0.0
    %2401 = vmatprep.subr.mxu0 0.0
    %2402 = vmatpush1.msra.mxu0 0.0
    %2403 = vmatprep.subr.mxu0 0.0
    %2404 = vmatpush1.msra.mxu0 0.0
    %2405 = vmatprep.subr.mxu0 0.0
    %2406 = vmatpush1.msra.mxu0 0.0
    %2407 = vmatprep.subr.mxu0 0.0
    %2408 = vmatpush1.msra.mxu0 0.0
    %2409 = vmatprep.subr.mxu0 0.0
    %2410 = vmatpush1.msra.mxu0 0.0
    %2411 = vmatprep.subr.mxu0 0.0
    %2412 = vmatpush1.msra.mxu0 0.0
    %2413 = vmatprep.subr.mxu0 0.0
    %2414 = vmatpush1.msra.mxu0 0.0
    %2415 = vmatprep.subr.mxu0 0.0
    %2416 = vmatpush1.msra.mxu0 0.0
    %2417 = vmatprep.subr.mxu0 0.0
    %2418 = vmatpush1.msra.mxu0 0.0
    %2419 = vmatprep.subr.mxu0 0.0
    %2420 = vmatpush1.msra.mxu0 0.0
    %2421 = vmatprep.subr.mxu0 0.0
    %2422 = vmatpush1.msra.mxu0 0.0
    %2423 = vmatprep.subr.mxu0 0.0
    %2424 = vmatpush1.msra.mxu0 0.0
    %2425 = vmatprep.subr.mxu0 0.0
    %2426 = vmatpush1.msra.mxu0 0.0
    %2427 = vmatprep.mubr.f32.mxu0 0.0
    %v2428 = vand.u32 %v1856, 4294901760
    %2429 = vmatmul.mubr.f32.gmra.mrb[0].mxu0 %v2428
    %v2430 = vpop.f32.mrb[0].mxu0
    %v2431 = vadd.f32 %v2312, %v2430
    %v2432 = vpop.f32.mrb[0].mxu0
    %2433 = vdwg.mxu0
    %2434 = vmatprep.subr.mxu0 0.0
    %v2435 = vand.u32 %v1857, 4294901760
    %2436 = vmatpush1.msra.mxu0 %v2435
    %2437 = vmatprep.subr.mxu0 0.0
    %v2438 = vand.u32 %v1858, 4294901760
    %2439 = vmatpush1.msra.mxu0 %v2438
    %2440 = vmatprep.subr.mxu0 0.0
    %v2441 = vand.u32 %v1859, 4294901760
    %2442 = vmatpush1.msra.mxu0 %v2441
    %2443 = vmatprep.subr.mxu0 0.0
    %v2444 = vand.u32 %v1860, 4294901760
    %2445 = vmatpush1.msra.mxu0 %v2444
    %2446 = vmatprep.subr.mxu0 0.0
    %v2447 = vand.u32 %v1861, 4294901760
    %2448 = vmatpush1.msra.mxu0 %v2447
    %2449 = vmatprep.subr.mxu0 0.0
    %v2450 = vand.u32 %v1862, 4294901760
    %2451 = vmatpush1.msra.mxu0 %v2450
    %2452 = vmatprep.subr.mxu0 0.0
    %v2453 = vand.u32 %v1863, 4294901760
    %2454 = vmatpush1.msra.mxu0 %v2453
    %2455 = vmatprep.subr.mxu0 0.0
    %v2456 = vand.u32 %v1864, 4294901760
    %2457 = vmatpush1.msra.mxu0 %v2456
    %2458 = vmatprep.subr.mxu0 0.0
    %v2459 = vand.u32 %v1865, 4294901760
    %2460 = vmatpush1.msra.mxu0 %v2459
    %2461 = vmatprep.subr.mxu0 0.0
    %v2462 = vand.u32 %v1866, 4294901760
    %2463 = vmatpush1.msra.mxu0 %v2462
    %2464 = vmatprep.subr.mxu0 0.0
    %v2465 = vand.u32 %v1867, 4294901760
    %2466 = vmatpush1.msra.mxu0 %v2465
    %2467 = vmatprep.subr.mxu0 0.0
    %v2468 = vand.u32 %v1868, 4294901760
    %2469 = vmatpush1.msra.mxu0 %v2468
    %2470 = vmatprep.subr.mxu0 0.0
    %v2471 = vand.u32 %v1869, 4294901760
    %2472 = vmatpush1.msra.mxu0 %v2471
    %2473 = vmatprep.subr.mxu0 0.0
    %v2474 = vand.u32 %v1870, 4294901760
    %2475 = vmatpush1.msra.mxu0 %v2474
    %2476 = vmatprep.subr.mxu0 0.0
    %v2477 = vand.u32 %v1871, 4294901760
    %2478 = vmatpush1.msra.mxu0 %v2477
    %2479 = vmatprep.subr.mxu0 0.0
    %v2480 = vand.u32 %v1872, 4294901760
    %2481 = vmatpush1.msra.mxu0 %v2480
    %2482 = vmatprep.subr.mxu0 0.0
    %2483 = vmatpush1.msra.mxu0 0.0
    %2484 = vmatprep.subr.mxu0 0.0
    %2485 = vmatpush1.msra.mxu0 0.0
    %2486 = vmatprep.subr.mxu0 0.0
    %2487 = vmatpush1.msra.mxu0 0.0
    %2488 = vmatprep.subr.mxu0 0.0
    %2489 = vmatpush1.msra.mxu0 0.0
    %2490 = vmatprep.subr.mxu0 0.0
    %2491 = vmatpush1.msra.mxu0 0.0
    %2492 = vmatprep.subr.mxu0 0.0
    %2493 = vmatpush1.msra.mxu0 0.0
    %2494 = vmatprep.subr.mxu0 0.0
    %2495 = vmatpush1.msra.mxu0 0.0
    %2496 = vmatprep.subr.mxu0 0.0
    %2497 = vmatpush1.msra.mxu0 0.0
    %2498 = vmatprep.subr.mxu0 0.0
    %2499 = vmatpush1.msra.mxu0 0.0
    %2500 = vmatprep.subr.mxu0 0.0
    %2501 = vmatpush1.msra.mxu0 0.0
    %2502 = vmatprep.subr.mxu0 0.0
    %2503 = vmatpush1.msra.mxu0 0.0
    %2504 = vmatprep.subr.mxu0 0.0
    %2505 = vmatpush1.msra.mxu0 0.0
    %2506 = vmatprep.subr.mxu0 0.0
    %2507 = vmatpush1.msra.mxu0 0.0
    %2508 = vmatprep.subr.mxu0 0.0
    %2509 = vmatpush1.msra.mxu0 0.0
    %2510 = vmatprep.subr.mxu0 0.0
    %2511 = vmatpush1.msra.mxu0 0.0
    %2512 = vmatprep.subr.mxu0 0.0
    %2513 = vmatpush1.msra.mxu0 0.0
    %2514 = vmatprep.mubr.f32.mxu0 0.0
    %v2515 = vand.u32 %v1856, 4294901760
    %2516 = vmatmul.mubr.f32.gmra.mrb[0].mxu0 %v2515
    %v2517 = vpop.f32.mrb[0].mxu0
    %v2518 = vadd.f32 %v2431, %v2517
    %v2519 = vpop.f32.mrb[0].mxu0
    %2520 = vdwg.mxu0
    %v2521 = vtanh.pop %v2518
    %v2522 = vld [vmem:[%s9] sm:$0xff]
    %v2523 = vld [vmem:[%s9 + $0x8] sm:$0xff]
    %v2524 = vld [vmem:[%s9 + $0x10] sm:$0xff]
    %v2525 = vld [vmem:[%s9 + $0x18] sm:$0xff]
    %v2526 = vld [vmem:[%s9 + $0x20] sm:$0xff]
    %v2527 = vld [vmem:[%s9 + $0x28] sm:$0xff]
    %v2528 = vld [vmem:[%s9 + $0x30] sm:$0xff]
    %v2529 = vld [vmem:[%s9 + $0x38] sm:$0xff]
    %v2530 = vld [vmem:[%s9 + $0x40] sm:$0xff]
    %v2531 = vld [vmem:[%s9 + $0x48] sm:$0xff]
    %v2532 = vld [vmem:[%s9 + $0x50] sm:$0xff]
    %v2533 = vld [vmem:[%s9 + $0x58] sm:$0xff]
    %v2534 = vld [vmem:[%s9 + $0x60] sm:$0xff]
    %v2535 = vld [vmem:[%s9 + $0x68] sm:$0xff]
    %v2536 = vld [vmem:[%s9 + $0x70] sm:$0xff]
    %v2537 = vld [vmem:[%s9 + $0x78] sm:$0xff]
    %v2538 = vld [vmem:[%s10] sm:$0x1]
    %v2540 = vlaneseq
    %v2541 = vshrl.u32 %v2540, 7
    %v2542 = vsub.s32 0, %v2541
    %v2543 = vrot.slane %v2538, %v2542
    %2545 = vmatprep.subr.mxu0 0.0
    %v2546 = vand.u32 %v2522, 4294901760
    %2547 = vmatpush1.msra.mxu0 %v2546
    %2548 = vmatprep.subr.mxu0 0.0
    %v2549 = vand.u32 %v2523, 4294901760
    %2550 = vmatpush1.msra.mxu0 %v2549
    %2551 = vmatprep.subr.mxu0 0.0
    %v2552 = vand.u32 %v2524, 4294901760
    %2553 = vmatpush1.msra.mxu0 %v2552
    %2554 = vmatprep.subr.mxu0 0.0
    %v2555 = vand.u32 %v2525, 4294901760
    %2556 = vmatpush1.msra.mxu0 %v2555
    %2557 = vmatprep.subr.mxu0 0.0
    %v2558 = vand.u32 %v2526, 4294901760
    %2559 = vmatpush1.msra.mxu0 %v2558
    %2560 = vmatprep.subr.mxu0 0.0
    %v2561 = vand.u32 %v2527, 4294901760
    %2562 = vmatpush1.msra.mxu0 %v2561
    %2563 = vmatprep.subr.mxu0 0.0
    %v2564 = vand.u32 %v2528, 4294901760
    %2565 = vmatpush1.msra.mxu0 %v2564
    %2566 = vmatprep.subr.mxu0 0.0
    %v2567 = vand.u32 %v2529, 4294901760
    %2568 = vmatpush1.msra.mxu0 %v2567
    %2569 = vmatprep.subr.mxu0 0.0
    %v2570 = vand.u32 %v2530, 4294901760
    %2571 = vmatpush1.msra.mxu0 %v2570
    %2572 = vmatprep.subr.mxu0 0.0
    %v2573 = vand.u32 %v2531, 4294901760
    %2574 = vmatpush1.msra.mxu0 %v2573
    %2575 = vmatprep.subr.mxu0 0.0
    %v2576 = vand.u32 %v2532, 4294901760
    %2577 = vmatpush1.msra.mxu0 %v2576
    %2578 = vmatprep.subr.mxu0 0.0
    %v2579 = vand.u32 %v2533, 4294901760
    %2580 = vmatpush1.msra.mxu0 %v2579
    %2581 = vmatprep.subr.mxu0 0.0
    %v2582 = vand.u32 %v2534, 4294901760
    %2583 = vmatpush1.msra.mxu0 %v2582
    %2584 = vmatprep.subr.mxu0 0.0
    %v2585 = vand.u32 %v2535, 4294901760
    %2586 = vmatpush1.msra.mxu0 %v2585
    %2587 = vmatprep.subr.mxu0 0.0
    %v2588 = vand.u32 %v2536, 4294901760
    %2589 = vmatpush1.msra.mxu0 %v2588
    %2590 = vmatprep.subr.mxu0 0.0
    %v2591 = vand.u32 %v2537, 4294901760
    %2592 = vmatpush1.msra.mxu0 %v2591
    %2593 = vmatprep.subr.mxu0 0.0
    %2594 = vmatpush1.msra.mxu0 0.0
    %2595 = vmatprep.subr.mxu0 0.0
    %2596 = vmatpush1.msra.mxu0 0.0
    %2597 = vmatprep.subr.mxu0 0.0
    %2598 = vmatpush1.msra.mxu0 0.0
    %2599 = vmatprep.subr.mxu0 0.0
    %2600 = vmatpush1.msra.mxu0 0.0
    %2601 = vmatprep.subr.mxu0 0.0
    %2602 = vmatpush1.msra.mxu0 0.0
    %2603 = vmatprep.subr.mxu0 0.0
    %2604 = vmatpush1.msra.mxu0 0.0
    %2605 = vmatprep.subr.mxu0 0.0
    %2606 = vmatpush1.msra.mxu0 0.0
    %2607 = vmatprep.subr.mxu0 0.0
    %2608 = vmatpush1.msra.mxu0 0.0
    %2609 = vmatprep.subr.mxu0 0.0
    %2610 = vmatpush1.msra.mxu0 0.0
    %2611 = vmatprep.subr.mxu0 0.0
    %2612 = vmatpush1.msra.mxu0 0.0
    %2613 = vmatprep.subr.mxu0 0.0
    %2614 = vmatpush1.msra.mxu0 0.0
    %2615 = vmatprep.subr.mxu0 0.0
    %2616 = vmatpush1.msra.mxu0 0.0
    %2617 = vmatprep.subr.mxu0 0.0
    %2618 = vmatpush1.msra.mxu0 0.0
    %2619 = vmatprep.subr.mxu0 0.0
    %2620 = vmatpush1.msra.mxu0 0.0
    %2621 = vmatprep.subr.mxu0 0.0
    %2622 = vmatpush1.msra.mxu0 0.0
    %2623 = vmatprep.subr.mxu0 0.0
    %2624 = vmatpush1.msra.mxu0 0.0
    %2625 = vmatprep.mubr.f32.mxu0 0.0
    %v2626 = vand.u32 %v2521, 4294901760
    %v2627 = vsub.f32 %v2521, %v2626
    %v2628 = vand.u32 %v2627, 4294901760
    %v2629 = vsub.f32 %v2627, %v2628
    %v2630 = vand.u32 %v2629, 4294901760
    %2631 = vmatmul.mubr.f32.gmra.mrb[0].mxu0 %v2630
    %v2632 = vpop.f32.mrb[0].mxu0
    %v2633 = vadd.f32 %v2543, %v2632
    %v2634 = vpop.f32.mrb[0].mxu0
    %2635 = vdwg.mxu0
    %2636 = vmatprep.subr.mxu0 0.0
    %v2637 = vand.u32 %v2522, 4294901760
    %v2638 = vsub.f32 %v2522, %v2637
    %v2639 = vand.u32 %v2638, 4294901760
    %v2640 = vsub.f32 %v2638, %v2639
    %v2641 = vand.u32 %v2640, 4294901760
    %2642 = vmatpush1.msra.mxu0 %v2641
    %2643 = vmatprep.subr.mxu0 0.0
    %v2644 = vand.u32 %v2523, 4294901760
    %v2645 = vsub.f32 %v2523, %v2644
    %v2646 = vand.u32 %v2645, 4294901760
    %v2647 = vsub.f32 %v2645, %v2646
    %v2648 = vand.u32 %v2647, 4294901760
    %2649 = vmatpush1.msra.mxu0 %v2648
    %2650 = vmatprep.subr.mxu0 0.0
    %v2651 = vand.u32 %v2524, 4294901760
    %v2652 = vsub.f32 %v2524, %v2651
    %v2653 = vand.u32 %v2652, 4294901760
    %v2654 = vsub.f32 %v2652, %v2653
    %v2655 = vand.u32 %v2654, 4294901760
    %2656 = vmatpush1.msra.mxu0 %v2655
    %2657 = vmatprep.subr.mxu0 0.0
    %v2658 = vand.u32 %v2525, 4294901760
    %v2659 = vsub.f32 %v2525, %v2658
    %v2660 = vand.u32 %v2659, 4294901760
    %v2661 = vsub.f32 %v2659, %v2660
    %v2662 = vand.u32 %v2661, 4294901760
    %2663 = vmatpush1.msra.mxu0 %v2662
    %2664 = vmatprep.subr.mxu0 0.0
    %v2665 = vand.u32 %v2526, 4294901760
    %v2666 = vsub.f32 %v2526, %v2665
    %v2667 = vand.u32 %v2666, 4294901760
    %v2668 = vsub.f32 %v2666, %v2667
    %v2669 = vand.u32 %v2668, 4294901760
    %2670 = vmatpush1.msra.mxu0 %v2669
    %2671 = vmatprep.subr.mxu0 0.0
    %v2672 = vand.u32 %v2527, 4294901760
    %v2673 = vsub.f32 %v2527, %v2672
    %v2674 = vand.u32 %v2673, 4294901760
    %v2675 = vsub.f32 %v2673, %v2674
    %v2676 = vand.u32 %v2675, 4294901760
    %2677 = vmatpush1.msra.mxu0 %v2676
    %2678 = vmatprep.subr.mxu0 0.0
    %v2679 = vand.u32 %v2528, 4294901760
    %v2680 = vsub.f32 %v2528, %v2679
    %v2681 = vand.u32 %v2680, 4294901760
    %v2682 = vsub.f32 %v2680, %v2681
    %v2683 = vand.u32 %v2682, 4294901760
    %2684 = vmatpush1.msra.mxu0 %v2683
    %2685 = vmatprep.subr.mxu0 0.0
    %v2686 = vand.u32 %v2529, 4294901760
    %v2687 = vsub.f32 %v2529, %v2686
    %v2688 = vand.u32 %v2687, 4294901760
    %v2689 = vsub.f32 %v2687, %v2688
    %v2690 = vand.u32 %v2689, 4294901760
    %2691 = vmatpush1.msra.mxu0 %v2690
    %2692 = vmatprep.subr.mxu0 0.0
    %v2693 = vand.u32 %v2530, 4294901760
    %v2694 = vsub.f32 %v2530, %v2693
    %v2695 = vand.u32 %v2694, 4294901760
    %v2696 = vsub.f32 %v2694, %v2695
    %v2697 = vand.u32 %v2696, 4294901760
    %2698 = vmatpush1.msra.mxu0 %v2697
    %2699 = vmatprep.subr.mxu0 0.0
    %v2700 = vand.u32 %v2531, 4294901760
    %v2701 = vsub.f32 %v2531, %v2700
    %v2702 = vand.u32 %v2701, 4294901760
    %v2703 = vsub.f32 %v2701, %v2702
    %v2704 = vand.u32 %v2703, 4294901760
    %2705 = vmatpush1.msra.mxu0 %v2704
    %2706 = vmatprep.subr.mxu0 0.0
    %v2707 = vand.u32 %v2532, 4294901760
    %v2708 = vsub.f32 %v2532, %v2707
    %v2709 = vand.u32 %v2708, 4294901760
    %v2710 = vsub.f32 %v2708, %v2709
    %v2711 = vand.u32 %v2710, 4294901760
    %2712 = vmatpush1.msra.mxu0 %v2711
    %2713 = vmatprep.subr.mxu0 0.0
    %v2714 = vand.u32 %v2533, 4294901760
    %v2715 = vsub.f32 %v2533, %v2714
    %v2716 = vand.u32 %v2715, 4294901760
    %v2717 = vsub.f32 %v2715, %v2716
    %v2718 = vand.u32 %v2717, 4294901760
    %2719 = vmatpush1.msra.mxu0 %v2718
    %2720 = vmatprep.subr.mxu0 0.0
    %v2721 = vand.u32 %v2534, 4294901760
    %v2722 = vsub.f32 %v2534, %v2721
    %v2723 = vand.u32 %v2722, 4294901760
    %v2724 = vsub.f32 %v2722, %v2723
    %v2725 = vand.u32 %v2724, 4294901760
    %2726 = vmatpush1.msra.mxu0 %v2725
    %2727 = vmatprep.subr.mxu0 0.0
    %v2728 = vand.u32 %v2535, 4294901760
    %v2729 = vsub.f32 %v2535, %v2728
    %v2730 = vand.u32 %v2729, 4294901760
    %v2731 = vsub.f32 %v2729, %v2730
    %v2732 = vand.u32 %v2731, 4294901760
    %2733 = vmatpush1.msra.mxu0 %v2732
    %2734 = vmatprep.subr.mxu0 0.0
    %v2735 = vand.u32 %v2536, 4294901760
    %v2736 = vsub.f32 %v2536, %v2735
    %v2737 = vand.u32 %v2736, 4294901760
    %v2738 = vsub.f32 %v2736, %v2737
    %v2739 = vand.u32 %v2738, 4294901760
    %2740 = vmatpush1.msra.mxu0 %v2739
    %2741 = vmatprep.subr.mxu0 0.0
    %v2742 = vand.u32 %v2537, 4294901760
    %v2743 = vsub.f32 %v2537, %v2742
    %v2744 = vand.u32 %v2743, 4294901760
    %v2745 = vsub.f32 %v2743, %v2744
    %v2746 = vand.u32 %v2745, 4294901760
    %2747 = vmatpush1.msra.mxu0 %v2746
    %2748 = vmatprep.subr.mxu0 0.0
    %2749 = vmatpush1.msra.mxu0 0.0
    %2750 = vmatprep.subr.mxu0 0.0
    %2751 = vmatpush1.msra.mxu0 0.0
    %2752 = vmatprep.subr.mxu0 0.0
    %2753 = vmatpush1.msra.mxu0 0.0
    %2754 = vmatprep.subr.mxu0 0.0
    %2755 = vmatpush1.msra.mxu0 0.0
    %2756 = vmatprep.subr.mxu0 0.0
    %2757 = vmatpush1.msra.mxu0 0.0
    %2758 = vmatprep.subr.mxu0 0.0
    %2759 = vmatpush1.msra.mxu0 0.0
    %2760 = vmatprep.subr.mxu0 0.0
    %2761 = vmatpush1.msra.mxu0 0.0
    %2762 = vmatprep.subr.mxu0 0.0
    %2763 = vmatpush1.msra.mxu0 0.0
    %2764 = vmatprep.subr.mxu0 0.0
    %2765 = vmatpush1.msra.mxu0 0.0
    %2766 = vmatprep.subr.mxu0 0.0
    %2767 = vmatpush1.msra.mxu0 0.0
    %2768 = vmatprep.subr.mxu0 0.0
    %2769 = vmatpush1.msra.mxu0 0.0
    %2770 = vmatprep.subr.mxu0 0.0
    %2771 = vmatpush1.msra.mxu0 0.0
    %2772 = vmatprep.subr.mxu0 0.0
    %2773 = vmatpush1.msra.mxu0 0.0
    %2774 = vmatprep.subr.mxu0 0.0
    %2775 = vmatpush1.msra.mxu0 0.0
    %2776 = vmatprep.subr.mxu0 0.0
    %2777 = vmatpush1.msra.mxu0 0.0
    %2778 = vmatprep.subr.mxu0 0.0
    %2779 = vmatpush1.msra.mxu0 0.0
    %2780 = vmatprep.mubr.f32.mxu0 0.0
    %v2781 = vand.u32 %v2521, 4294901760
    %2782 = vmatmul.mubr.f32.gmra.mrb[0].mxu0 %v2781
    %v2783 = vpop.f32.mrb[0].mxu0
    %v2784 = vadd.f32 %v2633, %v2783
    %v2785 = vpop.f32.mrb[0].mxu0
    %2786 = vdwg.mxu0
    %2787 = vmatprep.subr.mxu0 0.0
    %v2788 = vand.u32 %v2522, 4294901760
    %v2789 = vsub.f32 %v2522, %v2788
    %2790 = vmatpush1.msra.mxu0 %v2789
    %2791 = vmatprep.subr.mxu0 0.0
    %v2792 = vand.u32 %v2523, 4294901760
    %v2793 = vsub.f32 %v2523, %v2792
    %2794 = vmatpush1.msra.mxu0 %v2793
    %2795 = vmatprep.subr.mxu0 0.0
    %v2796 = vand.u32 %v2524, 4294901760
    %v2797 = vsub.f32 %v2524, %v2796
    %2798 = vmatpush1.msra.mxu0 %v2797
    %2799 = vmatprep.subr.mxu0 0.0
    %v2800 = vand.u32 %v2525, 4294901760
    %v2801 = vsub.f32 %v2525, %v2800
    %2802 = vmatpush1.msra.mxu0 %v2801
    %2803 = vmatprep.subr.mxu0 0.0
    %v2804 = vand.u32 %v2526, 4294901760
    %v2805 = vsub.f32 %v2526, %v2804
    %2806 = vmatpush1.msra.mxu0 %v2805
    %2807 = vmatprep.subr.mxu0 0.0
    %v2808 = vand.u32 %v2527, 4294901760
    %v2809 = vsub.f32 %v2527, %v2808
    %2810 = vmatpush1.msra.mxu0 %v2809
    %2811 = vmatprep.subr.mxu0 0.0
    %v2812 = vand.u32 %v2528, 4294901760
    %v2813 = vsub.f32 %v2528, %v2812
    %2814 = vmatpush1.msra.mxu0 %v2813
    %2815 = vmatprep.subr.mxu0 0.0
    %v2816 = vand.u32 %v2529, 4294901760
    %v2817 = vsub.f32 %v2529, %v2816
    %2818 = vmatpush1.msra.mxu0 %v2817
    %2819 = vmatprep.subr.mxu0 0.0
    %v2820 = vand.u32 %v2530, 4294901760
    %v2821 = vsub.f32 %v2530, %v2820
    %2822 = vmatpush1.msra.mxu0 %v2821
    %2823 = vmatprep.subr.mxu0 0.0
    %v2824 = vand.u32 %v2531, 4294901760
    %v2825 = vsub.f32 %v2531, %v2824
    %2826 = vmatpush1.msra.mxu0 %v2825
    %2827 = vmatprep.subr.mxu0 0.0
    %v2828 = vand.u32 %v2532, 4294901760
    %v2829 = vsub.f32 %v2532, %v2828
    %2830 = vmatpush1.msra.mxu0 %v2829
    %2831 = vmatprep.subr.mxu0 0.0
    %v2832 = vand.u32 %v2533, 4294901760
    %v2833 = vsub.f32 %v2533, %v2832
    %2834 = vmatpush1.msra.mxu0 %v2833
    %2835 = vmatprep.subr.mxu0 0.0
    %v2836 = vand.u32 %v2534, 4294901760
    %v2837 = vsub.f32 %v2534, %v2836
    %2838 = vmatpush1.msra.mxu0 %v2837
    %2839 = vmatprep.subr.mxu0 0.0
    %v2840 = vand.u32 %v2535, 4294901760
    %v2841 = vsub.f32 %v2535, %v2840
    %2842 = vmatpush1.msra.mxu0 %v2841
    %2843 = vmatprep.subr.mxu0 0.0
    %v2844 = vand.u32 %v2536, 4294901760
    %v2845 = vsub.f32 %v2536, %v2844
    %2846 = vmatpush1.msra.mxu0 %v2845
    %2847 = vmatprep.subr.mxu0 0.0
    %v2848 = vand.u32 %v2537, 4294901760
    %v2849 = vsub.f32 %v2537, %v2848
    %2850 = vmatpush1.msra.mxu0 %v2849
    %2851 = vmatprep.subr.mxu0 0.0
    %2852 = vmatpush1.msra.mxu0 0.0
    %2853 = vmatprep.subr.mxu0 0.0
    %2854 = vmatpush1.msra.mxu0 0.0
    %2855 = vmatprep.subr.mxu0 0.0
    %2856 = vmatpush1.msra.mxu0 0.0
    %2857 = vmatprep.subr.mxu0 0.0
    %2858 = vmatpush1.msra.mxu0 0.0
    %2859 = vmatprep.subr.mxu0 0.0
    %2860 = vmatpush1.msra.mxu0 0.0
    %2861 = vmatprep.subr.mxu0 0.0
    %2862 = vmatpush1.msra.mxu0 0.0
    %2863 = vmatprep.subr.mxu0 0.0
    %2864 = vmatpush1.msra.mxu0 0.0
    %2865 = vmatprep.subr.mxu0 0.0
    %2866 = vmatpush1.msra.mxu0 0.0
    %2867 = vmatprep.subr.mxu0 0.0
    %2868 = vmatpush1.msra.mxu0 0.0
    %2869 = vmatprep.subr.mxu0 0.0
    %2870 = vmatpush1.msra.mxu0 0.0
    %2871 = vmatprep.subr.mxu0 0.0
    %2872 = vmatpush1.msra.mxu0 0.0
    %2873 = vmatprep.subr.mxu0 0.0
    %2874 = vmatpush1.msra.mxu0 0.0
    %2875 = vmatprep.subr.mxu0 0.0
    %2876 = vmatpush1.msra.mxu0 0.0
    %2877 = vmatprep.subr.mxu0 0.0
    %2878 = vmatpush1.msra.mxu0 0.0
    %2879 = vmatprep.subr.mxu0 0.0
    %2880 = vmatpush1.msra.mxu0 0.0
    %2881 = vmatprep.subr.mxu0 0.0
    %2882 = vmatpush1.msra.mxu0 0.0
    %2883 = vmatprep.mubr.f32.mxu0 0.0
    %v2884 = vand.u32 %v2521, 4294901760
    %v2885 = vsub.f32 %v2521, %v2884
    %2886 = vmatmul.mubr.f32.gmra.mrb[0].mxu0 %v2885
    %v2887 = vpop.f32.mrb[0].mxu0
    %v2888 = vadd.f32 %v2784, %v2887
    %v2889 = vpop.f32.mrb[0].mxu0
    %2890 = vdwg.mxu0
    %2891 = vmatprep.subr.mxu0 0.0
    %v2892 = vand.u32 %v2522, 4294901760
    %2893 = vmatpush1.msra.mxu0 %v2892
    %2894 = vmatprep.subr.mxu0 0.0
    %v2895 = vand.u32 %v2523, 4294901760
    %2896 = vmatpush1.msra.mxu0 %v2895
    %2897 = vmatprep.subr.mxu0 0.0
    %v2898 = vand.u32 %v2524, 4294901760
    %2899 = vmatpush1.msra.mxu0 %v2898
    %2900 = vmatprep.subr.mxu0 0.0
    %v2901 = vand.u32 %v2525, 4294901760
    %2902 = vmatpush1.msra.mxu0 %v2901
    %2903 = vmatprep.subr.mxu0 0.0
    %v2904 = vand.u32 %v2526, 4294901760
    %2905 = vmatpush1.msra.mxu0 %v2904
    %2906 = vmatprep.subr.mxu0 0.0
    %v2907 = vand.u32 %v2527, 4294901760
    %2908 = vmatpush1.msra.mxu0 %v2907
    %2909 = vmatprep.subr.mxu0 0.0
    %v2910 = vand.u32 %v2528, 4294901760
    %2911 = vmatpush1.msra.mxu0 %v2910
    %2912 = vmatprep.subr.mxu0 0.0
    %v2913 = vand.u32 %v2529, 4294901760
    %2914 = vmatpush1.msra.mxu0 %v2913
    %2915 = vmatprep.subr.mxu0 0.0
    %v2916 = vand.u32 %v2530, 4294901760
    %2917 = vmatpush1.msra.mxu0 %v2916
    %2918 = vmatprep.subr.mxu0 0.0
    %v2919 = vand.u32 %v2531, 4294901760
    %2920 = vmatpush1.msra.mxu0 %v2919
    %2921 = vmatprep.subr.mxu0 0.0
    %v2922 = vand.u32 %v2532, 4294901760
    %2923 = vmatpush1.msra.mxu0 %v2922
    %2924 = vmatprep.subr.mxu0 0.0
    %v2925 = vand.u32 %v2533, 4294901760
    %2926 = vmatpush1.msra.mxu0 %v2925
    %2927 = vmatprep.subr.mxu0 0.0
    %v2928 = vand.u32 %v2534, 4294901760
    %2929 = vmatpush1.msra.mxu0 %v2928
    %2930 = vmatprep.subr.mxu0 0.0
    %v2931 = vand.u32 %v2535, 4294901760
    %2932 = vmatpush1.msra.mxu0 %v2931
    %2933 = vmatprep.subr.mxu0 0.0
    %v2934 = vand.u32 %v2536, 4294901760
    %2935 = vmatpush1.msra.mxu0 %v2934
    %2936 = vmatprep.subr.mxu0 0.0
    %v2937 = vand.u32 %v2537, 4294901760
    %2938 = vmatpush1.msra.mxu0 %v2937
    %2939 = vmatprep.subr.mxu0 0.0
    %2940 = vmatpush1.msra.mxu0 0.0
    %2941 = vmatprep.subr.mxu0 0.0
    %2942 = vmatpush1.msra.mxu0 0.0
    %2943 = vmatprep.subr.mxu0 0.0
    %2944 = vmatpush1.msra.mxu0 0.0
    %2945 = vmatprep.subr.mxu0 0.0
    %2946 = vmatpush1.msra.mxu0 0.0
    %2947 = vmatprep.subr.mxu0 0.0
    %2948 = vmatpush1.msra.mxu0 0.0
    %2949 = vmatprep.subr.mxu0 0.0
    %2950 = vmatpush1.msra.mxu0 0.0
    %2951 = vmatprep.subr.mxu0 0.0
    %2952 = vmatpush1.msra.mxu0 0.0
    %2953 = vmatprep.subr.mxu0 0.0
    %2954 = vmatpush1.msra.mxu0 0.0
    %2955 = vmatprep.subr.mxu0 0.0
    %2956 = vmatpush1.msra.mxu0 0.0
    %2957 = vmatprep.subr.mxu0 0.0
    %2958 = vmatpush1.msra.mxu0 0.0
    %2959 = vmatprep.subr.mxu0 0.0
    %2960 = vmatpush1.msra.mxu0 0.0
    %2961 = vmatprep.subr.mxu0 0.0
    %2962 = vmatpush1.msra.mxu0 0.0
    %2963 = vmatprep.subr.mxu0 0.0
    %2964 = vmatpush1.msra.mxu0 0.0
    %2965 = vmatprep.subr.mxu0 0.0
    %2966 = vmatpush1.msra.mxu0 0.0
    %2967 = vmatprep.subr.mxu0 0.0
    %2968 = vmatpush1.msra.mxu0 0.0
    %2969 = vmatprep.subr.mxu0 0.0
    %2970 = vmatpush1.msra.mxu0 0.0
    %2971 = vmatprep.mubr.f32.mxu0 0.0
    %v2972 = vand.u32 %v2521, 4294901760
    %v2973 = vsub.f32 %v2521, %v2972
    %v2974 = vand.u32 %v2973, 4294901760
    %2975 = vmatmul.mubr.f32.gmra.mrb[0].mxu0 %v2974
    %v2976 = vpop.f32.mrb[0].mxu0
    %v2977 = vadd.f32 %v2888, %v2976
    %v2978 = vpop.f32.mrb[0].mxu0
    %2979 = vdwg.mxu0
    %2980 = vmatprep.subr.mxu0 0.0
    %v2981 = vand.u32 %v2522, 4294901760
    %v2982 = vsub.f32 %v2522, %v2981
    %v2983 = vand.u32 %v2982, 4294901760
    %2984 = vmatpush1.msra.mxu0 %v2983
    %2985 = vmatprep.subr.mxu0 0.0
    %v2986 = vand.u32 %v2523, 4294901760
    %v2987 = vsub.f32 %v2523, %v2986
    %v2988 = vand.u32 %v2987, 4294901760
    %2989 = vmatpush1.msra.mxu0 %v2988
    %2990 = vmatprep.subr.mxu0 0.0
    %v2991 = vand.u32 %v2524, 4294901760
    %v2992 = vsub.f32 %v2524, %v2991
    %v2993 = vand.u32 %v2992, 4294901760
    %2994 = vmatpush1.msra.mxu0 %v2993
    %2995 = vmatprep.subr.mxu0 0.0
    %v2996 = vand.u32 %v2525, 4294901760
    %v2997 = vsub.f32 %v2525, %v2996
    %v2998 = vand.u32 %v2997, 4294901760
    %2999 = vmatpush1.msra.mxu0 %v2998
    %3000 = vmatprep.subr.mxu0 0.0
    %v3001 = vand.u32 %v2526, 4294901760
    %v3002 = vsub.f32 %v2526, %v3001
    %v3003 = vand.u32 %v3002, 4294901760
    %3004 = vmatpush1.msra.mxu0 %v3003
    %3005 = vmatprep.subr.mxu0 0.0
    %v3006 = vand.u32 %v2527, 4294901760
    %v3007 = vsub.f32 %v2527, %v3006
    %v3008 = vand.u32 %v3007, 4294901760
    %3009 = vmatpush1.msra.mxu0 %v3008
    %3010 = vmatprep.subr.mxu0 0.0
    %v3011 = vand.u32 %v2528, 4294901760
    %v3012 = vsub.f32 %v2528, %v3011
    %v3013 = vand.u32 %v3012, 4294901760
    %3014 = vmatpush1.msra.mxu0 %v3013
    %3015 = vmatprep.subr.mxu0 0.0
    %v3016 = vand.u32 %v2529, 4294901760
    %v3017 = vsub.f32 %v2529, %v3016
    %v3018 = vand.u32 %v3017, 4294901760
    %3019 = vmatpush1.msra.mxu0 %v3018
    %3020 = vmatprep.subr.mxu0 0.0
    %v3021 = vand.u32 %v2530, 4294901760
    %v3022 = vsub.f32 %v2530, %v3021
    %v3023 = vand.u32 %v3022, 4294901760
    %3024 = vmatpush1.msra.mxu0 %v3023
    %3025 = vmatprep.subr.mxu0 0.0
    %v3026 = vand.u32 %v2531, 4294901760
    %v3027 = vsub.f32 %v2531, %v3026
    %v3028 = vand.u32 %v3027, 4294901760
    %3029 = vmatpush1.msra.mxu0 %v3028
    %3030 = vmatprep.subr.mxu0 0.0
    %v3031 = vand.u32 %v2532, 4294901760
    %v3032 = vsub.f32 %v2532, %v3031
    %v3033 = vand.u32 %v3032, 4294901760
    %3034 = vmatpush1.msra.mxu0 %v3033
    %3035 = vmatprep.subr.mxu0 0.0
    %v3036 = vand.u32 %v2533, 4294901760
    %v3037 = vsub.f32 %v2533, %v3036
    %v3038 = vand.u32 %v3037, 4294901760
    %3039 = vmatpush1.msra.mxu0 %v3038
    %3040 = vmatprep.subr.mxu0 0.0
    %v3041 = vand.u32 %v2534, 4294901760
    %v3042 = vsub.f32 %v2534, %v3041
    %v3043 = vand.u32 %v3042, 4294901760
    %3044 = vmatpush1.msra.mxu0 %v3043
    %3045 = vmatprep.subr.mxu0 0.0
    %v3046 = vand.u32 %v2535, 4294901760
    %v3047 = vsub.f32 %v2535, %v3046
    %v3048 = vand.u32 %v3047, 4294901760
    %3049 = vmatpush1.msra.mxu0 %v3048
    %3050 = vmatprep.subr.mxu0 0.0
    %v3051 = vand.u32 %v2536, 4294901760
    %v3052 = vsub.f32 %v2536, %v3051
    %v3053 = vand.u32 %v3052, 4294901760
    %3054 = vmatpush1.msra.mxu0 %v3053
    %3055 = vmatprep.subr.mxu0 0.0
    %v3056 = vand.u32 %v2537, 4294901760
    %v3057 = vsub.f32 %v2537, %v3056
    %v3058 = vand.u32 %v3057, 4294901760
    %3059 = vmatpush1.msra.mxu0 %v3058
    %3060 = vmatprep.subr.mxu0 0.0
    %3061 = vmatpush1.msra.mxu0 0.0
    %3062 = vmatprep.subr.mxu0 0.0
    %3063 = vmatpush1.msra.mxu0 0.0
    %3064 = vmatprep.subr.mxu0 0.0
    %3065 = vmatpush1.msra.mxu0 0.0
    %3066 = vmatprep.subr.mxu0 0.0
    %3067 = vmatpush1.msra.mxu0 0.0
    %3068 = vmatprep.subr.mxu0 0.0
    %3069 = vmatpush1.msra.mxu0 0.0
    %3070 = vmatprep.subr.mxu0 0.0
    %3071 = vmatpush1.msra.mxu0 0.0
    %3072 = vmatprep.subr.mxu0 0.0
    %3073 = vmatpush1.msra.mxu0 0.0
    %3074 = vmatprep.subr.mxu0 0.0
    %3075 = vmatpush1.msra.mxu0 0.0
    %3076 = vmatprep.subr.mxu0 0.0
    %3077 = vmatpush1.msra.mxu0 0.0
    %3078 = vmatprep.subr.mxu0 0.0
    %3079 = vmatpush1.msra.mxu0 0.0
    %3080 = vmatprep.subr.mxu0 0.0
    %3081 = vmatpush1.msra.mxu0 0.0
    %3082 = vmatprep.subr.mxu0 0.0
    %3083 = vmatpush1.msra.mxu0 0.0
    %3084 = vmatprep.subr.mxu0 0.0
    %3085 = vmatpush1.msra.mxu0 0.0
    %3086 = vmatprep.subr.mxu0 0.0
    %3087 = vmatpush1.msra.mxu0 0.0
    %3088 = vmatprep.subr.mxu0 0.0
    %3089 = vmatpush1.msra.mxu0 0.0
    %3090 = vmatprep.subr.mxu0 0.0
    %3091 = vmatpush1.msra.mxu0 0.0
    %3092 = vmatprep.mubr.f32.mxu0 0.0
    %v3093 = vand.u32 %v2521, 4294901760
    %3094 = vmatmul.mubr.f32.gmra.mrb[0].mxu0 %v3093
    %v3095 = vpop.f32.mrb[0].mxu0
    %v3096 = vadd.f32 %v2977, %v3095
    %v3097 = vpop.f32.mrb[0].mxu0
    %3098 = vdwg.mxu0
    %3099 = vmatprep.subr.mxu0 0.0
    %v3100 = vand.u32 %v2522, 4294901760
    %3101 = vmatpush1.msra.mxu0 %v3100
    %3102 = vmatprep.subr.mxu0 0.0
    %v3103 = vand.u32 %v2523, 4294901760
    %3104 = vmatpush1.msra.mxu0 %v3103
    %3105 = vmatprep.subr.mxu0 0.0
    %v3106 = vand.u32 %v2524, 4294901760
    %3107 = vmatpush1.msra.mxu0 %v3106
    %3108 = vmatprep.subr.mxu0 0.0
    %v3109 = vand.u32 %v2525, 4294901760
    %3110 = vmatpush1.msra.mxu0 %v3109
    %3111 = vmatprep.subr.mxu0 0.0
    %v3112 = vand.u32 %v2526, 4294901760
    %3113 = vmatpush1.msra.mxu0 %v3112
    %3114 = vmatprep.subr.mxu0 0.0
    %v3115 = vand.u32 %v2527, 4294901760
    %3116 = vmatpush1.msra.mxu0 %v3115
    %3117 = vmatprep.subr.mxu0 0.0
    %v3118 = vand.u32 %v2528, 4294901760
    %3119 = vmatpush1.msra.mxu0 %v3118
    %3120 = vmatprep.subr.mxu0 0.0
    %v3121 = vand.u32 %v2529, 4294901760
    %3122 = vmatpush1.msra.mxu0 %v3121
    %3123 = vmatprep.subr.mxu0 0.0
    %v3124 = vand.u32 %v2530, 4294901760
    %3125 = vmatpush1.msra.mxu0 %v3124
    %3126 = vmatprep.subr.mxu0 0.0
    %v3127 = vand.u32 %v2531, 4294901760
    %3128 = vmatpush1.msra.mxu0 %v3127
    %3129 = vmatprep.subr.mxu0 0.0
    %v3130 = vand.u32 %v2532, 4294901760
    %3131 = vmatpush1.msra.mxu0 %v3130
    %3132 = vmatprep.subr.mxu0 0.0
    %v3133 = vand.u32 %v2533, 4294901760
    %3134 = vmatpush1.msra.mxu0 %v3133
    %3135 = vmatprep.subr.mxu0 0.0
    %v3136 = vand.u32 %v2534, 4294901760
    %3137 = vmatpush1.msra.mxu0 %v3136
    %3138 = vmatprep.subr.mxu0 0.0
    %v3139 = vand.u32 %v2535, 4294901760
    %3140 = vmatpush1.msra.mxu0 %v3139
    %3141 = vmatprep.subr.mxu0 0.0
    %v3142 = vand.u32 %v2536, 4294901760
    %3143 = vmatpush1.msra.mxu0 %v3142
    %3144 = vmatprep.subr.mxu0 0.0
    %v3145 = vand.u32 %v2537, 4294901760
    %3146 = vmatpush1.msra.mxu0 %v3145
    %3147 = vmatprep.subr.mxu0 0.0
    %3148 = vmatpush1.msra.mxu0 0.0
    %3149 = vmatprep.subr.mxu0 0.0
    %3150 = vmatpush1.msra.mxu0 0.0
    %3151 = vmatprep.subr.mxu0 0.0
    %3152 = vmatpush1.msra.mxu0 0.0
    %3153 = vmatprep.subr.mxu0 0.0
    %3154 = vmatpush1.msra.mxu0 0.0
    %3155 = vmatprep.subr.mxu0 0.0
    %3156 = vmatpush1.msra.mxu0 0.0
    %3157 = vmatprep.subr.mxu0 0.0
    %3158 = vmatpush1.msra.mxu0 0.0
    %3159 = vmatprep.subr.mxu0 0.0
    %3160 = vmatpush1.msra.mxu0 0.0
    %3161 = vmatprep.subr.mxu0 0.0
    %3162 = vmatpush1.msra.mxu0 0.0
    %3163 = vmatprep.subr.mxu0 0.0
    %3164 = vmatpush1.msra.mxu0 0.0
    %3165 = vmatprep.subr.mxu0 0.0
    %3166 = vmatpush1.msra.mxu0 0.0
    %3167 = vmatprep.subr.mxu0 0.0
    %3168 = vmatpush1.msra.mxu0 0.0
    %3169 = vmatprep.subr.mxu0 0.0
    %3170 = vmatpush1.msra.mxu0 0.0
    %3171 = vmatprep.subr.mxu0 0.0
    %3172 = vmatpush1.msra.mxu0 0.0
    %3173 = vmatprep.subr.mxu0 0.0
    %3174 = vmatpush1.msra.mxu0 0.0
    %3175 = vmatprep.subr.mxu0 0.0
    %3176 = vmatpush1.msra.mxu0 0.0
    %3177 = vmatprep.subr.mxu0 0.0
    %3178 = vmatpush1.msra.mxu0 0.0
    %3179 = vmatprep.mubr.f32.mxu0 0.0
    %v3180 = vand.u32 %v2521, 4294901760
    %3181 = vmatmul.mubr.f32.gmra.mrb[0].mxu0 %v3180
    %v3182 = vpop.f32.mrb[0].mxu0
    %v3183 = vadd.f32 %v3096, %v3182
    %v3184 = vpop.f32.mrb[0].mxu0
    %3185 = vdwg.mxu0
    %vm3186 = vcmask 261120
    %v3187 = vsel %vm3186, %v3183, -inf
    %3188 = vmax.xlane.f32.xlu0 %v3187
    %v3189 = vpop.xlane.xlu0 %3188
    %v3190 = vsub.f32 %v3183, %v3189
    %v3191 = vmul.f32 %v3190, 1.442695
    %v3192 = vpow.pop %v3191
    %v3193 = vsel %vm3186, %v3192, 0.0
    %3194 = vadd.xlane.f32.xlu0 %v3193
    %v3195 = vpop.xlane.xlu0 %3194
    %v3196 = vrcp.pop %v3195
    %v3197 = vmul.f32 %v3192, %v3196
    %3198 = vst.msk [vmem:[#allocation7] sm:$0xff] %vm3186, %v3197
    // Predicated region
    $region54: #{tpu_custom_call.1} parent=1 // pred_check
      _
    $region55: #{tpu_custom_call.1} parent=1 // pred_check_branch
      %3200 = sbr.rel (0) target = $region57
    $region56: #{tpu_custom_call.1} parent=1 // pred_region
      %s3202 = ssub.s32 128, 128
      %3203 = vsyncadd [#allocation4], %s3202
      %s3205 = sshll.u32 [#allocation7], 4
      %s3206 = int_to_ptr.vmem [resolvable:$true] %s3205
      %3208 = dma.vmem_to_hbm [thread:$0]  %s3206, 128, %s11, [#allocation4]
    $region57: #{tpu_custom_call.1} parent=1 // pred_fallthru
      _
    // Predicated region
    $region58: #{tpu_custom_call.1} parent=1 // pred_check
      _
    $region59: #{tpu_custom_call.1} parent=1 // pred_check_branch
      %3210 = sbr.rel (0) target = $region61
    $region60: #{tpu_custom_call.1} parent=1 // pred_region
      %3211 = dma.done [#allocation4], 128
    $region61: #{tpu_custom_call.1} parent=1 // pred_fallthru
      _
    %3212 = vsyncpa [#allocation3], 1
    %3213 = vsyncpa [#allocation6], 1
    %3214 = vsyncpa [#allocation4], 1

</llo_original>
